<compile_context>
chip_gen: v6e
topology: v6e:2x2x1
jax: 0.10.0
libtpu: 0.0.40
codegen_flags: <defaults>
</compile_context>

<pallas_src>
import numpy as np
import jax
import jax.numpy as jnp
from jax.experimental import pallas as pl
from jax.experimental.pallas import tpu as pltpu

BN_EPS = 1e-5
BN_SCALE = float(1.0 / np.sqrt(1.0 + BN_EPS))  # eval-mode BatchNorm1d, identity stats
NEG_F = -3.0e38                                # large finite sentinel for masked max

TM_POINTCONV = 128       # row tile for the per-center neighbor-MLP kernel
TM_GLOBAL = 256          # row tile for the global MLP + max-pool kernel
KC = 16                  # neighbors processed per chunk inside the pointconv kernel
VMEM_LIMIT_BYTES = 48 * 1024 * 1024  # < 64 MiB physical on v7x; << 128 MiB on v5e/v6e


def round_up(x, m):
    return ((x + m - 1) // m) * m


# ----------------------------- parameter setup ------------------------------

def init_mlp_params(key, dims):
    """MLP([dims]) = stack of (Linear -> ReLU -> BN[eval]).

    Weights are stored in bf16 with the BN scale folded in; biases are stacked
    into one (n_layers, Cmax) f32 array.  Layer-0 input channels are padded to a
    multiple of 8 only; hidden/output channels are padded to multiples of 128.
    """
    n_layers = len(dims) - 1
    couts = [round_up(d, 128) for d in dims[1:]]
    cin0_pad = round_up(dims[0], 8)
    cmax = max(couts)

    ws = []
    bcat = jnp.zeros((n_layers, cmax), jnp.float32)
    for l in range(n_layers):
        key, kw, kb = jax.random.split(key, 3)
        cin, cout = dims[l], dims[l + 1]
        cin_p = cin0_pad if l == 0 else couts[l - 1]
        w = jax.random.normal(kw, (cin, cout), jnp.float32) / np.sqrt(cin)
        b = 0.01 * jax.random.normal(kb, (cout,), jnp.float32)
        # Fold eval-mode BN scale through ReLU: relu(Wx+b)*s == relu((sW)x + sb), s>0.
        w = w * BN_SCALE
        b = b * BN_SCALE
        wp = jnp.zeros((cin_p, couts[l]), jnp.float32).at[:cin, :cout].set(w)
        ws.append(wp.astype(jnp.bfloat16))
        bcat = bcat.at[l, :cout].set(b)

    params = dict(w=ws, b=bcat, couts=couts, n_layers=n_layers,
                  cin0=dims[0], cin0_pad=cin0_pad)
    return key, params


# ------------------------------ Pallas kernels -------------------------------

def make_pointconv_kernel(n_layers, couts, kc):
    """Per-center neighbor MLP + masked running max over the K neighbor axis.

    Processes neighbors in chunks of `kc` so only a (tm, cout) accumulator stays
    live; matmuls are bf16 x bf16 with f32 accumulation.
    """
    def kernel(*refs):
        feat_ref, mask_ref = refs[0], refs[1]          # (tm, K, cin_p) bf16 / (tm, K) f32
        w_refs = refs[2:2 + n_layers]                  # bf16 weights
        bias_ref = refs[2 + n_layers]                  # (n_layers, cmax) f32
        out_ref = refs[3 + n_layers]                   # (tm, couts[-1]) f32

        tm, K, cin_p = feat_ref.shape
        cout = couts[-1]
        acc = jnp.full((tm, cout), NEG_F, dtype=jnp.float32)

        for k0 in range(0, K, kc):
            h = feat_ref[:, k0:k0 + kc, :].reshape(tm * kc, cin_p)   # bf16
            for l in range(n_layers):
                w = w_refs[l][...]
                b = bias_ref[l:l + 1, 0:couts[l]]
                z = jnp.dot(h, w, preferred_element_type=jnp.float32) + b
                z = jnp.maximum(z, 0.0)
                h = z.astype(jnp.bfloat16) if l + 1 < n_layers else z
            h3 = h.reshape(tm, kc, cout)
            mb = mask_ref[:, k0:k0 + kc]                              # 0 valid / NEG_F invalid
            acc = jnp.maximum(acc, jnp.max(h3 + mb[:, :, None], axis=1))

        out_ref[...] = acc
    return kernel


def make_global_kernel(n_layers, couts, B, Bp):
    """Deep MLP over node features + per-batch global max pool.

    The running per-batch max lives in an (Bp, cout) VMEM scratch; the lane-dense
    output block is written exactly once at the last grid step.
    """
    def kernel(*refs):
        feat_ref, ohb_ref = refs[0], refs[1]           # (tm, cin_p) bf16 / (tm, B) f32
        w_refs = refs[2:2 + n_layers]
        bias_ref = refs[2 + n_layers]
        out_ref = refs[3 + n_layers]                   # (Bp, cout) f32
        acc_ref = refs[4 + n_layers]                   # (Bp, cout) f32 scratch
        cout = couts[-1]

        @pl.when(pl.program_id(0) == 0)
        def _init():
            acc_ref[...] = jnp.full(acc_ref.shape, NEG_F, jnp.float32)

        h = feat_ref[...]
        for l in range(n_layers):
            w = w_refs[l][...]
            b = bias_ref[l:l + 1, 0:couts[l]]
            z = jnp.maximum(jnp.dot(h, w, preferred_element_type=jnp.float32) + b, 0.0)
            h = z.astype(jnp.bfloat16) if l + 1 < n_layers else z

        parts = [jnp.max(h + ohb_ref[:, bi:bi + 1], axis=0, keepdims=True)
                 for bi in range(B)]
        if Bp > B:
            parts.append(jnp.full((Bp - B, cout), NEG_F, jnp.float32))
        acc_ref[...] = jnp.maximum(acc_ref[...], jnp.concatenate(parts, axis=0))

        @pl.when(pl.program_id(0) == pl.num_programs(0) - 1)
        def _finalize():
            out_ref[...] = acc_ref[...]
    return kernel


# ------------------------------ pallas_call wrappers -------------------------

def pointconv_pallas(feat, mask_bias, params, tm):
    M_pad, K_pad, cin_p = feat.shape
    n_layers, couts = params['n_layers'], params['couts']

    in_specs = [
        pl.BlockSpec((tm, K_pad, cin_p), lambda i: (i, 0, 0)),
        pl.BlockSpec((tm, K_pad), lambda i: (i, 0)),
    ]
    for w in params['w']:
        in_specs.append(pl.BlockSpec(w.shape, lambda i: (0, 0)))
    in_specs.append(pl.BlockSpec(params['b'].shape, lambda i: (0, 0)))

    return pl.pallas_call(
        make_pointconv_kernel(n_layers, couts, KC),
        out_shape=jax.ShapeDtypeStruct((M_pad, couts[-1]), jnp.float32),
        grid_spec=pltpu.PrefetchScalarGridSpec(
            num_scalar_prefetch=0,
            grid=(M_pad // tm,),
            in_specs=in_specs,
            out_specs=pl.BlockSpec((tm, couts[-1]), lambda i: (i, 0)),
        ),
        compiler_params=pltpu.CompilerParams(
            dimension_semantics=("parallel",),
            vmem_limit_bytes=VMEM_LIMIT_BYTES),
    )(feat, mask_bias, *params['w'], params['b'])


def global_pallas(feat, ohbias, params, B, Bp, tm):
    N_pad, cin_p = feat.shape
    n_layers, couts = params['n_layers'], params['couts']

    in_specs = [
        pl.BlockSpec((tm, cin_p), lambda i: (i, 0)),
        pl.BlockSpec((tm, B), lambda i: (i, 0)),
    ]
    for w in params['w']:
        in_specs.append(pl.BlockSpec(w.shape, lambda i: (0, 0)))
    in_specs.append(pl.BlockSpec(params['b'].shape, lambda i: (0, 0)))

    return pl.pallas_call(
        make_global_kernel(n_layers, couts, B, Bp),
        out_shape=jax.ShapeDtypeStruct((Bp, couts[-1]), jnp.float32),
        grid_spec=pltpu.PrefetchScalarGridSpec(
            num_scalar_prefetch=0,
            grid=(N_pad // tm,),
            in_specs=in_specs,
            out_specs=pl.BlockSpec((Bp, couts[-1]), lambda i: (0, 0)),
            scratch_shapes=[pltpu.VMEM((Bp, couts[-1]), jnp.float32)],
        ),
        compiler_params=pltpu.CompilerParams(
            dimension_semantics=("arbitrary",),
            vmem_limit_bytes=VMEM_LIMIT_BYTES),
    )(feat, ohbias, *params['w'], params['b'])


# ------------------------------ JAX glue (sampling / neighbors) --------------

def fps_single(pos_b, n_samples):
    """Farthest point sampling within one batch element (start index 0)."""
    n = pos_b.shape[0]

    def body(i, state):
        idx, dists = state
        last = idx[i - 1]
        d = jnp.sum((pos_b - pos_b[last]) ** 2, axis=-1)
        dists = jnp.minimum(dists, d)
        idx = idx.at[i].set(jnp.argmax(dists).astype(jnp.int32))
        return idx, dists

    idx0 = jnp.zeros((n_samples,), jnp.int32)
    d0 = jnp.full((n,), jnp.inf, jnp.float32)
    idx, _ = jax.lax.fori_loop(1, n_samples, body, (idx0, d0))
    return idx


def sa_module_forward(x, pos, batch_ids, B, n_per, ratio, r, params,
                      max_nbrs=64, tm_max=TM_POINTCONV):
    """SAModule: fps -> radius neighborhoods -> PointNetConv(local MLP, max aggr)."""
    n_samp = int(np.ceil(ratio * n_per))
    pos_b = pos.reshape(B, n_per, 3)
    local_idx = jax.vmap(lambda p: fps_single(p, n_samp))(pos_b)          # (B, n_samp)
    idx = (local_idx + (jnp.arange(B, dtype=jnp.int32) * n_per)[:, None]).reshape(-1)
    ctr_pos = pos[idx]
    ctr_batch = batch_ids[idx]
    M, N = idx.shape[0], pos.shape[0]
    K = min(max_nbrs, N)

    d2 = jnp.sum((ctr_pos[:, None, :] - pos[None, :, :]) ** 2, axis=-1)    # (M, N)
    valid = (ctr_batch[:, None] == batch_ids[None, :]) & (d2 <= r * r)
    order_key = jnp.where(valid, jnp.arange(N, dtype=jnp.int32)[None, :], jnp.int32(N))
    nbr = jnp.argsort(order_key, axis=1)[:, :K]                            # (M, K)
    nbr_valid = jnp.take_along_axis(valid, nbr, axis=1)

    pos_diff = pos[nbr] - ctr_pos[:, None, :]                              # (M, K, 3)
    feat = pos_diff if x is None else jnp.concatenate([x[nbr], pos_diff], axis=-1)

    cin = feat.shape[-1]
    cin_p = params['cin0_pad']
    tm = min(tm_max, round_up(M, 8))
    M_pad = round_up(M, tm)
    K_pad = round_up(K, KC)

    feat_p = jnp.zeros((M_pad, K_pad, cin_p), jnp.bfloat16)
    feat_p = feat_p.at[:M, :K, :cin].set(feat.astype(jnp.bfloat16))
    mask_bias = jnp.full((M_pad, K_pad), NEG_F, jnp.float32)
    mask_bias = mask_bias.at[:M, :K].set(
        jnp.where(nbr_valid, jnp.float32(0.0), jnp.float32(NEG_F)))

    out = pointconv_pallas(feat_p, mask_bias, params, tm)[:M]
    return out, ctr_pos, ctr_batch


def global_sa_forward(x, pos, batch_ids, B, params, tm_max=TM_GLOBAL):
    """GlobalSAModule: MLP(concat([x, pos])) then global_max_pool over batch."""
    feat = jnp.concatenate([x, pos], axis=-1)
    N, cin = feat.shape
    cin_p = params['cin0_pad']
    tm = min(tm_max, round_up(N, 8))
    N_pad = round_up(N, tm)
    Bp = round_up(max(B, 8), 8)

    feat_p = jnp.zeros((N_pad, cin_p), jnp.bfloat16)
    feat_p = feat_p.at[:N, :cin].set(feat.astype(jnp.bfloat16))
    ohb = jnp.where(batch_ids[:, None] == jnp.arange(B, dtype=batch_ids.dtype)[None, :],
                    jnp.float32(0.0), jnp.float32(NEG_F))
    ohb_p = jnp.full((N_pad, B), NEG_F, jnp.float32).at[:N].set(ohb)

    out = global_pallas(feat_p, ohb_p, params, B, Bp, tm)
    return out[:B]


def joint_encoder_forward(joints, joints_batch, B, n_per, params):
    p1, p2, p3 = params
    # SA1: ratio=0.999, r=0.4, MLP([3, 64, 64, 128])
    x1, pos1, bat1 = sa_module_forward(None, joints, joints_batch, B, n_per,
                                       0.999, 0.4, p1)
    n_per1 = pos1.shape[0] // B
    # SA2: ratio=0.33, r=0.6, MLP([131, 128, 128, 256])
    x2, pos2, bat2 = sa_module_forward(x1, pos1, bat1, B, n_per1,
                                       0.33, 0.6, p2)
    # SA3: GlobalSAModule, MLP([259, 256, 256, 512, 256, 128])
    x_glb = global_sa_forward(x2, pos2, bat2, B, p3)
    return x_glb


# ----------------------------------- main ------------------------------------

if __name__ == "__main__":
    B, n_per = 2, 16
    key = jax.random.PRNGKey(0)
    key, kj = jax.random.split(key)
    joints = jax.random.uniform(kj, (B * n_per, 3), dtype=jnp.float32)
    joints_batch = jnp.repeat(jnp.arange(B, dtype=jnp.int32), n_per)

    key, p1 = init_mlp_params(key, [3, 64, 64, 128])
    key, p2 = init_mlp_params(key, [128 + 3, 128, 128, 256])
    key, p3 = init_mlp_params(key, [256 + 3, 256, 256, 512, 256, 128])

    x_glb_joint = joint_encoder_forward(joints, joints_batch, B, n_per, (p1, p2, p3))
    x_glb_joint = jax.block_until_ready(x_glb_joint)

    assert x_glb_joint.shape == (B, 128), x_glb_joint.shape
    assert bool(jnp.all(jnp.isfinite(x_glb_joint)))
    print("KERNEL_OK")
</pallas_src>

<mosaic_0001>
module attributes {stable_mosaic.version = 11 : i64} {
  func.func @kernel(%arg0: i32, %arg1: memref<32x32x8xbf16, #tpu.memory_space<vmem>>, %arg2: memref<32x32xf32, #tpu.memory_space<vmem>>, %arg3: memref<8x128xbf16, #tpu.memory_space<vmem>>, %arg4: memref<128x128xbf16, #tpu.memory_space<vmem>>, %arg5: memref<128x128xbf16, #tpu.memory_space<vmem>>, %arg6: memref<3x128xf32, #tpu.memory_space<vmem>>, %arg7: memref<32x128xf32, #tpu.memory_space<vmem>>) attributes {dimension_semantics = [#tpu.dimension_semantics<parallel>], iteration_bounds = array<i64: 1>, scalar_prefetch = 0 : i64, scratch_operands = 0 : i64, tpu.core_type = #tpu.core_type<tc>, window_params = [{transform_indices = @transform_0, window_bounds = array<i64: 32, 32, 8>}, {transform_indices = @transform_1, window_bounds = array<i64: 32, 32>}, {pipeline_mode = #tpu.pipeline_mode<synchronous>, transform_indices = @transform_2, window_bounds = array<i64: 8, 128>}, {pipeline_mode = #tpu.pipeline_mode<synchronous>, transform_indices = @transform_3, window_bounds = array<i64: 128, 128>}, {pipeline_mode = #tpu.pipeline_mode<synchronous>, transform_indices = @transform_4, window_bounds = array<i64: 128, 128>}, {pipeline_mode = #tpu.pipeline_mode<synchronous>, transform_indices = @transform_5, window_bounds = array<i64: 3, 128>}, {transform_indices = @transform_6, window_bounds = array<i64: 32, 128>}]} {
    %cst = arith.constant -3.000000e+38 : f32
    %0 = vector.broadcast %cst : f32 to vector<32x128xf32>
    %c0 = arith.constant 0 : index
    %c0_0 = arith.constant 0 : index
    %c0_1 = arith.constant 0 : index
    %1 = vector.load %arg1[%c0, %c0_0, %c0_1] : memref<32x32x8xbf16, #tpu.memory_space<vmem>>, vector<32x16x8xbf16>
    %2 = vector.shape_cast %1 : vector<32x16x8xbf16> to vector<512x8xbf16>
    %c0_2 = arith.constant 0 : index
    %c0_3 = arith.constant 0 : index
    %3 = vector.load %arg3[%c0_2, %c0_3] : memref<8x128xbf16, #tpu.memory_space<vmem>>, vector<8x128xbf16>
    %c0_4 = arith.constant 0 : index
    %c0_5 = arith.constant 0 : index
    %4 = vector.load %arg6[%c0_4, %c0_5] : memref<3x128xf32, #tpu.memory_space<vmem>>, vector<1x128xf32>
    %cst_6 = arith.constant dense<0.000000e+00> : vector<512x128xf32>
    %5 = tpu.matmul %2, %3, %cst_6 {dimension_numbers = #tpu.dot_dimension_numbers<[1], [0], [0], [1], [0, 0, 1, 1], [], []>} : vector<512x8xbf16>, vector<8x128xbf16>, vector<512x128xf32> -> vector<512x128xf32>
    %6 = vector.broadcast %4 : vector<1x128xf32> to vector<512x128xf32>
    %7 = arith.addf %5, %6 : vector<512x128xf32>
    %cst_7 = arith.constant 0.000000e+00 : f32
    %8 = vector.broadcast %cst_7 : f32 to vector<512x128xf32>
    %9 = arith.maximumf %7, %8 : vector<512x128xf32>
    %10 = arith.truncf %9 : vector<512x128xf32> to vector<512x128xbf16>
    %c0_8 = arith.constant 0 : index
    %c0_9 = arith.constant 0 : index
    %11 = vector.load %arg4[%c0_8, %c0_9] : memref<128x128xbf16, #tpu.memory_space<vmem>>, vector<128x128xbf16>
    %c1 = arith.constant 1 : index
    %c0_10 = arith.constant 0 : index
    %12 = vector.load %arg6[%c1, %c0_10] : memref<3x128xf32, #tpu.memory_space<vmem>>, vector<1x128xf32>
    %cst_11 = arith.constant dense<0.000000e+00> : vector<512x128xf32>
    %13 = tpu.matmul %10, %11, %cst_11 {dimension_numbers = #tpu.dot_dimension_numbers<[1], [0], [0], [1], [0, 0, 1, 1], [], []>} : vector<512x128xbf16>, vector<128x128xbf16>, vector<512x128xf32> -> vector<512x128xf32>
    %14 = vector.broadcast %12 : vector<1x128xf32> to vector<512x128xf32>
    %15 = arith.addf %13, %14 : vector<512x128xf32>
    %cst_12 = arith.constant 0.000000e+00 : f32
    %16 = vector.broadcast %cst_12 : f32 to vector<512x128xf32>
    %17 = arith.maximumf %15, %16 : vector<512x128xf32>
    %18 = arith.truncf %17 : vector<512x128xf32> to vector<512x128xbf16>
    %c0_13 = arith.constant 0 : index
    %c0_14 = arith.constant 0 : index
    %19 = vector.load %arg5[%c0_13, %c0_14] : memref<128x128xbf16, #tpu.memory_space<vmem>>, vector<128x128xbf16>
    %c2 = arith.constant 2 : index
    %c0_15 = arith.constant 0 : index
    %20 = vector.load %arg6[%c2, %c0_15] : memref<3x128xf32, #tpu.memory_space<vmem>>, vector<1x128xf32>
    %cst_16 = arith.constant dense<0.000000e+00> : vector<512x128xf32>
    %21 = tpu.matmul %18, %19, %cst_16 {dimension_numbers = #tpu.dot_dimension_numbers<[1], [0], [0], [1], [0, 0, 1, 1], [], []>} : vector<512x128xbf16>, vector<128x128xbf16>, vector<512x128xf32> -> vector<512x128xf32>
    %22 = vector.broadcast %20 : vector<1x128xf32> to vector<512x128xf32>
    %23 = arith.addf %21, %22 : vector<512x128xf32>
    %cst_17 = arith.constant 0.000000e+00 : f32
    %24 = vector.broadcast %cst_17 : f32 to vector<512x128xf32>
    %25 = arith.maximumf %23, %24 : vector<512x128xf32>
    %26 = vector.shape_cast %25 : vector<512x128xf32> to vector<32x16x128xf32>
    %c0_18 = arith.constant 0 : index
    %c0_19 = arith.constant 0 : index
    %27 = vector.load %arg2[%c0_18, %c0_19] : memref<32x32xf32, #tpu.memory_space<vmem>>, vector<32x16xf32>
    %28 = vector.shape_cast %27 : vector<32x16xf32> to vector<32x16x1xf32>
    %29 = vector.broadcast %28 : vector<32x16x1xf32> to vector<32x16x128xf32>
    %30 = arith.addf %26, %29 : vector<32x16x128xf32>
    %cst_20 = arith.constant dense<0xFF800000> : vector<32x128xf32>
    %31 = vector.multi_reduction <maximumf>, %30, %cst_20 [1] : vector<32x16x128xf32> to vector<32x128xf32>
    %32 = arith.maximumf %0, %31 : vector<32x128xf32>
    %c0_21 = arith.constant 0 : index
    %c16 = arith.constant 16 : index
    %c0_22 = arith.constant 0 : index
    %33 = vector.load %arg1[%c0_21, %c16, %c0_22] : memref<32x32x8xbf16, #tpu.memory_space<vmem>>, vector<32x16x8xbf16>
    %34 = vector.shape_cast %33 : vector<32x16x8xbf16> to vector<512x8xbf16>
    %c0_23 = arith.constant 0 : index
    %c0_24 = arith.constant 0 : index
    %35 = vector.load %arg3[%c0_23, %c0_24] : memref<8x128xbf16, #tpu.memory_space<vmem>>, vector<8x128xbf16>
    %c0_25 = arith.constant 0 : index
    %c0_26 = arith.constant 0 : index
    %36 = vector.load %arg6[%c0_25, %c0_26] : memref<3x128xf32, #tpu.memory_space<vmem>>, vector<1x128xf32>
    %cst_27 = arith.constant dense<0.000000e+00> : vector<512x128xf32>
    %37 = tpu.matmul %34, %35, %cst_27 {dimension_numbers = #tpu.dot_dimension_numbers<[1], [0], [0], [1], [0, 0, 1, 1], [], []>} : vector<512x8xbf16>, vector<8x128xbf16>, vector<512x128xf32> -> vector<512x128xf32>
    %38 = vector.broadcast %36 : vector<1x128xf32> to vector<512x128xf32>
    %39 = arith.addf %37, %38 : vector<512x128xf32>
    %cst_28 = arith.constant 0.000000e+00 : f32
    %40 = vector.broadcast %cst_28 : f32 to vector<512x128xf32>
    %41 = arith.maximumf %39, %40 : vector<512x128xf32>
    %42 = arith.truncf %41 : vector<512x128xf32> to vector<512x128xbf16>
    %c0_29 = arith.constant 0 : index
    %c0_30 = arith.constant 0 : index
    %43 = vector.load %arg4[%c0_29, %c0_30] : memref<128x128xbf16, #tpu.memory_space<vmem>>, vector<128x128xbf16>
    %c1_31 = arith.constant 1 : index
    %c0_32 = arith.constant 0 : index
    %44 = vector.load %arg6[%c1_31, %c0_32] : memref<3x128xf32, #tpu.memory_space<vmem>>, vector<1x128xf32>
    %cst_33 = arith.constant dense<0.000000e+00> : vector<512x128xf32>
    %45 = tpu.matmul %42, %43, %cst_33 {dimension_numbers = #tpu.dot_dimension_numbers<[1], [0], [0], [1], [0, 0, 1, 1], [], []>} : vector<512x128xbf16>, vector<128x128xbf16>, vector<512x128xf32> -> vector<512x128xf32>
    %46 = vector.broadcast %44 : vector<1x128xf32> to vector<512x128xf32>
    %47 = arith.addf %45, %46 : vector<512x128xf32>
    %cst_34 = arith.constant 0.000000e+00 : f32
    %48 = vector.broadcast %cst_34 : f32 to vector<512x128xf32>
    %49 = arith.maximumf %47, %48 : vector<512x128xf32>
    %50 = arith.truncf %49 : vector<512x128xf32> to vector<512x128xbf16>
    %c0_35 = arith.constant 0 : index
    %c0_36 = arith.constant 0 : index
    %51 = vector.load %arg5[%c0_35, %c0_36] : memref<128x128xbf16, #tpu.memory_space<vmem>>, vector<128x128xbf16>
    %c2_37 = arith.constant 2 : index
    %c0_38 = arith.constant 0 : index
    %52 = vector.load %arg6[%c2_37, %c0_38] : memref<3x128xf32, #tpu.memory_space<vmem>>, vector<1x128xf32>
    %cst_39 = arith.constant dense<0.000000e+00> : vector<512x128xf32>
    %53 = tpu.matmul %50, %51, %cst_39 {dimension_numbers = #tpu.dot_dimension_numbers<[1], [0], [0], [1], [0, 0, 1, 1], [], []>} : vector<512x128xbf16>, vector<128x128xbf16>, vector<512x128xf32> -> vector<512x128xf32>
    %54 = vector.broadcast %52 : vector<1x128xf32> to vector<512x128xf32>
    %55 = arith.addf %53, %54 : vector<512x128xf32>
    %cst_40 = arith.constant 0.000000e+00 : f32
    %56 = vector.broadcast %cst_40 : f32 to vector<512x128xf32>
    %57 = arith.maximumf %55, %56 : vector<512x128xf32>
    %58 = vector.shape_cast %57 : vector<512x128xf32> to vector<32x16x128xf32>
    %c0_41 = arith.constant 0 : index
    %c16_42 = arith.constant 16 : index
    %59 = vector.load %arg2[%c0_41, %c16_42] : memref<32x32xf32, #tpu.memory_space<vmem>>, vector<32x16xf32>
    %60 = vector.shape_cast %59 : vector<32x16xf32> to vector<32x16x1xf32>
    %61 = vector.broadcast %60 : vector<32x16x1xf32> to vector<32x16x128xf32>
    %62 = arith.addf %58, %61 : vector<32x16x128xf32>
    %cst_43 = arith.constant dense<0xFF800000> : vector<32x128xf32>
    %63 = vector.multi_reduction <maximumf>, %62, %cst_43 [1] : vector<32x16x128xf32> to vector<32x128xf32>
    %64 = arith.maximumf %32, %63 : vector<32x128xf32>
    %c0_44 = arith.constant 0 : index
    %c0_45 = arith.constant 0 : index
    %65 = vector.load %arg7[%c0_44, %c0_45] : memref<32x128xf32, #tpu.memory_space<vmem>>, vector<32x128xf32>
    tpu.vector_store %arg7[%c0_44, %c0_45], %64 {strides = array<i32>} : memref<32x128xf32, #tpu.memory_space<vmem>>, vector<32x128xf32>,
    return
  }
  func.func @transform_0(%arg0: i32) -> (i32, i32, i32) {
    %c0_i32 = arith.constant 0 : i32
    %c0_i32_0 = arith.constant 0 : i32
    %c0_i32_1 = arith.constant 0 : i32
    return %arg0, %c0_i32, %c0_i32_0 : i32, i32, i32
  }
  func.func @transform_1(%arg0: i32) -> (i32, i32) {
    %c0_i32 = arith.constant 0 : i32
    %c0_i32_0 = arith.constant 0 : i32
    return %arg0, %c0_i32 : i32, i32
  }
  func.func @transform_2(%arg0: i32) -> (i32, i32) {
    %c0_i32 = arith.constant 0 : i32
    %c0_i32_0 = arith.constant 0 : i32
    %c0_i32_1 = arith.constant 0 : i32
    return %c0_i32, %c0_i32_0 : i32, i32
  }
  func.func @transform_3(%arg0: i32) -> (i32, i32) {
    %c0_i32 = arith.constant 0 : i32
    %c0_i32_0 = arith.constant 0 : i32
    %c0_i32_1 = arith.constant 0 : i32
    return %c0_i32, %c0_i32_0 : i32, i32
  }
  func.func @transform_4(%arg0: i32) -> (i32, i32) {
    %c0_i32 = arith.constant 0 : i32
    %c0_i32_0 = arith.constant 0 : i32
    %c0_i32_1 = arith.constant 0 : i32
    return %c0_i32, %c0_i32_0 : i32, i32
  }
  func.func @transform_5(%arg0: i32) -> (i32, i32) {
    %c0_i32 = arith.constant 0 : i32
    %c0_i32_0 = arith.constant 0 : i32
    %c0_i32_1 = arith.constant 0 : i32
    return %c0_i32, %c0_i32_0 : i32, i32
  }
  func.func @transform_6(%arg0: i32) -> (i32, i32) {
    %c0_i32 = arith.constant 0 : i32
    %c0_i32_0 = arith.constant 0 : i32
    return %arg0, %c0_i32 : i32, i32
  }
}

</mosaic_0001>

<llo_original>
// kernel: tpu_custom_call.1
$region0: #{tpu_custom_call.1}
  #allocation0 [shape = 'u32[]', space=smem, size = 0x4, offset = 0x4, fixed_abs, tag = 'smem constant byte address 0x4 - core index']
  #allocation1 [shape = 'u32[144,128]{1,0:T(1,128)}', space=vmem, size = 0x12000, scoped, tag = 'internal scratch']
  %s0 = inlined_call_operand.vmem [shape: bf16[32,32,8], index: 0, kind: input, shape index: {}]
  %s1 = inlined_call_operand.vmem [shape: f32[32,32], index: 1, kind: input, shape index: {}]
  %s2 = inlined_call_operand.vmem [shape: bf16[8,128], index: 2, kind: input, shape index: {}]
  %s3 = inlined_call_operand.vmem [shape: bf16[128,128], index: 3, kind: input, shape index: {}]
  %s4 = inlined_call_operand.vmem [shape: bf16[128,128], index: 4, kind: input, shape index: {}]
  %s5 = inlined_call_operand.vmem [shape: f32[3,128], index: 5, kind: input, shape index: {}]
  %s6 = inlined_call_operand.hbm [shape: f32[32,128], index: 6, kind: output, shape index: {}]
  %s7 = sld [smem:[#allocation0]]
  $region34: #{tpu_custom_call.1} parent=0
    _
  %s9 = ssub.s32 1, %s7
  %s10 = scalar_select 0, %s9, %s7
  $region1: #{tpu_custom_call.1} parent=0
    #allocation2 [shape = 'u8[16384]{0}', space=vmem, size = 0x4000, scoped, tag = 'output window, operand 0, single buffered']
    #allocation3 [shape = 's32[1]{0}', space=sflag, size = 0x4, scoped, tag = 'scoped memory for tpu_custom_call.1']
    %11 = vsyncpa [#allocation3], 0
    // Predicated region
    $region2: #{tpu_custom_call.1} parent=1 // pred_check
      _
    $region3: #{tpu_custom_call.1} parent=1 // pred_check_branch
      %13 = sbr.rel (0) target = $region5
    $region4: #{tpu_custom_call.1} parent=1 // pred_region
      _
    $region5: #{tpu_custom_call.1} parent=1 // pred_fallthru
      _
    // Predicated region
    $region6: #{tpu_custom_call.1} parent=1 // pred_check
      _
    $region7: #{tpu_custom_call.1} parent=1 // pred_check_branch
      %15 = sbr.rel (0) target = $region9
    $region8: #{tpu_custom_call.1} parent=1 // pred_region
      _
    $region9: #{tpu_custom_call.1} parent=1 // pred_fallthru
      _
    // Predicated region
    $region10: #{tpu_custom_call.1} parent=1 // pred_check
      _
    $region11: #{tpu_custom_call.1} parent=1 // pred_check_branch
      %17 = sbr.rel (0) target = $region13
    $region12: #{tpu_custom_call.1} parent=1 // pred_region
      _
    $region13: #{tpu_custom_call.1} parent=1 // pred_fallthru
      _
    // Predicated region
    $region14: #{tpu_custom_call.1} parent=1 // pred_check
      _
    $region15: #{tpu_custom_call.1} parent=1 // pred_check_branch
      %19 = sbr.rel (0) target = $region17
    $region16: #{tpu_custom_call.1} parent=1 // pred_region
      _
    $region17: #{tpu_custom_call.1} parent=1 // pred_fallthru
      _
    // Predicated region
    $region18: #{tpu_custom_call.1} parent=1 // pred_check
      _
    $region19: #{tpu_custom_call.1} parent=1 // pred_check_branch
      %21 = sbr.rel (0) target = $region21
    $region20: #{tpu_custom_call.1} parent=1 // pred_region
      _
    $region21: #{tpu_custom_call.1} parent=1 // pred_fallthru
      _
    // Predicated region
    $region22: #{tpu_custom_call.1} parent=1 // pred_check
      _
    $region23: #{tpu_custom_call.1} parent=1 // pred_check_branch
      %23 = sbr.rel (0) target = $region25
    $region24: #{tpu_custom_call.1} parent=1 // pred_region
      _
    $region25: #{tpu_custom_call.1} parent=1 // pred_fallthru
      _
    %v25 = vld [vmem:[%s0] sm:$0xf]
    %v26 = vld [vmem:[%s0 + $0x4] sm:$0xf]
    %v27 = vld [vmem:[%s0 + $0x10] sm:$0xf]
    %v28 = vld [vmem:[%s0 + $0x14] sm:$0xf]
    %v29 = vld [vmem:[%s0 + $0x20] sm:$0xf]
    %v30 = vld [vmem:[%s0 + $0x24] sm:$0xf]
    %v31 = vld [vmem:[%s0 + $0x30] sm:$0xf]
    %v32 = vld [vmem:[%s0 + $0x34] sm:$0xf]
    %v33 = vld [vmem:[%s0 + $0x40] sm:$0xf]
    %v34 = vld [vmem:[%s0 + $0x44] sm:$0xf]
    %v35 = vld [vmem:[%s0 + $0x50] sm:$0xf]
    %v36 = vld [vmem:[%s0 + $0x54] sm:$0xf]
    %v37 = vld [vmem:[%s0 + $0x60] sm:$0xf]
    %v38 = vld [vmem:[%s0 + $0x64] sm:$0xf]
    %v39 = vld [vmem:[%s0 + $0x70] sm:$0xf]
    %v40 = vld [vmem:[%s0 + $0x74] sm:$0xf]
    %v41 = vld [vmem:[%s0 + $0x80] sm:$0xf]
    %v42 = vld [vmem:[%s0 + $0x84] sm:$0xf]
    %v43 = vld [vmem:[%s0 + $0x90] sm:$0xf]
    %v44 = vld [vmem:[%s0 + $0x94] sm:$0xf]
    %v45 = vld [vmem:[%s0 + $0xa0] sm:$0xf]
    %v46 = vld [vmem:[%s0 + $0xa4] sm:$0xf]
    %v47 = vld [vmem:[%s0 + $0xb0] sm:$0xf]
    %v48 = vld [vmem:[%s0 + $0xb4] sm:$0xf]
    %v49 = vld [vmem:[%s0 + $0xc0] sm:$0xf]
    %v50 = vld [vmem:[%s0 + $0xc4] sm:$0xf]
    %v51 = vld [vmem:[%s0 + $0xd0] sm:$0xf]
    %v52 = vld [vmem:[%s0 + $0xd4] sm:$0xf]
    %v53 = vld [vmem:[%s0 + $0xe0] sm:$0xf]
    %v54 = vld [vmem:[%s0 + $0xe4] sm:$0xf]
    %v55 = vld [vmem:[%s0 + $0xf0] sm:$0xf]
    %v56 = vld [vmem:[%s0 + $0xf4] sm:$0xf]
    %v57 = vld [vmem:[%s0 + $0x100] sm:$0xf]
    %v58 = vld [vmem:[%s0 + $0x104] sm:$0xf]
    %v59 = vld [vmem:[%s0 + $0x110] sm:$0xf]
    %v60 = vld [vmem:[%s0 + $0x114] sm:$0xf]
    %v61 = vld [vmem:[%s0 + $0x120] sm:$0xf]
    %v62 = vld [vmem:[%s0 + $0x124] sm:$0xf]
    %v63 = vld [vmem:[%s0 + $0x130] sm:$0xf]
    %v64 = vld [vmem:[%s0 + $0x134] sm:$0xf]
    %v65 = vld [vmem:[%s0 + $0x140] sm:$0xf]
    %v66 = vld [vmem:[%s0 + $0x144] sm:$0xf]
    %v67 = vld [vmem:[%s0 + $0x150] sm:$0xf]
    %v68 = vld [vmem:[%s0 + $0x154] sm:$0xf]
    %v69 = vld [vmem:[%s0 + $0x160] sm:$0xf]
    %v70 = vld [vmem:[%s0 + $0x164] sm:$0xf]
    %v71 = vld [vmem:[%s0 + $0x170] sm:$0xf]
    %v72 = vld [vmem:[%s0 + $0x174] sm:$0xf]
    %v73 = vld [vmem:[%s0 + $0x180] sm:$0xf]
    %v74 = vld [vmem:[%s0 + $0x184] sm:$0xf]
    %v75 = vld [vmem:[%s0 + $0x190] sm:$0xf]
    %v76 = vld [vmem:[%s0 + $0x194] sm:$0xf]
    %v77 = vld [vmem:[%s0 + $0x1a0] sm:$0xf]
    %v78 = vld [vmem:[%s0 + $0x1a4] sm:$0xf]
    %v79 = vld [vmem:[%s0 + $0x1b0] sm:$0xf]
    %v80 = vld [vmem:[%s0 + $0x1b4] sm:$0xf]
    %v81 = vld [vmem:[%s0 + $0x1c0] sm:$0xf]
    %v82 = vld [vmem:[%s0 + $0x1c4] sm:$0xf]
    %v83 = vld [vmem:[%s0 + $0x1d0] sm:$0xf]
    %v84 = vld [vmem:[%s0 + $0x1d4] sm:$0xf]
    %v85 = vld [vmem:[%s0 + $0x1e0] sm:$0xf]
    %v86 = vld [vmem:[%s0 + $0x1e4] sm:$0xf]
    %v87 = vld [vmem:[%s0 + $0x1f0] sm:$0xf]
    %v88 = vld [vmem:[%s0 + $0x1f4] sm:$0xf]
    %v89 = vld [vmem:[%s2] sm:$0xf]
    %v90 = vld [vmem:[%s5] sm:$0x1]
    %v91 = vlaneseq
    %v92 = vshrl.u32 %v91, 7
    %v93 = vsub.s32 0, %v92
    %v94 = vrot.slane %v90, %v93
    %v159 = vunpack.c.l.b16 %v25
    %v160 = vunpack.c.l.b16 %v26
    %v161 = vunpack.c.l.b16 %v27
    %v162 = vunpack.c.l.b16 %v28
    %v163 = vunpack.c.l.b16 %v29
    %v164 = vunpack.c.l.b16 %v30
    %v165 = vunpack.c.l.b16 %v31
    %v166 = vunpack.c.l.b16 %v32
    %v167 = vunpack.c.l.b16 %v33
    %v168 = vunpack.c.l.b16 %v34
    %v169 = vunpack.c.l.b16 %v35
    %v170 = vunpack.c.l.b16 %v36
    %v171 = vunpack.c.l.b16 %v37
    %v172 = vunpack.c.l.b16 %v38
    %v173 = vunpack.c.l.b16 %v39
    %v174 = vunpack.c.l.b16 %v40
    %v175 = vunpack.c.l.b16 %v41
    %v176 = vunpack.c.l.b16 %v42
    %v177 = vunpack.c.l.b16 %v43
    %v178 = vunpack.c.l.b16 %v44
    %v179 = vunpack.c.l.b16 %v45
    %v180 = vunpack.c.l.b16 %v46
    %v181 = vunpack.c.l.b16 %v47
    %v182 = vunpack.c.l.b16 %v48
    %v183 = vunpack.c.l.b16 %v49
    %v184 = vunpack.c.l.b16 %v50
    %v185 = vunpack.c.l.b16 %v51
    %v186 = vunpack.c.l.b16 %v52
    %v187 = vunpack.c.l.b16 %v53
    %v188 = vunpack.c.l.b16 %v54
    %v189 = vunpack.c.l.b16 %v55
    %v190 = vunpack.c.l.b16 %v56
    %v191 = vunpack.c.l.b16 %v57
    %v192 = vunpack.c.l.b16 %v58
    %v193 = vunpack.c.l.b16 %v59
    %v194 = vunpack.c.l.b16 %v60
    %v195 = vunpack.c.l.b16 %v61
    %v196 = vunpack.c.l.b16 %v62
    %v197 = vunpack.c.l.b16 %v63
    %v198 = vunpack.c.l.b16 %v64
    %v199 = vunpack.c.l.b16 %v65
    %v200 = vunpack.c.l.b16 %v66
    %v201 = vunpack.c.l.b16 %v67
    %v202 = vunpack.c.l.b16 %v68
    %v203 = vunpack.c.l.b16 %v69
    %v204 = vunpack.c.l.b16 %v70
    %v205 = vunpack.c.l.b16 %v71
    %v206 = vunpack.c.l.b16 %v72
    %v207 = vunpack.c.l.b16 %v73
    %v208 = vunpack.c.l.b16 %v74
    %v209 = vunpack.c.l.b16 %v75
    %v210 = vunpack.c.l.b16 %v76
    %v211 = vunpack.c.l.b16 %v77
    %v212 = vunpack.c.l.b16 %v78
    %v213 = vunpack.c.l.b16 %v79
    %v214 = vunpack.c.l.b16 %v80
    %v215 = vunpack.c.l.b16 %v81
    %v216 = vunpack.c.l.b16 %v82
    %v217 = vunpack.c.l.b16 %v83
    %v218 = vunpack.c.l.b16 %v84
    %v219 = vunpack.c.l.b16 %v85
    %v220 = vunpack.c.l.b16 %v86
    %v221 = vunpack.c.l.b16 %v87
    %v222 = vunpack.c.l.b16 %v88
    %v223 = vpack.c.b16 %v160, %v159
    %v224 = vpack.c.b16 %v162, %v161
    %v225 = vpack.c.b16 %v164, %v163
    %v226 = vpack.c.b16 %v166, %v165
    %v227 = vpack.c.b16 %v168, %v167
    %v228 = vpack.c.b16 %v170, %v169
    %v229 = vpack.c.b16 %v172, %v171
    %v230 = vpack.c.b16 %v174, %v173
    %v231 = vpack.c.b16 %v176, %v175
    %v232 = vpack.c.b16 %v178, %v177
    %v233 = vpack.c.b16 %v180, %v179
    %v234 = vpack.c.b16 %v182, %v181
    %v235 = vpack.c.b16 %v184, %v183
    %v236 = vpack.c.b16 %v186, %v185
    %v237 = vpack.c.b16 %v188, %v187
    %v238 = vpack.c.b16 %v190, %v189
    %v239 = vpack.c.b16 %v192, %v191
    %v240 = vpack.c.b16 %v194, %v193
    %v241 = vpack.c.b16 %v196, %v195
    %v242 = vpack.c.b16 %v198, %v197
    %v243 = vpack.c.b16 %v200, %v199
    %v244 = vpack.c.b16 %v202, %v201
    %v245 = vpack.c.b16 %v204, %v203
    %v246 = vpack.c.b16 %v206, %v205
    %v247 = vpack.c.b16 %v208, %v207
    %v248 = vpack.c.b16 %v210, %v209
    %v249 = vpack.c.b16 %v212, %v211
    %v250 = vpack.c.b16 %v214, %v213
    %v251 = vpack.c.b16 %v216, %v215
    %v252 = vpack.c.b16 %v218, %v217
    %v253 = vpack.c.b16 %v220, %v219
    %v254 = vpack.c.b16 %v222, %v221
    %vm255 = vcmask 64512
    %v257 = vsel %vm255, %v223, 0
    %v260 = vsel %vm255, %v224, 0
    %v263 = vsel %vm255, %v225, 0
    %v266 = vsel %vm255, %v226, 0
    %v269 = vsel %vm255, %v227, 0
    %v272 = vsel %vm255, %v228, 0
    %v275 = vsel %vm255, %v229, 0
    %v278 = vsel %vm255, %v230, 0
    %v281 = vsel %vm255, %v231, 0
    %v284 = vsel %vm255, %v232, 0
    %v287 = vsel %vm255, %v233, 0
    %v290 = vsel %vm255, %v234, 0
    %v293 = vsel %vm255, %v235, 0
    %v296 = vsel %vm255, %v236, 0
    %v299 = vsel %vm255, %v237, 0
    %v302 = vsel %vm255, %v238, 0
    %v305 = vsel %vm255, %v239, 0
    %v308 = vsel %vm255, %v240, 0
    %v311 = vsel %vm255, %v241, 0
    %v314 = vsel %vm255, %v242, 0
    %v317 = vsel %vm255, %v243, 0
    %v320 = vsel %vm255, %v244, 0
    %v323 = vsel %vm255, %v245, 0
    %v326 = vsel %vm255, %v246, 0
    %v329 = vsel %vm255, %v247, 0
    %v332 = vsel %vm255, %v248, 0
    %v335 = vsel %vm255, %v249, 0
    %v338 = vsel %vm255, %v250, 0
    %v341 = vsel %vm255, %v251, 0
    %v344 = vsel %vm255, %v252, 0
    %v347 = vsel %vm255, %v253, 0
    %v350 = vsel %vm255, %v254, 0
    %vm352 = vcmask 1043456
    %v354 = vsel %vm352, %v89, 0
    %356 = vmatprep.subr.bf16.mxu0 0
    %357 = vmatpush1.bf16.msra.mxu0 0
    %358 = vmatprep.subr.bf16.mxu0 0
    %359 = vmatpush1.bf16.msra.mxu0 0
    %360 = vmatprep.subr.bf16.mxu0 0
    %361 = vmatpush1.bf16.msra.mxu0 0
    %362 = vmatprep.subr.bf16.mxu0 0
    %363 = vmatpush1.bf16.msra.mxu0 0
    %364 = vmatprep.subr.bf16.mxu0 0
    %365 = vmatpush1.bf16.msra.mxu0 0
    %366 = vmatprep.subr.bf16.mxu0 0
    %367 = vmatpush1.bf16.msra.mxu0 0
    %368 = vmatprep.subr.bf16.mxu0 0
    %369 = vmatpush1.bf16.msra.mxu0 0
    %370 = vmatprep.subr.bf16.mxu0 0
    %371 = vmatpush1.bf16.msra.mxu0 %v354
    %372 = vmatprep.subr.bf16.mxu0 0
    %373 = vmatpush2.bf16.msra.mxu0 0
    %374 = vmatprep.subr.bf16.mxu0 0
    %375 = vmatpush2.bf16.msra.mxu0 0
    %376 = vmatprep.subr.bf16.mxu0 0
    %377 = vmatpush2.bf16.msra.mxu0 0
    %378 = vmatprep.subr.bf16.mxu0 0
    %379 = vmatpush2.bf16.msra.mxu0 0
    %380 = vmatprep.subr.bf16.mxu0 0
    %381 = vmatpush2.bf16.msra.mxu0 0
    %382 = vmatprep.subr.bf16.mxu0 0
    %383 = vmatpush2.bf16.msra.mxu0 0
    %384 = vmatprep.subr.bf16.mxu0 0
    %385 = vmatpush2.bf16.msra.mxu0 0
    %386 = vmatprep.subr.bf16.mxu0 0
    %387 = vmatpush2.bf16.msra.mxu0 0
    %388 = vmatprep.mubr.bf16.mxu0 0
    %389 = vmatmul.mubr.bf16.gmra.mxu0 %v257
    %v390 = vpop.f32.mrf.mxu0
    %v391 = vadd.f32 %v94, %v390
    %v392 = vpop.f32.mrf.mxu0
    %v393 = vpop.f32.mrf.mxu0
    %v394 = vadd.f32 %v94, %v393
    %v395 = vpop.f32.mrf.mxu0
    %396 = vmatprep.mubr.bf16.mxu0 0
    %397 = vmatmul.mubr.bf16.gmra.mxu0 %v260
    %v398 = vpop.f32.mrf.mxu0
    %v399 = vadd.f32 %v94, %v398
    %v400 = vpop.f32.mrf.mxu0
    %v401 = vpop.f32.mrf.mxu0
    %v402 = vadd.f32 %v94, %v401
    %v403 = vpop.f32.mrf.mxu0
    %404 = vmatprep.mubr.bf16.mxu0 0
    %405 = vmatmul.mubr.bf16.gmra.mxu0 %v263
    %v406 = vpop.f32.mrf.mxu0
    %v407 = vadd.f32 %v94, %v406
    %v408 = vpop.f32.mrf.mxu0
    %v409 = vpop.f32.mrf.mxu0
    %v410 = vadd.f32 %v94, %v409
    %v411 = vpop.f32.mrf.mxu0
    %412 = vmatprep.mubr.bf16.mxu0 0
    %413 = vmatmul.mubr.bf16.gmra.mxu0 %v266
    %v414 = vpop.f32.mrf.mxu0
    %v415 = vadd.f32 %v94, %v414
    %v416 = vpop.f32.mrf.mxu0
    %v417 = vpop.f32.mrf.mxu0
    %v418 = vadd.f32 %v94, %v417
    %v419 = vpop.f32.mrf.mxu0
    %420 = vmatprep.mubr.bf16.mxu0 0
    %421 = vmatmul.mubr.bf16.gmra.mxu0 %v269
    %v422 = vpop.f32.mrf.mxu0
    %v423 = vadd.f32 %v94, %v422
    %v424 = vpop.f32.mrf.mxu0
    %v425 = vpop.f32.mrf.mxu0
    %v426 = vadd.f32 %v94, %v425
    %v427 = vpop.f32.mrf.mxu0
    %428 = vmatprep.mubr.bf16.mxu0 0
    %429 = vmatmul.mubr.bf16.gmra.mxu0 %v272
    %v430 = vpop.f32.mrf.mxu0
    %v431 = vadd.f32 %v94, %v430
    %v432 = vpop.f32.mrf.mxu0
    %v433 = vpop.f32.mrf.mxu0
    %v434 = vadd.f32 %v94, %v433
    %v435 = vpop.f32.mrf.mxu0
    %436 = vmatprep.mubr.bf16.mxu0 0
    %437 = vmatmul.mubr.bf16.gmra.mxu0 %v275
    %v438 = vpop.f32.mrf.mxu0
    %v439 = vadd.f32 %v94, %v438
    %v440 = vpop.f32.mrf.mxu0
    %v441 = vpop.f32.mrf.mxu0
    %v442 = vadd.f32 %v94, %v441
    %v443 = vpop.f32.mrf.mxu0
    %444 = vmatprep.mubr.bf16.mxu0 0
    %445 = vmatmul.mubr.bf16.gmra.mxu0 %v278
    %v446 = vpop.f32.mrf.mxu0
    %v447 = vadd.f32 %v94, %v446
    %v448 = vpop.f32.mrf.mxu0
    %v449 = vpop.f32.mrf.mxu0
    %v450 = vadd.f32 %v94, %v449
    %v451 = vpop.f32.mrf.mxu0
    %452 = vmatprep.mubr.bf16.mxu0 0
    %453 = vmatmul.mubr.bf16.gmra.mxu0 %v281
    %v454 = vpop.f32.mrf.mxu0
    %v455 = vadd.f32 %v94, %v454
    %v456 = vpop.f32.mrf.mxu0
    %v457 = vpop.f32.mrf.mxu0
    %v458 = vadd.f32 %v94, %v457
    %v459 = vpop.f32.mrf.mxu0
    %460 = vmatprep.mubr.bf16.mxu0 0
    %461 = vmatmul.mubr.bf16.gmra.mxu0 %v284
    %v462 = vpop.f32.mrf.mxu0
    %v463 = vadd.f32 %v94, %v462
    %v464 = vpop.f32.mrf.mxu0
    %v465 = vpop.f32.mrf.mxu0
    %v466 = vadd.f32 %v94, %v465
    %v467 = vpop.f32.mrf.mxu0
    %468 = vmatprep.mubr.bf16.mxu0 0
    %469 = vmatmul.mubr.bf16.gmra.mxu0 %v287
    %v470 = vpop.f32.mrf.mxu0
    %v471 = vadd.f32 %v94, %v470
    %v472 = vpop.f32.mrf.mxu0
    %v473 = vpop.f32.mrf.mxu0
    %v474 = vadd.f32 %v94, %v473
    %v475 = vpop.f32.mrf.mxu0
    %476 = vmatprep.mubr.bf16.mxu0 0
    %477 = vmatmul.mubr.bf16.gmra.mxu0 %v290
    %v478 = vpop.f32.mrf.mxu0
    %v479 = vadd.f32 %v94, %v478
    %v480 = vpop.f32.mrf.mxu0
    %v481 = vpop.f32.mrf.mxu0
    %v482 = vadd.f32 %v94, %v481
    %v483 = vpop.f32.mrf.mxu0
    %484 = vmatprep.mubr.bf16.mxu0 0
    %485 = vmatmul.mubr.bf16.gmra.mxu0 %v293
    %v486 = vpop.f32.mrf.mxu0
    %v487 = vadd.f32 %v94, %v486
    %v488 = vpop.f32.mrf.mxu0
    %v489 = vpop.f32.mrf.mxu0
    %v490 = vadd.f32 %v94, %v489
    %v491 = vpop.f32.mrf.mxu0
    %492 = vmatprep.mubr.bf16.mxu0 0
    %493 = vmatmul.mubr.bf16.gmra.mxu0 %v296
    %v494 = vpop.f32.mrf.mxu0
    %v495 = vadd.f32 %v94, %v494
    %v496 = vpop.f32.mrf.mxu0
    %v497 = vpop.f32.mrf.mxu0
    %v498 = vadd.f32 %v94, %v497
    %v499 = vpop.f32.mrf.mxu0
    %500 = vmatprep.mubr.bf16.mxu0 0
    %501 = vmatmul.mubr.bf16.gmra.mxu0 %v299
    %v502 = vpop.f32.mrf.mxu0
    %v503 = vadd.f32 %v94, %v502
    %v504 = vpop.f32.mrf.mxu0
    %v505 = vpop.f32.mrf.mxu0
    %v506 = vadd.f32 %v94, %v505
    %v507 = vpop.f32.mrf.mxu0
    %508 = vmatprep.mubr.bf16.mxu0 0
    %509 = vmatmul.mubr.bf16.gmra.mxu0 %v302
    %v510 = vpop.f32.mrf.mxu0
    %v511 = vadd.f32 %v94, %v510
    %v512 = vpop.f32.mrf.mxu0
    %v513 = vpop.f32.mrf.mxu0
    %v514 = vadd.f32 %v94, %v513
    %v515 = vpop.f32.mrf.mxu0
    %516 = vmatprep.mubr.bf16.mxu0 0
    %517 = vmatmul.mubr.bf16.gmra.mxu0 %v305
    %v518 = vpop.f32.mrf.mxu0
    %v519 = vadd.f32 %v94, %v518
    %v520 = vpop.f32.mrf.mxu0
    %v521 = vpop.f32.mrf.mxu0
    %v522 = vadd.f32 %v94, %v521
    %v523 = vpop.f32.mrf.mxu0
    %524 = vmatprep.mubr.bf16.mxu0 0
    %525 = vmatmul.mubr.bf16.gmra.mxu0 %v308
    %v526 = vpop.f32.mrf.mxu0
    %v527 = vadd.f32 %v94, %v526
    %v528 = vpop.f32.mrf.mxu0
    %v529 = vpop.f32.mrf.mxu0
    %v530 = vadd.f32 %v94, %v529
    %v531 = vpop.f32.mrf.mxu0
    %532 = vmatprep.mubr.bf16.mxu0 0
    %533 = vmatmul.mubr.bf16.gmra.mxu0 %v311
    %v534 = vpop.f32.mrf.mxu0
    %v535 = vadd.f32 %v94, %v534
    %v536 = vpop.f32.mrf.mxu0
    %v537 = vpop.f32.mrf.mxu0
    %v538 = vadd.f32 %v94, %v537
    %v539 = vpop.f32.mrf.mxu0
    %540 = vmatprep.mubr.bf16.mxu0 0
    %541 = vmatmul.mubr.bf16.gmra.mxu0 %v314
    %v542 = vpop.f32.mrf.mxu0
    %v543 = vadd.f32 %v94, %v542
    %v544 = vpop.f32.mrf.mxu0
    %v545 = vpop.f32.mrf.mxu0
    %v546 = vadd.f32 %v94, %v545
    %v547 = vpop.f32.mrf.mxu0
    %548 = vmatprep.mubr.bf16.mxu0 0
    %549 = vmatmul.mubr.bf16.gmra.mxu0 %v317
    %v550 = vpop.f32.mrf.mxu0
    %v551 = vadd.f32 %v94, %v550
    %v552 = vpop.f32.mrf.mxu0
    %v553 = vpop.f32.mrf.mxu0
    %v554 = vadd.f32 %v94, %v553
    %v555 = vpop.f32.mrf.mxu0
    %556 = vmatprep.mubr.bf16.mxu0 0
    %557 = vmatmul.mubr.bf16.gmra.mxu0 %v320
    %v558 = vpop.f32.mrf.mxu0
    %v559 = vadd.f32 %v94, %v558
    %v560 = vpop.f32.mrf.mxu0
    %v561 = vpop.f32.mrf.mxu0
    %v562 = vadd.f32 %v94, %v561
    %v563 = vpop.f32.mrf.mxu0
    %564 = vmatprep.mubr.bf16.mxu0 0
    %565 = vmatmul.mubr.bf16.gmra.mxu0 %v323
    %v566 = vpop.f32.mrf.mxu0
    %v567 = vadd.f32 %v94, %v566
    %v568 = vpop.f32.mrf.mxu0
    %v569 = vpop.f32.mrf.mxu0
    %v570 = vadd.f32 %v94, %v569
    %v571 = vpop.f32.mrf.mxu0
    %572 = vmatprep.mubr.bf16.mxu0 0
    %573 = vmatmul.mubr.bf16.gmra.mxu0 %v326
    %v574 = vpop.f32.mrf.mxu0
    %v575 = vadd.f32 %v94, %v574
    %v576 = vpop.f32.mrf.mxu0
    %v577 = vpop.f32.mrf.mxu0
    %v578 = vadd.f32 %v94, %v577
    %v579 = vpop.f32.mrf.mxu0
    %580 = vmatprep.mubr.bf16.mxu0 0
    %581 = vmatmul.mubr.bf16.gmra.mxu0 %v329
    %v582 = vpop.f32.mrf.mxu0
    %v583 = vadd.f32 %v94, %v582
    %v584 = vpop.f32.mrf.mxu0
    %v585 = vpop.f32.mrf.mxu0
    %v586 = vadd.f32 %v94, %v585
    %v587 = vpop.f32.mrf.mxu0
    %588 = vmatprep.mubr.bf16.mxu0 0
    %589 = vmatmul.mubr.bf16.gmra.mxu0 %v332
    %v590 = vpop.f32.mrf.mxu0
    %v591 = vadd.f32 %v94, %v590
    %v592 = vpop.f32.mrf.mxu0
    %v593 = vpop.f32.mrf.mxu0
    %v594 = vadd.f32 %v94, %v593
    %v595 = vpop.f32.mrf.mxu0
    %596 = vmatprep.mubr.bf16.mxu0 0
    %597 = vmatmul.mubr.bf16.gmra.mxu0 %v335
    %v598 = vpop.f32.mrf.mxu0
    %v599 = vadd.f32 %v94, %v598
    %v600 = vpop.f32.mrf.mxu0
    %v601 = vpop.f32.mrf.mxu0
    %v602 = vadd.f32 %v94, %v601
    %v603 = vpop.f32.mrf.mxu0
    %604 = vmatprep.mubr.bf16.mxu0 0
    %605 = vmatmul.mubr.bf16.gmra.mxu0 %v338
    %v606 = vpop.f32.mrf.mxu0
    %v607 = vadd.f32 %v94, %v606
    %v608 = vpop.f32.mrf.mxu0
    %v609 = vpop.f32.mrf.mxu0
    %v610 = vadd.f32 %v94, %v609
    %v611 = vpop.f32.mrf.mxu0
    %612 = vmatprep.mubr.bf16.mxu0 0
    %613 = vmatmul.mubr.bf16.gmra.mxu0 %v341
    %v614 = vpop.f32.mrf.mxu0
    %v615 = vadd.f32 %v94, %v614
    %v616 = vpop.f32.mrf.mxu0
    %v617 = vpop.f32.mrf.mxu0
    %v618 = vadd.f32 %v94, %v617
    %v619 = vpop.f32.mrf.mxu0
    %620 = vmatprep.mubr.bf16.mxu0 0
    %621 = vmatmul.mubr.bf16.gmra.mxu0 %v344
    %v622 = vpop.f32.mrf.mxu0
    %v623 = vadd.f32 %v94, %v622
    %v624 = vpop.f32.mrf.mxu0
    %v625 = vpop.f32.mrf.mxu0
    %v626 = vadd.f32 %v94, %v625
    %v627 = vpop.f32.mrf.mxu0
    %628 = vmatprep.mubr.bf16.mxu0 0
    %629 = vmatmul.mubr.bf16.gmra.mxu0 %v347
    %v630 = vpop.f32.mrf.mxu0
    %v631 = vadd.f32 %v94, %v630
    %v632 = vpop.f32.mrf.mxu0
    %v633 = vpop.f32.mrf.mxu0
    %v634 = vadd.f32 %v94, %v633
    %v635 = vpop.f32.mrf.mxu0
    %636 = vmatprep.mubr.bf16.mxu0 0
    %637 = vmatmul.mubr.bf16.gmra.mxu0 %v350
    %v638 = vpop.f32.mrf.mxu0
    %v639 = vadd.f32 %v94, %v638
    %v640 = vpop.f32.mrf.mxu0
    %v641 = vpop.f32.mrf.mxu0
    %v642 = vadd.f32 %v94, %v641
    %v643 = vpop.f32.mrf.mxu0
    %644 = vdwg.mxu0
    %v645 = vmax.f32 %v391, 0.0
    %v646 = vmax.f32 %v394, 0.0
    %v647 = vmax.f32 %v399, 0.0
    %v648 = vmax.f32 %v402, 0.0
    %v649 = vmax.f32 %v407, 0.0
    %v650 = vmax.f32 %v410, 0.0
    %v651 = vmax.f32 %v415, 0.0
    %v652 = vmax.f32 %v418, 0.0
    %v653 = vmax.f32 %v423, 0.0
    %v654 = vmax.f32 %v426, 0.0
    %v655 = vmax.f32 %v431, 0.0
    %v656 = vmax.f32 %v434, 0.0
    %v657 = vmax.f32 %v439, 0.0
    %v658 = vmax.f32 %v442, 0.0
    %v659 = vmax.f32 %v447, 0.0
    %v660 = vmax.f32 %v450, 0.0
    %v661 = vmax.f32 %v455, 0.0
    %v662 = vmax.f32 %v458, 0.0
    %v663 = vmax.f32 %v463, 0.0
    %v664 = vmax.f32 %v466, 0.0
    %v665 = vmax.f32 %v471, 0.0
    %v666 = vmax.f32 %v474, 0.0
    %v667 = vmax.f32 %v479, 0.0
    %v668 = vmax.f32 %v482, 0.0
    %v669 = vmax.f32 %v487, 0.0
    %v670 = vmax.f32 %v490, 0.0
    %v671 = vmax.f32 %v495, 0.0
    %v672 = vmax.f32 %v498, 0.0
    %v673 = vmax.f32 %v503, 0.0
    %v674 = vmax.f32 %v506, 0.0
    %v675 = vmax.f32 %v511, 0.0
    %v676 = vmax.f32 %v514, 0.0
    %v677 = vmax.f32 %v519, 0.0
    %v678 = vmax.f32 %v522, 0.0
    %v679 = vmax.f32 %v527, 0.0
    %v680 = vmax.f32 %v530, 0.0
    %v681 = vmax.f32 %v535, 0.0
    %v682 = vmax.f32 %v538, 0.0
    %v683 = vmax.f32 %v543, 0.0
    %v684 = vmax.f32 %v546, 0.0
    %v685 = vmax.f32 %v551, 0.0
    %v686 = vmax.f32 %v554, 0.0
    %v687 = vmax.f32 %v559, 0.0
    %v688 = vmax.f32 %v562, 0.0
    %v689 = vmax.f32 %v567, 0.0
    %v690 = vmax.f32 %v570, 0.0
    %v691 = vmax.f32 %v575, 0.0
    %v692 = vmax.f32 %v578, 0.0
    %v693 = vmax.f32 %v583, 0.0
    %v694 = vmax.f32 %v586, 0.0
    %v695 = vmax.f32 %v591, 0.0
    %v696 = vmax.f32 %v594, 0.0
    %v697 = vmax.f32 %v599, 0.0
    %v698 = vmax.f32 %v602, 0.0
    %v699 = vmax.f32 %v607, 0.0
    %v700 = vmax.f32 %v610, 0.0
    %v701 = vmax.f32 %v615, 0.0
    %v702 = vmax.f32 %v618, 0.0
    %v703 = vmax.f32 %v623, 0.0
    %v704 = vmax.f32 %v626, 0.0
    %v705 = vmax.f32 %v631, 0.0
    %v706 = vmax.f32 %v634, 0.0
    %v707 = vmax.f32 %v639, 0.0
    %v708 = vmax.f32 %v642, 0.0
    %v709 = vpack.c.bf16 %v646, %v645
    %v710 = vpack.c.bf16 %v648, %v647
    %v711 = vpack.c.bf16 %v650, %v649
    %v712 = vpack.c.bf16 %v652, %v651
    %v713 = vpack.c.bf16 %v654, %v653
    %v714 = vpack.c.bf16 %v656, %v655
    %v715 = vpack.c.bf16 %v658, %v657
    %v716 = vpack.c.bf16 %v660, %v659
    %v717 = vpack.c.bf16 %v662, %v661
    %v718 = vpack.c.bf16 %v664, %v663
    %v719 = vpack.c.bf16 %v666, %v665
    %v720 = vpack.c.bf16 %v668, %v667
    %v721 = vpack.c.bf16 %v670, %v669
    %v722 = vpack.c.bf16 %v672, %v671
    %v723 = vpack.c.bf16 %v674, %v673
    %v724 = vpack.c.bf16 %v676, %v675
    %v725 = vpack.c.bf16 %v678, %v677
    %v726 = vpack.c.bf16 %v680, %v679
    %v727 = vpack.c.bf16 %v682, %v681
    %v728 = vpack.c.bf16 %v684, %v683
    %v729 = vpack.c.bf16 %v686, %v685
    %v730 = vpack.c.bf16 %v688, %v687
    %v731 = vpack.c.bf16 %v690, %v689
    %v732 = vpack.c.bf16 %v692, %v691
    %v733 = vpack.c.bf16 %v694, %v693
    %v734 = vpack.c.bf16 %v696, %v695
    %v735 = vpack.c.bf16 %v698, %v697
    %v736 = vpack.c.bf16 %v700, %v699
    %v737 = vpack.c.bf16 %v702, %v701
    %v738 = vpack.c.bf16 %v704, %v703
    %v739 = vpack.c.bf16 %v706, %v705
    %v740 = vpack.c.bf16 %v708, %v707
    %v741 = vld [vmem:[%s3] sm:$0xf]
    %v742 = vld [vmem:[%s3 + $0x4] sm:$0xf]
    %v743 = vld [vmem:[%s3 + $0x8] sm:$0xf]
    %v744 = vld [vmem:[%s3 + $0xc] sm:$0xf]
    %v745 = vld [vmem:[%s3 + $0x10] sm:$0xf]
    %v746 = vld [vmem:[%s3 + $0x14] sm:$0xf]
    %v747 = vld [vmem:[%s3 + $0x18] sm:$0xf]
    %v748 = vld [vmem:[%s3 + $0x1c] sm:$0xf]
    %v749 = vld [vmem:[%s3 + $0x20] sm:$0xf]
    %v750 = vld [vmem:[%s3 + $0x24] sm:$0xf]
    %v751 = vld [vmem:[%s3 + $0x28] sm:$0xf]
    %v752 = vld [vmem:[%s3 + $0x2c] sm:$0xf]
    %v753 = vld [vmem:[%s3 + $0x30] sm:$0xf]
    %v754 = vld [vmem:[%s3 + $0x34] sm:$0xf]
    %v755 = vld [vmem:[%s3 + $0x38] sm:$0xf]
    %v756 = vld [vmem:[%s3 + $0x3c] sm:$0xf]
    %v757 = vld [vmem:[%s5 + $0x1] sm:$0x1]
    %v758 = vlaneseq
    %v759 = vshrl.u32 %v758, 7
    %v760 = vsub.s32 0, %v759
    %v761 = vrot.slane %v757, %v760
    %v778 = vunpack.c.l.b16 %v741
    %v779 = vunpack.c.l.b16 %v742
    %v780 = vunpack.c.l.b16 %v743
    %v781 = vunpack.c.l.b16 %v744
    %v782 = vunpack.c.l.b16 %v745
    %v783 = vunpack.c.l.b16 %v746
    %v784 = vunpack.c.l.b16 %v747
    %v785 = vunpack.c.l.b16 %v748
    %v786 = vunpack.c.l.b16 %v749
    %v787 = vunpack.c.l.b16 %v750
    %v788 = vunpack.c.l.b16 %v751
    %v789 = vunpack.c.l.b16 %v752
    %v790 = vunpack.c.l.b16 %v753
    %v791 = vunpack.c.l.b16 %v754
    %v792 = vunpack.c.l.b16 %v755
    %v793 = vunpack.c.l.b16 %v756
    %v794 = vpack.c.b16 %v779, %v778
    %v795 = vpack.c.b16 %v781, %v780
    %v796 = vpack.c.b16 %v783, %v782
    %v797 = vpack.c.b16 %v785, %v784
    %v798 = vpack.c.b16 %v787, %v786
    %v799 = vpack.c.b16 %v789, %v788
    %v800 = vpack.c.b16 %v791, %v790
    %v801 = vpack.c.b16 %v793, %v792
    %810 = vmatprep.subr.bf16.mxu0 0
    %811 = vmatpush1.bf16.msra.mxu0 %v801
    %812 = vmatprep.subr.bf16.mxu0 0
    %813 = vmatpush1.bf16.msra.mxu0 %v800
    %814 = vmatprep.subr.bf16.mxu0 0
    %815 = vmatpush1.bf16.msra.mxu0 %v799
    %816 = vmatprep.subr.bf16.mxu0 0
    %817 = vmatpush1.bf16.msra.mxu0 %v798
    %818 = vmatprep.subr.bf16.mxu0 0
    %819 = vmatpush1.bf16.msra.mxu0 %v797
    %820 = vmatprep.subr.bf16.mxu0 0
    %821 = vmatpush1.bf16.msra.mxu0 %v796
    %822 = vmatprep.subr.bf16.mxu0 0
    %823 = vmatpush1.bf16.msra.mxu0 %v795
    %824 = vmatprep.subr.bf16.mxu0 0
    %825 = vmatpush1.bf16.msra.mxu0 %v794
    %826 = vmatprep.subr.bf16.mxu0 0
    %827 = vmatpush2.bf16.msra.mxu0 0
    %828 = vmatprep.subr.bf16.mxu0 0
    %829 = vmatpush2.bf16.msra.mxu0 0
    %830 = vmatprep.subr.bf16.mxu0 0
    %831 = vmatpush2.bf16.msra.mxu0 0
    %832 = vmatprep.subr.bf16.mxu0 0
    %833 = vmatpush2.bf16.msra.mxu0 0
    %834 = vmatprep.subr.bf16.mxu0 0
    %835 = vmatpush2.bf16.msra.mxu0 0
    %836 = vmatprep.subr.bf16.mxu0 0
    %837 = vmatpush2.bf16.msra.mxu0 0
    %838 = vmatprep.subr.bf16.mxu0 0
    %839 = vmatpush2.bf16.msra.mxu0 0
    %840 = vmatprep.subr.bf16.mxu0 0
    %841 = vmatpush2.bf16.msra.mxu0 0
    %842 = vmatprep.mubr.bf16.mxu0 0
    %843 = vmatmul.mubr.bf16.gmra.mxu0 %v709
    %v844 = vpop.f32.mrf.mxu0
    %v845 = vadd.f32 %v761, %v844
    %v846 = vpop.f32.mrf.mxu0
    %v847 = vpop.f32.mrf.mxu0
    %v848 = vadd.f32 %v761, %v847
    %v849 = vpop.f32.mrf.mxu0
    %850 = vmatprep.mubr.bf16.mxu0 0
    %851 = vmatmul.mubr.bf16.gmra.mxu0 %v710
    %v852 = vpop.f32.mrf.mxu0
    %v853 = vadd.f32 %v761, %v852
    %v854 = vpop.f32.mrf.mxu0
    %v855 = vpop.f32.mrf.mxu0
    %v856 = vadd.f32 %v761, %v855
    %v857 = vpop.f32.mrf.mxu0
    %858 = vmatprep.mubr.bf16.mxu0 0
    %859 = vmatmul.mubr.bf16.gmra.mxu0 %v711
    %v860 = vpop.f32.mrf.mxu0
    %v861 = vadd.f32 %v761, %v860
    %v862 = vpop.f32.mrf.mxu0
    %v863 = vpop.f32.mrf.mxu0
    %v864 = vadd.f32 %v761, %v863
    %v865 = vpop.f32.mrf.mxu0
    %866 = vmatprep.mubr.bf16.mxu0 0
    %867 = vmatmul.mubr.bf16.gmra.mxu0 %v712
    %v868 = vpop.f32.mrf.mxu0
    %v869 = vadd.f32 %v761, %v868
    %v870 = vpop.f32.mrf.mxu0
    %v871 = vpop.f32.mrf.mxu0
    %v872 = vadd.f32 %v761, %v871
    %v873 = vpop.f32.mrf.mxu0
    %874 = vmatprep.mubr.bf16.mxu0 0
    %875 = vmatmul.mubr.bf16.gmra.mxu0 %v713
    %v876 = vpop.f32.mrf.mxu0
    %v877 = vadd.f32 %v761, %v876
    %v878 = vpop.f32.mrf.mxu0
    %v879 = vpop.f32.mrf.mxu0
    %v880 = vadd.f32 %v761, %v879
    %v881 = vpop.f32.mrf.mxu0
    %882 = vmatprep.mubr.bf16.mxu0 0
    %883 = vmatmul.mubr.bf16.gmra.mxu0 %v714
    %v884 = vpop.f32.mrf.mxu0
    %v885 = vadd.f32 %v761, %v884
    %v886 = vpop.f32.mrf.mxu0
    %v887 = vpop.f32.mrf.mxu0
    %v888 = vadd.f32 %v761, %v887
    %v889 = vpop.f32.mrf.mxu0
    %890 = vmatprep.mubr.bf16.mxu0 0
    %891 = vmatmul.mubr.bf16.gmra.mxu0 %v715
    %v892 = vpop.f32.mrf.mxu0
    %v893 = vadd.f32 %v761, %v892
    %v894 = vpop.f32.mrf.mxu0
    %v895 = vpop.f32.mrf.mxu0
    %v896 = vadd.f32 %v761, %v895
    %v897 = vpop.f32.mrf.mxu0
    %898 = vmatprep.mubr.bf16.mxu0 0
    %899 = vmatmul.mubr.bf16.gmra.mxu0 %v716
    %v900 = vpop.f32.mrf.mxu0
    %v901 = vadd.f32 %v761, %v900
    %v902 = vpop.f32.mrf.mxu0
    %v903 = vpop.f32.mrf.mxu0
    %v904 = vadd.f32 %v761, %v903
    %v905 = vpop.f32.mrf.mxu0
    %906 = vmatprep.mubr.bf16.mxu0 0
    %907 = vmatmul.mubr.bf16.gmra.mxu0 %v717
    %v908 = vpop.f32.mrf.mxu0
    %v909 = vadd.f32 %v761, %v908
    %v910 = vpop.f32.mrf.mxu0
    %v911 = vpop.f32.mrf.mxu0
    %v912 = vadd.f32 %v761, %v911
    %v913 = vpop.f32.mrf.mxu0
    %914 = vmatprep.mubr.bf16.mxu0 0
    %915 = vmatmul.mubr.bf16.gmra.mxu0 %v718
    %v916 = vpop.f32.mrf.mxu0
    %v917 = vadd.f32 %v761, %v916
    %v918 = vpop.f32.mrf.mxu0
    %v919 = vpop.f32.mrf.mxu0
    %v920 = vadd.f32 %v761, %v919
    %v921 = vpop.f32.mrf.mxu0
    %922 = vmatprep.mubr.bf16.mxu0 0
    %923 = vmatmul.mubr.bf16.gmra.mxu0 %v719
    %v924 = vpop.f32.mrf.mxu0
    %v925 = vadd.f32 %v761, %v924
    %v926 = vpop.f32.mrf.mxu0
    %v927 = vpop.f32.mrf.mxu0
    %v928 = vadd.f32 %v761, %v927
    %v929 = vpop.f32.mrf.mxu0
    %930 = vmatprep.mubr.bf16.mxu0 0
    %931 = vmatmul.mubr.bf16.gmra.mxu0 %v720
    %v932 = vpop.f32.mrf.mxu0
    %v933 = vadd.f32 %v761, %v932
    %v934 = vpop.f32.mrf.mxu0
    %v935 = vpop.f32.mrf.mxu0
    %v936 = vadd.f32 %v761, %v935
    %v937 = vpop.f32.mrf.mxu0
    %938 = vmatprep.mubr.bf16.mxu0 0
    %939 = vmatmul.mubr.bf16.gmra.mxu0 %v721
    %v940 = vpop.f32.mrf.mxu0
    %v941 = vadd.f32 %v761, %v940
    %v942 = vpop.f32.mrf.mxu0
    %v943 = vpop.f32.mrf.mxu0
    %v944 = vadd.f32 %v761, %v943
    %v945 = vpop.f32.mrf.mxu0
    %946 = vmatprep.mubr.bf16.mxu0 0
    %947 = vmatmul.mubr.bf16.gmra.mxu0 %v722
    %v948 = vpop.f32.mrf.mxu0
    %v949 = vadd.f32 %v761, %v948
    %v950 = vpop.f32.mrf.mxu0
    %v951 = vpop.f32.mrf.mxu0
    %v952 = vadd.f32 %v761, %v951
    %v953 = vpop.f32.mrf.mxu0
    %954 = vmatprep.mubr.bf16.mxu0 0
    %955 = vmatmul.mubr.bf16.gmra.mxu0 %v723
    %v956 = vpop.f32.mrf.mxu0
    %v957 = vadd.f32 %v761, %v956
    %v958 = vpop.f32.mrf.mxu0
    %v959 = vpop.f32.mrf.mxu0
    %v960 = vadd.f32 %v761, %v959
    %v961 = vpop.f32.mrf.mxu0
    %962 = vmatprep.mubr.bf16.mxu0 0
    %963 = vmatmul.mubr.bf16.gmra.mxu0 %v724
    %v964 = vpop.f32.mrf.mxu0
    %v965 = vadd.f32 %v761, %v964
    %v966 = vpop.f32.mrf.mxu0
    %v967 = vpop.f32.mrf.mxu0
    %v968 = vadd.f32 %v761, %v967
    %v969 = vpop.f32.mrf.mxu0
    %970 = vmatprep.mubr.bf16.mxu0 0
    %971 = vmatmul.mubr.bf16.gmra.mxu0 %v725
    %v972 = vpop.f32.mrf.mxu0
    %v973 = vadd.f32 %v761, %v972
    %v974 = vpop.f32.mrf.mxu0
    %v975 = vpop.f32.mrf.mxu0
    %v976 = vadd.f32 %v761, %v975
    %v977 = vpop.f32.mrf.mxu0
    %978 = vmatprep.mubr.bf16.mxu0 0
    %979 = vmatmul.mubr.bf16.gmra.mxu0 %v726
    %v980 = vpop.f32.mrf.mxu0
    %v981 = vadd.f32 %v761, %v980
    %v982 = vpop.f32.mrf.mxu0
    %v983 = vpop.f32.mrf.mxu0
    %v984 = vadd.f32 %v761, %v983
    %v985 = vpop.f32.mrf.mxu0
    %986 = vmatprep.mubr.bf16.mxu0 0
    %987 = vmatmul.mubr.bf16.gmra.mxu0 %v727
    %v988 = vpop.f32.mrf.mxu0
    %v989 = vadd.f32 %v761, %v988
    %v990 = vpop.f32.mrf.mxu0
    %v991 = vpop.f32.mrf.mxu0
    %v992 = vadd.f32 %v761, %v991
    %v993 = vpop.f32.mrf.mxu0
    %994 = vmatprep.mubr.bf16.mxu0 0
    %995 = vmatmul.mubr.bf16.gmra.mxu0 %v728
    %v996 = vpop.f32.mrf.mxu0
    %v997 = vadd.f32 %v761, %v996
    %v998 = vpop.f32.mrf.mxu0
    %v999 = vpop.f32.mrf.mxu0
    %v1000 = vadd.f32 %v761, %v999
    %v1001 = vpop.f32.mrf.mxu0
    %1002 = vmatprep.mubr.bf16.mxu0 0
    %1003 = vmatmul.mubr.bf16.gmra.mxu0 %v729
    %v1004 = vpop.f32.mrf.mxu0
    %v1005 = vadd.f32 %v761, %v1004
    %v1006 = vpop.f32.mrf.mxu0
    %v1007 = vpop.f32.mrf.mxu0
    %v1008 = vadd.f32 %v761, %v1007
    %v1009 = vpop.f32.mrf.mxu0
    %1010 = vmatprep.mubr.bf16.mxu0 0
    %1011 = vmatmul.mubr.bf16.gmra.mxu0 %v730
    %v1012 = vpop.f32.mrf.mxu0
    %v1013 = vadd.f32 %v761, %v1012
    %v1014 = vpop.f32.mrf.mxu0
    %v1015 = vpop.f32.mrf.mxu0
    %v1016 = vadd.f32 %v761, %v1015
    %v1017 = vpop.f32.mrf.mxu0
    %1018 = vmatprep.mubr.bf16.mxu0 0
    %1019 = vmatmul.mubr.bf16.gmra.mxu0 %v731
    %v1020 = vpop.f32.mrf.mxu0
    %v1021 = vadd.f32 %v761, %v1020
    %v1022 = vpop.f32.mrf.mxu0
    %v1023 = vpop.f32.mrf.mxu0
    %v1024 = vadd.f32 %v761, %v1023
    %v1025 = vpop.f32.mrf.mxu0
    %1026 = vmatprep.mubr.bf16.mxu0 0
    %1027 = vmatmul.mubr.bf16.gmra.mxu0 %v732
    %v1028 = vpop.f32.mrf.mxu0
    %v1029 = vadd.f32 %v761, %v1028
    %v1030 = vpop.f32.mrf.mxu0
    %v1031 = vpop.f32.mrf.mxu0
    %v1032 = vadd.f32 %v761, %v1031
    %v1033 = vpop.f32.mrf.mxu0
    %1034 = vmatprep.mubr.bf16.mxu0 0
    %1035 = vmatmul.mubr.bf16.gmra.mxu0 %v733
    %v1036 = vpop.f32.mrf.mxu0
    %v1037 = vadd.f32 %v761, %v1036
    %v1038 = vpop.f32.mrf.mxu0
    %v1039 = vpop.f32.mrf.mxu0
    %v1040 = vadd.f32 %v761, %v1039
    %v1041 = vpop.f32.mrf.mxu0
    %1042 = vmatprep.mubr.bf16.mxu0 0
    %1043 = vmatmul.mubr.bf16.gmra.mxu0 %v734
    %v1044 = vpop.f32.mrf.mxu0
    %v1045 = vadd.f32 %v761, %v1044
    %v1046 = vpop.f32.mrf.mxu0
    %v1047 = vpop.f32.mrf.mxu0
    %v1048 = vadd.f32 %v761, %v1047
    %v1049 = vpop.f32.mrf.mxu0
    %1050 = vmatprep.mubr.bf16.mxu0 0
    %1051 = vmatmul.mubr.bf16.gmra.mxu0 %v735
    %v1052 = vpop.f32.mrf.mxu0
    %v1053 = vadd.f32 %v761, %v1052
    %v1054 = vpop.f32.mrf.mxu0
    %v1055 = vpop.f32.mrf.mxu0
    %v1056 = vadd.f32 %v761, %v1055
    %v1057 = vpop.f32.mrf.mxu0
    %1058 = vmatprep.mubr.bf16.mxu0 0
    %1059 = vmatmul.mubr.bf16.gmra.mxu0 %v736
    %v1060 = vpop.f32.mrf.mxu0
    %v1061 = vadd.f32 %v761, %v1060
    %v1062 = vpop.f32.mrf.mxu0
    %v1063 = vpop.f32.mrf.mxu0
    %v1064 = vadd.f32 %v761, %v1063
    %v1065 = vpop.f32.mrf.mxu0
    %1066 = vmatprep.mubr.bf16.mxu0 0
    %1067 = vmatmul.mubr.bf16.gmra.mxu0 %v737
    %v1068 = vpop.f32.mrf.mxu0
    %v1069 = vadd.f32 %v761, %v1068
    %v1070 = vpop.f32.mrf.mxu0
    %v1071 = vpop.f32.mrf.mxu0
    %v1072 = vadd.f32 %v761, %v1071
    %v1073 = vpop.f32.mrf.mxu0
    %1074 = vmatprep.mubr.bf16.mxu0 0
    %1075 = vmatmul.mubr.bf16.gmra.mxu0 %v738
    %v1076 = vpop.f32.mrf.mxu0
    %v1077 = vadd.f32 %v761, %v1076
    %v1078 = vpop.f32.mrf.mxu0
    %v1079 = vpop.f32.mrf.mxu0
    %v1080 = vadd.f32 %v761, %v1079
    %v1081 = vpop.f32.mrf.mxu0
    %1082 = vmatprep.mubr.bf16.mxu0 0
    %1083 = vmatmul.mubr.bf16.gmra.mxu0 %v739
    %v1084 = vpop.f32.mrf.mxu0
    %v1085 = vadd.f32 %v761, %v1084
    %v1086 = vpop.f32.mrf.mxu0
    %v1087 = vpop.f32.mrf.mxu0
    %v1088 = vadd.f32 %v761, %v1087
    %v1089 = vpop.f32.mrf.mxu0
    %1090 = vmatprep.mubr.bf16.mxu0 0
    %1091 = vmatmul.mubr.bf16.gmra.mxu0 %v740
    %v1092 = vpop.f32.mrf.mxu0
    %v1093 = vadd.f32 %v761, %v1092
    %v1094 = vpop.f32.mrf.mxu0
    %v1095 = vpop.f32.mrf.mxu0
    %v1096 = vadd.f32 %v761, %v1095
    %v1097 = vpop.f32.mrf.mxu0
    %1098 = vdwg.mxu0
    %v1099 = vmax.f32 %v845, 0.0
    %v1100 = vmax.f32 %v848, 0.0
    %v1101 = vmax.f32 %v853, 0.0
    %v1102 = vmax.f32 %v856, 0.0
    %v1103 = vmax.f32 %v861, 0.0
    %v1104 = vmax.f32 %v864, 0.0
    %v1105 = vmax.f32 %v869, 0.0
    %v1106 = vmax.f32 %v872, 0.0
    %v1107 = vmax.f32 %v877, 0.0
    %v1108 = vmax.f32 %v880, 0.0
    %v1109 = vmax.f32 %v885, 0.0
    %v1110 = vmax.f32 %v888, 0.0
    %v1111 = vmax.f32 %v893, 0.0
    %v1112 = vmax.f32 %v896, 0.0
    %v1113 = vmax.f32 %v901, 0.0
    %v1114 = vmax.f32 %v904, 0.0
    %v1115 = vmax.f32 %v909, 0.0
    %v1116 = vmax.f32 %v912, 0.0
    %v1117 = vmax.f32 %v917, 0.0
    %v1118 = vmax.f32 %v920, 0.0
    %v1119 = vmax.f32 %v925, 0.0
    %v1120 = vmax.f32 %v928, 0.0
    %v1121 = vmax.f32 %v933, 0.0
    %v1122 = vmax.f32 %v936, 0.0
    %v1123 = vmax.f32 %v941, 0.0
    %v1124 = vmax.f32 %v944, 0.0
    %v1125 = vmax.f32 %v949, 0.0
    %v1126 = vmax.f32 %v952, 0.0
    %v1127 = vmax.f32 %v957, 0.0
    %v1128 = vmax.f32 %v960, 0.0
    %v1129 = vmax.f32 %v965, 0.0
    %v1130 = vmax.f32 %v968, 0.0
    %v1131 = vmax.f32 %v973, 0.0
    %v1132 = vmax.f32 %v976, 0.0
    %v1133 = vmax.f32 %v981, 0.0
    %v1134 = vmax.f32 %v984, 0.0
    %v1135 = vmax.f32 %v989, 0.0
    %v1136 = vmax.f32 %v992, 0.0
    %v1137 = vmax.f32 %v997, 0.0
    %v1138 = vmax.f32 %v1000, 0.0
    %v1139 = vmax.f32 %v1005, 0.0
    %v1140 = vmax.f32 %v1008, 0.0
    %v1141 = vmax.f32 %v1013, 0.0
    %v1142 = vmax.f32 %v1016, 0.0
    %v1143 = vmax.f32 %v1021, 0.0
    %v1144 = vmax.f32 %v1024, 0.0
    %v1145 = vmax.f32 %v1029, 0.0
    %v1146 = vmax.f32 %v1032, 0.0
    %v1147 = vmax.f32 %v1037, 0.0
    %v1148 = vmax.f32 %v1040, 0.0
    %v1149 = vmax.f32 %v1045, 0.0
    %v1150 = vmax.f32 %v1048, 0.0
    %v1151 = vmax.f32 %v1053, 0.0
    %v1152 = vmax.f32 %v1056, 0.0
    %v1153 = vmax.f32 %v1061, 0.0
    %v1154 = vmax.f32 %v1064, 0.0
    %v1155 = vmax.f32 %v1069, 0.0
    %v1156 = vmax.f32 %v1072, 0.0
    %v1157 = vmax.f32 %v1077, 0.0
    %v1158 = vmax.f32 %v1080, 0.0
    %v1159 = vmax.f32 %v1085, 0.0
    %v1160 = vmax.f32 %v1088, 0.0
    %v1161 = vmax.f32 %v1093, 0.0
    %v1162 = vmax.f32 %v1096, 0.0
    %v1163 = vpack.c.bf16 %v1100, %v1099
    %v1164 = vpack.c.bf16 %v1102, %v1101
    %v1165 = vpack.c.bf16 %v1104, %v1103
    %v1166 = vpack.c.bf16 %v1106, %v1105
    %v1167 = vpack.c.bf16 %v1108, %v1107
    %v1168 = vpack.c.bf16 %v1110, %v1109
    %v1169 = vpack.c.bf16 %v1112, %v1111
    %v1170 = vpack.c.bf16 %v1114, %v1113
    %v1171 = vpack.c.bf16 %v1116, %v1115
    %v1172 = vpack.c.bf16 %v1118, %v1117
    %v1173 = vpack.c.bf16 %v1120, %v1119
    %v1174 = vpack.c.bf16 %v1122, %v1121
    %v1175 = vpack.c.bf16 %v1124, %v1123
    %v1176 = vpack.c.bf16 %v1126, %v1125
    %v1177 = vpack.c.bf16 %v1128, %v1127
    %v1178 = vpack.c.bf16 %v1130, %v1129
    %v1179 = vpack.c.bf16 %v1132, %v1131
    %v1180 = vpack.c.bf16 %v1134, %v1133
    %v1181 = vpack.c.bf16 %v1136, %v1135
    %v1182 = vpack.c.bf16 %v1138, %v1137
    %v1183 = vpack.c.bf16 %v1140, %v1139
    %v1184 = vpack.c.bf16 %v1142, %v1141
    %v1185 = vpack.c.bf16 %v1144, %v1143
    %v1186 = vpack.c.bf16 %v1146, %v1145
    %v1187 = vpack.c.bf16 %v1148, %v1147
    %v1188 = vpack.c.bf16 %v1150, %v1149
    %v1189 = vpack.c.bf16 %v1152, %v1151
    %v1190 = vpack.c.bf16 %v1154, %v1153
    %v1191 = vpack.c.bf16 %v1156, %v1155
    %v1192 = vpack.c.bf16 %v1158, %v1157
    %v1193 = vpack.c.bf16 %v1160, %v1159
    %v1194 = vpack.c.bf16 %v1162, %v1161
    %v1195 = vld [vmem:[%s4] sm:$0xf]
    %v1196 = vld [vmem:[%s4 + $0x4] sm:$0xf]
    %v1197 = vld [vmem:[%s4 + $0x8] sm:$0xf]
    %v1198 = vld [vmem:[%s4 + $0xc] sm:$0xf]
    %v1199 = vld [vmem:[%s4 + $0x10] sm:$0xf]
    %v1200 = vld [vmem:[%s4 + $0x14] sm:$0xf]
    %v1201 = vld [vmem:[%s4 + $0x18] sm:$0xf]
    %v1202 = vld [vmem:[%s4 + $0x1c] sm:$0xf]
    %v1203 = vld [vmem:[%s4 + $0x20] sm:$0xf]
    %v1204 = vld [vmem:[%s4 + $0x24] sm:$0xf]
    %v1205 = vld [vmem:[%s4 + $0x28] sm:$0xf]
    %v1206 = vld [vmem:[%s4 + $0x2c] sm:$0xf]
    %v1207 = vld [vmem:[%s4 + $0x30] sm:$0xf]
    %v1208 = vld [vmem:[%s4 + $0x34] sm:$0xf]
    %v1209 = vld [vmem:[%s4 + $0x38] sm:$0xf]
    %v1210 = vld [vmem:[%s4 + $0x3c] sm:$0xf]
    %v1211 = vld [vmem:[%s5 + $0x2] sm:$0x1]
    %v1212 = vlaneseq
    %v1213 = vshrl.u32 %v1212, 7
    %v1214 = vsub.s32 0, %v1213
    %v1215 = vrot.slane %v1211, %v1214
    %v1232 = vunpack.c.l.b16 %v1195
    %v1233 = vunpack.c.l.b16 %v1196
    %v1234 = vunpack.c.l.b16 %v1197
    %v1235 = vunpack.c.l.b16 %v1198
    %v1236 = vunpack.c.l.b16 %v1199
    %v1237 = vunpack.c.l.b16 %v1200
    %v1238 = vunpack.c.l.b16 %v1201
    %v1239 = vunpack.c.l.b16 %v1202
    %v1240 = vunpack.c.l.b16 %v1203
    %v1241 = vunpack.c.l.b16 %v1204
    %v1242 = vunpack.c.l.b16 %v1205
    %v1243 = vunpack.c.l.b16 %v1206
    %v1244 = vunpack.c.l.b16 %v1207
    %v1245 = vunpack.c.l.b16 %v1208
    %v1246 = vunpack.c.l.b16 %v1209
    %v1247 = vunpack.c.l.b16 %v1210
    %v1248 = vpack.c.b16 %v1233, %v1232
    %v1249 = vpack.c.b16 %v1235, %v1234
    %v1250 = vpack.c.b16 %v1237, %v1236
    %v1251 = vpack.c.b16 %v1239, %v1238
    %v1252 = vpack.c.b16 %v1241, %v1240
    %v1253 = vpack.c.b16 %v1243, %v1242
    %v1254 = vpack.c.b16 %v1245, %v1244
    %v1255 = vpack.c.b16 %v1247, %v1246
    %1264 = vmatprep.subr.bf16.mxu0 0
    %1265 = vmatpush1.bf16.msra.mxu0 %v1255
    %1266 = vmatprep.subr.bf16.mxu0 0
    %1267 = vmatpush1.bf16.msra.mxu0 %v1254
    %1268 = vmatprep.subr.bf16.mxu0 0
    %1269 = vmatpush1.bf16.msra.mxu0 %v1253
    %1270 = vmatprep.subr.bf16.mxu0 0
    %1271 = vmatpush1.bf16.msra.mxu0 %v1252
    %1272 = vmatprep.subr.bf16.mxu0 0
    %1273 = vmatpush1.bf16.msra.mxu0 %v1251
    %1274 = vmatprep.subr.bf16.mxu0 0
    %1275 = vmatpush1.bf16.msra.mxu0 %v1250
    %1276 = vmatprep.subr.bf16.mxu0 0
    %1277 = vmatpush1.bf16.msra.mxu0 %v1249
    %1278 = vmatprep.subr.bf16.mxu0 0
    %1279 = vmatpush1.bf16.msra.mxu0 %v1248
    %1280 = vmatprep.subr.bf16.mxu0 0
    %1281 = vmatpush2.bf16.msra.mxu0 0
    %1282 = vmatprep.subr.bf16.mxu0 0
    %1283 = vmatpush2.bf16.msra.mxu0 0
    %1284 = vmatprep.subr.bf16.mxu0 0
    %1285 = vmatpush2.bf16.msra.mxu0 0
    %1286 = vmatprep.subr.bf16.mxu0 0
    %1287 = vmatpush2.bf16.msra.mxu0 0
    %1288 = vmatprep.subr.bf16.mxu0 0
    %1289 = vmatpush2.bf16.msra.mxu0 0
    %1290 = vmatprep.subr.bf16.mxu0 0
    %1291 = vmatpush2.bf16.msra.mxu0 0
    %1292 = vmatprep.subr.bf16.mxu0 0
    %1293 = vmatpush2.bf16.msra.mxu0 0
    %1294 = vmatprep.subr.bf16.mxu0 0
    %1295 = vmatpush2.bf16.msra.mxu0 0
    %1296 = vmatprep.mubr.bf16.mxu0 0
    %1297 = vmatmul.mubr.bf16.gmra.mxu0 %v1163
    %v1298 = vpop.f32.mrf.mxu0
    %v1299 = vadd.f32 %v1215, %v1298
    %v1300 = vpop.f32.mrf.mxu0
    %v1301 = vpop.f32.mrf.mxu0
    %v1302 = vadd.f32 %v1215, %v1301
    %v1303 = vpop.f32.mrf.mxu0
    %1304 = vmatprep.mubr.bf16.mxu0 0
    %1305 = vmatmul.mubr.bf16.gmra.mxu0 %v1164
    %v1306 = vpop.f32.mrf.mxu0
    %v1307 = vadd.f32 %v1215, %v1306
    %v1308 = vpop.f32.mrf.mxu0
    %v1309 = vpop.f32.mrf.mxu0
    %v1310 = vadd.f32 %v1215, %v1309
    %v1311 = vpop.f32.mrf.mxu0
    %1312 = vmatprep.mubr.bf16.mxu0 0
    %1313 = vmatmul.mubr.bf16.gmra.mxu0 %v1165
    %v1314 = vpop.f32.mrf.mxu0
    %v1315 = vadd.f32 %v1215, %v1314
    %v1316 = vpop.f32.mrf.mxu0
    %v1317 = vpop.f32.mrf.mxu0
    %v1318 = vadd.f32 %v1215, %v1317
    %v1319 = vpop.f32.mrf.mxu0
    %1320 = vmatprep.mubr.bf16.mxu0 0
    %1321 = vmatmul.mubr.bf16.gmra.mxu0 %v1166
    %v1322 = vpop.f32.mrf.mxu0
    %v1323 = vadd.f32 %v1215, %v1322
    %v1324 = vpop.f32.mrf.mxu0
    %v1325 = vpop.f32.mrf.mxu0
    %v1326 = vadd.f32 %v1215, %v1325
    %v1327 = vpop.f32.mrf.mxu0
    %1328 = vmatprep.mubr.bf16.mxu0 0
    %1329 = vmatmul.mubr.bf16.gmra.mxu0 %v1167
    %v1330 = vpop.f32.mrf.mxu0
    %v1331 = vadd.f32 %v1215, %v1330
    %v1332 = vpop.f32.mrf.mxu0
    %v1333 = vpop.f32.mrf.mxu0
    %v1334 = vadd.f32 %v1215, %v1333
    %v1335 = vpop.f32.mrf.mxu0
    %1336 = vmatprep.mubr.bf16.mxu0 0
    %1337 = vmatmul.mubr.bf16.gmra.mxu0 %v1168
    %v1338 = vpop.f32.mrf.mxu0
    %v1339 = vadd.f32 %v1215, %v1338
    %v1340 = vpop.f32.mrf.mxu0
    %v1341 = vpop.f32.mrf.mxu0
    %v1342 = vadd.f32 %v1215, %v1341
    %v1343 = vpop.f32.mrf.mxu0
    %1344 = vmatprep.mubr.bf16.mxu0 0
    %1345 = vmatmul.mubr.bf16.gmra.mxu0 %v1169
    %v1346 = vpop.f32.mrf.mxu0
    %v1347 = vadd.f32 %v1215, %v1346
    %v1348 = vpop.f32.mrf.mxu0
    %v1349 = vpop.f32.mrf.mxu0
    %v1350 = vadd.f32 %v1215, %v1349
    %v1351 = vpop.f32.mrf.mxu0
    %1352 = vmatprep.mubr.bf16.mxu0 0
    %1353 = vmatmul.mubr.bf16.gmra.mxu0 %v1170
    %v1354 = vpop.f32.mrf.mxu0
    %v1355 = vadd.f32 %v1215, %v1354
    %v1356 = vpop.f32.mrf.mxu0
    %v1357 = vpop.f32.mrf.mxu0
    %v1358 = vadd.f32 %v1215, %v1357
    %v1359 = vpop.f32.mrf.mxu0
    %1360 = vmatprep.mubr.bf16.mxu0 0
    %1361 = vmatmul.mubr.bf16.gmra.mxu0 %v1171
    %v1362 = vpop.f32.mrf.mxu0
    %v1363 = vadd.f32 %v1215, %v1362
    %v1364 = vpop.f32.mrf.mxu0
    %v1365 = vpop.f32.mrf.mxu0
    %v1366 = vadd.f32 %v1215, %v1365
    %v1367 = vpop.f32.mrf.mxu0
    %1368 = vmatprep.mubr.bf16.mxu0 0
    %1369 = vmatmul.mubr.bf16.gmra.mxu0 %v1172
    %v1370 = vpop.f32.mrf.mxu0
    %v1371 = vadd.f32 %v1215, %v1370
    %v1372 = vpop.f32.mrf.mxu0
    %v1373 = vpop.f32.mrf.mxu0
    %v1374 = vadd.f32 %v1215, %v1373
    %v1375 = vpop.f32.mrf.mxu0
    %1376 = vmatprep.mubr.bf16.mxu0 0
    %1377 = vmatmul.mubr.bf16.gmra.mxu0 %v1173
    %v1378 = vpop.f32.mrf.mxu0
    %v1379 = vadd.f32 %v1215, %v1378
    %v1380 = vpop.f32.mrf.mxu0
    %v1381 = vpop.f32.mrf.mxu0
    %v1382 = vadd.f32 %v1215, %v1381
    %v1383 = vpop.f32.mrf.mxu0
    %1384 = vmatprep.mubr.bf16.mxu0 0
    %1385 = vmatmul.mubr.bf16.gmra.mxu0 %v1174
    %v1386 = vpop.f32.mrf.mxu0
    %v1387 = vadd.f32 %v1215, %v1386
    %v1388 = vpop.f32.mrf.mxu0
    %v1389 = vpop.f32.mrf.mxu0
    %v1390 = vadd.f32 %v1215, %v1389
    %v1391 = vpop.f32.mrf.mxu0
    %1392 = vmatprep.mubr.bf16.mxu0 0
    %1393 = vmatmul.mubr.bf16.gmra.mxu0 %v1175
    %v1394 = vpop.f32.mrf.mxu0
    %v1395 = vadd.f32 %v1215, %v1394
    %v1396 = vpop.f32.mrf.mxu0
    %v1397 = vpop.f32.mrf.mxu0
    %v1398 = vadd.f32 %v1215, %v1397
    %v1399 = vpop.f32.mrf.mxu0
    %1400 = vmatprep.mubr.bf16.mxu0 0
    %1401 = vmatmul.mubr.bf16.gmra.mxu0 %v1176
    %v1402 = vpop.f32.mrf.mxu0
    %v1403 = vadd.f32 %v1215, %v1402
    %v1404 = vpop.f32.mrf.mxu0
    %v1405 = vpop.f32.mrf.mxu0
    %v1406 = vadd.f32 %v1215, %v1405
    %v1407 = vpop.f32.mrf.mxu0
    %1408 = vmatprep.mubr.bf16.mxu0 0
    %1409 = vmatmul.mubr.bf16.gmra.mxu0 %v1177
    %v1410 = vpop.f32.mrf.mxu0
    %v1411 = vadd.f32 %v1215, %v1410
    %v1412 = vpop.f32.mrf.mxu0
    %v1413 = vpop.f32.mrf.mxu0
    %v1414 = vadd.f32 %v1215, %v1413
    %v1415 = vpop.f32.mrf.mxu0
    %1416 = vmatprep.mubr.bf16.mxu0 0
    %1417 = vmatmul.mubr.bf16.gmra.mxu0 %v1178
    %v1418 = vpop.f32.mrf.mxu0
    %v1419 = vadd.f32 %v1215, %v1418
    %v1420 = vpop.f32.mrf.mxu0
    %v1421 = vpop.f32.mrf.mxu0
    %v1422 = vadd.f32 %v1215, %v1421
    %v1423 = vpop.f32.mrf.mxu0
    %1424 = vmatprep.mubr.bf16.mxu0 0
    %1425 = vmatmul.mubr.bf16.gmra.mxu0 %v1179
    %v1426 = vpop.f32.mrf.mxu0
    %v1427 = vadd.f32 %v1215, %v1426
    %v1428 = vpop.f32.mrf.mxu0
    %v1429 = vpop.f32.mrf.mxu0
    %v1430 = vadd.f32 %v1215, %v1429
    %v1431 = vpop.f32.mrf.mxu0
    %1432 = vmatprep.mubr.bf16.mxu0 0
    %1433 = vmatmul.mubr.bf16.gmra.mxu0 %v1180
    %v1434 = vpop.f32.mrf.mxu0
    %v1435 = vadd.f32 %v1215, %v1434
    %v1436 = vpop.f32.mrf.mxu0
    %v1437 = vpop.f32.mrf.mxu0
    %v1438 = vadd.f32 %v1215, %v1437
    %v1439 = vpop.f32.mrf.mxu0
    %1440 = vmatprep.mubr.bf16.mxu0 0
    %1441 = vmatmul.mubr.bf16.gmra.mxu0 %v1181
    %v1442 = vpop.f32.mrf.mxu0
    %v1443 = vadd.f32 %v1215, %v1442
    %v1444 = vpop.f32.mrf.mxu0
    %v1445 = vpop.f32.mrf.mxu0
    %v1446 = vadd.f32 %v1215, %v1445
    %v1447 = vpop.f32.mrf.mxu0
    %1448 = vmatprep.mubr.bf16.mxu0 0
    %1449 = vmatmul.mubr.bf16.gmra.mxu0 %v1182
    %v1450 = vpop.f32.mrf.mxu0
    %v1451 = vadd.f32 %v1215, %v1450
    %v1452 = vpop.f32.mrf.mxu0
    %v1453 = vpop.f32.mrf.mxu0
    %v1454 = vadd.f32 %v1215, %v1453
    %v1455 = vpop.f32.mrf.mxu0
    %1456 = vmatprep.mubr.bf16.mxu0 0
    %1457 = vmatmul.mubr.bf16.gmra.mxu0 %v1183
    %v1458 = vpop.f32.mrf.mxu0
    %v1459 = vadd.f32 %v1215, %v1458
    %v1460 = vpop.f32.mrf.mxu0
    %v1461 = vpop.f32.mrf.mxu0
    %v1462 = vadd.f32 %v1215, %v1461
    %v1463 = vpop.f32.mrf.mxu0
    %1464 = vmatprep.mubr.bf16.mxu0 0
    %1465 = vmatmul.mubr.bf16.gmra.mxu0 %v1184
    %v1466 = vpop.f32.mrf.mxu0
    %v1467 = vadd.f32 %v1215, %v1466
    %v1468 = vpop.f32.mrf.mxu0
    %v1469 = vpop.f32.mrf.mxu0
    %v1470 = vadd.f32 %v1215, %v1469
    %v1471 = vpop.f32.mrf.mxu0
    %1472 = vmatprep.mubr.bf16.mxu0 0
    %1473 = vmatmul.mubr.bf16.gmra.mxu0 %v1185
    %v1474 = vpop.f32.mrf.mxu0
    %v1475 = vadd.f32 %v1215, %v1474
    %v1476 = vpop.f32.mrf.mxu0
    %v1477 = vpop.f32.mrf.mxu0
    %v1478 = vadd.f32 %v1215, %v1477
    %v1479 = vpop.f32.mrf.mxu0
    %1480 = vmatprep.mubr.bf16.mxu0 0
    %1481 = vmatmul.mubr.bf16.gmra.mxu0 %v1186
    %v1482 = vpop.f32.mrf.mxu0
    %v1483 = vadd.f32 %v1215, %v1482
    %v1484 = vpop.f32.mrf.mxu0
    %v1485 = vpop.f32.mrf.mxu0
    %v1486 = vadd.f32 %v1215, %v1485
    %v1487 = vpop.f32.mrf.mxu0
    %1488 = vmatprep.mubr.bf16.mxu0 0
    %1489 = vmatmul.mubr.bf16.gmra.mxu0 %v1187
    %v1490 = vpop.f32.mrf.mxu0
    %v1491 = vadd.f32 %v1215, %v1490
    %v1492 = vpop.f32.mrf.mxu0
    %v1493 = vpop.f32.mrf.mxu0
    %v1494 = vadd.f32 %v1215, %v1493
    %v1495 = vpop.f32.mrf.mxu0
    %1496 = vmatprep.mubr.bf16.mxu0 0
    %1497 = vmatmul.mubr.bf16.gmra.mxu0 %v1188
    %v1498 = vpop.f32.mrf.mxu0
    %v1499 = vadd.f32 %v1215, %v1498
    %v1500 = vpop.f32.mrf.mxu0
    %v1501 = vpop.f32.mrf.mxu0
    %v1502 = vadd.f32 %v1215, %v1501
    %v1503 = vpop.f32.mrf.mxu0
    %1504 = vmatprep.mubr.bf16.mxu0 0
    %1505 = vmatmul.mubr.bf16.gmra.mxu0 %v1189
    %v1506 = vpop.f32.mrf.mxu0
    %v1507 = vadd.f32 %v1215, %v1506
    %v1508 = vpop.f32.mrf.mxu0
    %v1509 = vpop.f32.mrf.mxu0
    %v1510 = vadd.f32 %v1215, %v1509
    %v1511 = vpop.f32.mrf.mxu0
    %1512 = vmatprep.mubr.bf16.mxu0 0
    %1513 = vmatmul.mubr.bf16.gmra.mxu0 %v1190
    %v1514 = vpop.f32.mrf.mxu0
    %v1515 = vadd.f32 %v1215, %v1514
    %v1516 = vpop.f32.mrf.mxu0
    %v1517 = vpop.f32.mrf.mxu0
    %v1518 = vadd.f32 %v1215, %v1517
    %v1519 = vpop.f32.mrf.mxu0
    %1520 = vmatprep.mubr.bf16.mxu0 0
    %1521 = vmatmul.mubr.bf16.gmra.mxu0 %v1191
    %v1522 = vpop.f32.mrf.mxu0
    %v1523 = vadd.f32 %v1215, %v1522
    %v1524 = vpop.f32.mrf.mxu0
    %v1525 = vpop.f32.mrf.mxu0
    %v1526 = vadd.f32 %v1215, %v1525
    %v1527 = vpop.f32.mrf.mxu0
    %1528 = vmatprep.mubr.bf16.mxu0 0
    %1529 = vmatmul.mubr.bf16.gmra.mxu0 %v1192
    %v1530 = vpop.f32.mrf.mxu0
    %v1531 = vadd.f32 %v1215, %v1530
    %v1532 = vpop.f32.mrf.mxu0
    %v1533 = vpop.f32.mrf.mxu0
    %v1534 = vadd.f32 %v1215, %v1533
    %v1535 = vpop.f32.mrf.mxu0
    %1536 = vmatprep.mubr.bf16.mxu0 0
    %1537 = vmatmul.mubr.bf16.gmra.mxu0 %v1193
    %v1538 = vpop.f32.mrf.mxu0
    %v1539 = vadd.f32 %v1215, %v1538
    %v1540 = vpop.f32.mrf.mxu0
    %v1541 = vpop.f32.mrf.mxu0
    %v1542 = vadd.f32 %v1215, %v1541
    %v1543 = vpop.f32.mrf.mxu0
    %1544 = vmatprep.mubr.bf16.mxu0 0
    %1545 = vmatmul.mubr.bf16.gmra.mxu0 %v1194
    %v1546 = vpop.f32.mrf.mxu0
    %v1547 = vadd.f32 %v1215, %v1546
    %v1548 = vpop.f32.mrf.mxu0
    %v1549 = vpop.f32.mrf.mxu0
    %v1550 = vadd.f32 %v1215, %v1549
    %v1551 = vpop.f32.mrf.mxu0
    %1552 = vdwg.mxu0
    %v1553 = vmax.f32 %v1299, 0.0
    %v1554 = vmax.f32 %v1302, 0.0
    %v1555 = vmax.f32 %v1307, 0.0
    %v1556 = vmax.f32 %v1310, 0.0
    %v1557 = vmax.f32 %v1315, 0.0
    %v1558 = vmax.f32 %v1318, 0.0
    %v1559 = vmax.f32 %v1323, 0.0
    %v1560 = vmax.f32 %v1326, 0.0
    %v1561 = vmax.f32 %v1331, 0.0
    %v1562 = vmax.f32 %v1334, 0.0
    %v1563 = vmax.f32 %v1339, 0.0
    %v1564 = vmax.f32 %v1342, 0.0
    %v1565 = vmax.f32 %v1347, 0.0
    %v1566 = vmax.f32 %v1350, 0.0
    %v1567 = vmax.f32 %v1355, 0.0
    %v1568 = vmax.f32 %v1358, 0.0
    %v1569 = vmax.f32 %v1363, 0.0
    %v1570 = vmax.f32 %v1366, 0.0
    %v1571 = vmax.f32 %v1371, 0.0
    %v1572 = vmax.f32 %v1374, 0.0
    %v1573 = vmax.f32 %v1379, 0.0
    %v1574 = vmax.f32 %v1382, 0.0
    %v1575 = vmax.f32 %v1387, 0.0
    %v1576 = vmax.f32 %v1390, 0.0
    %v1577 = vmax.f32 %v1395, 0.0
    %v1578 = vmax.f32 %v1398, 0.0
    %v1579 = vmax.f32 %v1403, 0.0
    %v1580 = vmax.f32 %v1406, 0.0
    %v1581 = vmax.f32 %v1411, 0.0
    %v1582 = vmax.f32 %v1414, 0.0
    %v1583 = vmax.f32 %v1419, 0.0
    %v1584 = vmax.f32 %v1422, 0.0
    %v1585 = vmax.f32 %v1427, 0.0
    %v1586 = vmax.f32 %v1430, 0.0
    %v1587 = vmax.f32 %v1435, 0.0
    %v1588 = vmax.f32 %v1438, 0.0
    %v1589 = vmax.f32 %v1443, 0.0
    %v1590 = vmax.f32 %v1446, 0.0
    %v1591 = vmax.f32 %v1451, 0.0
    %v1592 = vmax.f32 %v1454, 0.0
    %v1593 = vmax.f32 %v1459, 0.0
    %v1594 = vmax.f32 %v1462, 0.0
    %v1595 = vmax.f32 %v1467, 0.0
    %v1596 = vmax.f32 %v1470, 0.0
    %v1597 = vmax.f32 %v1475, 0.0
    %v1598 = vmax.f32 %v1478, 0.0
    %v1599 = vmax.f32 %v1483, 0.0
    %v1600 = vmax.f32 %v1486, 0.0
    %v1601 = vmax.f32 %v1491, 0.0
    %v1602 = vmax.f32 %v1494, 0.0
    %v1603 = vmax.f32 %v1499, 0.0
    %v1604 = vmax.f32 %v1502, 0.0
    %v1605 = vmax.f32 %v1507, 0.0
    %v1606 = vmax.f32 %v1510, 0.0
    %v1607 = vmax.f32 %v1515, 0.0
    %v1608 = vmax.f32 %v1518, 0.0
    %v1609 = vmax.f32 %v1523, 0.0
    %v1610 = vmax.f32 %v1526, 0.0
    %v1611 = vmax.f32 %v1531, 0.0
    %v1612 = vmax.f32 %v1534, 0.0
    %v1613 = vmax.f32 %v1539, 0.0
    %v1614 = vmax.f32 %v1542, 0.0
    %v1615 = vmax.f32 %v1547, 0.0
    %v1616 = vmax.f32 %v1550, 0.0
    %v1617 = vld [vmem:[%s1] sm:$0xff]
    %v1618 = vld [vmem:[%s1 + $0x8] sm:$0xff]
    %v1619 = vld [vmem:[%s1 + $0x10] sm:$0xff]
    %v1620 = vld [vmem:[%s1 + $0x18] sm:$0xff]
    %v1621 = vlaneseq
    %v1622 = vshrl.u32 %v1621, 7
    %v1623 = vsub.s32 0, %v1622
    %v1624 = vrot.slane %v1617, %v1623
    %1626 = vbcast.lane.b32.xlu0 %v1624, 256
    %v1627 = vpop.permute.xlu0 %1626
    %s1629 = sor.u32 256, 8
    %1630 = vbcast.lane.b32.xlu0 %v1624, %s1629
    %v1631 = vpop.permute.xlu0 %1630
    %v1632 = vlaneseq
    %v1633 = vshrl.u32 %v1632, 7
    %v1634 = vsub.s32 1, %v1633
    %v1635 = vrot.slane %v1617, %v1634
    %1637 = vbcast.lane.b32.xlu0 %v1635, 256
    %v1638 = vpop.permute.xlu0 %1637
    %s1640 = sor.u32 256, 8
    %1641 = vbcast.lane.b32.xlu0 %v1635, %s1640
    %v1642 = vpop.permute.xlu0 %1641
    %v1643 = vlaneseq
    %v1644 = vshrl.u32 %v1643, 7
    %v1645 = vsub.s32 2, %v1644
    %v1646 = vrot.slane %v1617, %v1645
    %1648 = vbcast.lane.b32.xlu0 %v1646, 256
    %v1649 = vpop.permute.xlu0 %1648
    %s1651 = sor.u32 256, 8
    %1652 = vbcast.lane.b32.xlu0 %v1646, %s1651
    %v1653 = vpop.permute.xlu0 %1652
    %v1654 = vlaneseq
    %v1655 = vshrl.u32 %v1654, 7
    %v1656 = vsub.s32 3, %v1655
    %v1657 = vrot.slane %v1617, %v1656
    %1659 = vbcast.lane.b32.xlu0 %v1657, 256
    %v1660 = vpop.permute.xlu0 %1659
    %s1662 = sor.u32 256, 8
    %1663 = vbcast.lane.b32.xlu0 %v1657, %s1662
    %v1664 = vpop.permute.xlu0 %1663
    %v1665 = vlaneseq
    %v1666 = vshrl.u32 %v1665, 7
    %v1667 = vsub.s32 4, %v1666
    %v1668 = vrot.slane %v1617, %v1667
    %1670 = vbcast.lane.b32.xlu0 %v1668, 256
    %v1671 = vpop.permute.xlu0 %1670
    %s1673 = sor.u32 256, 8
    %1674 = vbcast.lane.b32.xlu0 %v1668, %s1673
    %v1675 = vpop.permute.xlu0 %1674
    %v1676 = vlaneseq
    %v1677 = vshrl.u32 %v1676, 7
    %v1678 = vsub.s32 5, %v1677
    %v1679 = vrot.slane %v1617, %v1678
    %1681 = vbcast.lane.b32.xlu0 %v1679, 256
    %v1682 = vpop.permute.xlu0 %1681
    %s1684 = sor.u32 256, 8
    %1685 = vbcast.lane.b32.xlu0 %v1679, %s1684
    %v1686 = vpop.permute.xlu0 %1685
    %v1687 = vlaneseq
    %v1688 = vshrl.u32 %v1687, 7
    %v1689 = vsub.s32 6, %v1688
    %v1690 = vrot.slane %v1617, %v1689
    %1692 = vbcast.lane.b32.xlu0 %v1690, 256
    %v1693 = vpop.permute.xlu0 %1692
    %s1695 = sor.u32 256, 8
    %1696 = vbcast.lane.b32.xlu0 %v1690, %s1695
    %v1697 = vpop.permute.xlu0 %1696
    %v1698 = vlaneseq
    %v1699 = vshrl.u32 %v1698, 7
    %v1700 = vsub.s32 7, %v1699
    %v1701 = vrot.slane %v1617, %v1700
    %1703 = vbcast.lane.b32.xlu0 %v1701, 256
    %v1704 = vpop.permute.xlu0 %1703
    %s1706 = sor.u32 256, 8
    %1707 = vbcast.lane.b32.xlu0 %v1701, %s1706
    %v1708 = vpop.permute.xlu0 %1707
    %v1709 = vlaneseq
    %v1710 = vshrl.u32 %v1709, 7
    %v1711 = vsub.s32 0, %v1710
    %v1712 = vrot.slane %v1618, %v1711
    %1714 = vbcast.lane.b32.xlu0 %v1712, 256
    %v1715 = vpop.permute.xlu0 %1714
    %s1717 = sor.u32 256, 8
    %1718 = vbcast.lane.b32.xlu0 %v1712, %s1717
    %v1719 = vpop.permute.xlu0 %1718
    %v1720 = vlaneseq
    %v1721 = vshrl.u32 %v1720, 7
    %v1722 = vsub.s32 1, %v1721
    %v1723 = vrot.slane %v1618, %v1722
    %1725 = vbcast.lane.b32.xlu0 %v1723, 256
    %v1726 = vpop.permute.xlu0 %1725
    %s1728 = sor.u32 256, 8
    %1729 = vbcast.lane.b32.xlu0 %v1723, %s1728
    %v1730 = vpop.permute.xlu0 %1729
    %v1731 = vlaneseq
    %v1732 = vshrl.u32 %v1731, 7
    %v1733 = vsub.s32 2, %v1732
    %v1734 = vrot.slane %v1618, %v1733
    %1736 = vbcast.lane.b32.xlu0 %v1734, 256
    %v1737 = vpop.permute.xlu0 %1736
    %s1739 = sor.u32 256, 8
    %1740 = vbcast.lane.b32.xlu0 %v1734, %s1739
    %v1741 = vpop.permute.xlu0 %1740
    %v1742 = vlaneseq
    %v1743 = vshrl.u32 %v1742, 7
    %v1744 = vsub.s32 3, %v1743
    %v1745 = vrot.slane %v1618, %v1744
    %1747 = vbcast.lane.b32.xlu0 %v1745, 256
    %v1748 = vpop.permute.xlu0 %1747
    %s1750 = sor.u32 256, 8
    %1751 = vbcast.lane.b32.xlu0 %v1745, %s1750
    %v1752 = vpop.permute.xlu0 %1751
    %v1753 = vlaneseq
    %v1754 = vshrl.u32 %v1753, 7
    %v1755 = vsub.s32 4, %v1754
    %v1756 = vrot.slane %v1618, %v1755
    %1758 = vbcast.lane.b32.xlu0 %v1756, 256
    %v1759 = vpop.permute.xlu0 %1758
    %s1761 = sor.u32 256, 8
    %1762 = vbcast.lane.b32.xlu0 %v1756, %s1761
    %v1763 = vpop.permute.xlu0 %1762
    %v1764 = vlaneseq
    %v1765 = vshrl.u32 %v1764, 7
    %v1766 = vsub.s32 5, %v1765
    %v1767 = vrot.slane %v1618, %v1766
    %1769 = vbcast.lane.b32.xlu0 %v1767, 256
    %v1770 = vpop.permute.xlu0 %1769
    %s1772 = sor.u32 256, 8
    %1773 = vbcast.lane.b32.xlu0 %v1767, %s1772
    %v1774 = vpop.permute.xlu0 %1773
    %v1775 = vlaneseq
    %v1776 = vshrl.u32 %v1775, 7
    %v1777 = vsub.s32 6, %v1776
    %v1778 = vrot.slane %v1618, %v1777
    %1780 = vbcast.lane.b32.xlu0 %v1778, 256
    %v1781 = vpop.permute.xlu0 %1780
    %s1783 = sor.u32 256, 8
    %1784 = vbcast.lane.b32.xlu0 %v1778, %s1783
    %v1785 = vpop.permute.xlu0 %1784
    %v1786 = vlaneseq
    %v1787 = vshrl.u32 %v1786, 7
    %v1788 = vsub.s32 7, %v1787
    %v1789 = vrot.slane %v1618, %v1788
    %1791 = vbcast.lane.b32.xlu0 %v1789, 256
    %v1792 = vpop.permute.xlu0 %1791
    %s1794 = sor.u32 256, 8
    %1795 = vbcast.lane.b32.xlu0 %v1789, %s1794
    %v1796 = vpop.permute.xlu0 %1795
    %v1797 = vlaneseq
    %v1798 = vshrl.u32 %v1797, 7
    %v1799 = vsub.s32 0, %v1798
    %v1800 = vrot.slane %v1619, %v1799
    %1802 = vbcast.lane.b32.xlu0 %v1800, 256
    %v1803 = vpop.permute.xlu0 %1802
    %s1805 = sor.u32 256, 8
    %1806 = vbcast.lane.b32.xlu0 %v1800, %s1805
    %v1807 = vpop.permute.xlu0 %1806
    %v1808 = vlaneseq
    %v1809 = vshrl.u32 %v1808, 7
    %v1810 = vsub.s32 1, %v1809
    %v1811 = vrot.slane %v1619, %v1810
    %1813 = vbcast.lane.b32.xlu0 %v1811, 256
    %v1814 = vpop.permute.xlu0 %1813
    %s1816 = sor.u32 256, 8
    %1817 = vbcast.lane.b32.xlu0 %v1811, %s1816
    %v1818 = vpop.permute.xlu0 %1817
    %v1819 = vlaneseq
    %v1820 = vshrl.u32 %v1819, 7
    %v1821 = vsub.s32 2, %v1820
    %v1822 = vrot.slane %v1619, %v1821
    %1824 = vbcast.lane.b32.xlu0 %v1822, 256
    %v1825 = vpop.permute.xlu0 %1824
    %s1827 = sor.u32 256, 8
    %1828 = vbcast.lane.b32.xlu0 %v1822, %s1827
    %v1829 = vpop.permute.xlu0 %1828
    %v1830 = vlaneseq
    %v1831 = vshrl.u32 %v1830, 7
    %v1832 = vsub.s32 3, %v1831
    %v1833 = vrot.slane %v1619, %v1832
    %1835 = vbcast.lane.b32.xlu0 %v1833, 256
    %v1836 = vpop.permute.xlu0 %1835
    %s1838 = sor.u32 256, 8
    %1839 = vbcast.lane.b32.xlu0 %v1833, %s1838
    %v1840 = vpop.permute.xlu0 %1839
    %v1841 = vlaneseq
    %v1842 = vshrl.u32 %v1841, 7
    %v1843 = vsub.s32 4, %v1842
    %v1844 = vrot.slane %v1619, %v1843
    %1846 = vbcast.lane.b32.xlu0 %v1844, 256
    %v1847 = vpop.permute.xlu0 %1846
    %s1849 = sor.u32 256, 8
    %1850 = vbcast.lane.b32.xlu0 %v1844, %s1849
    %v1851 = vpop.permute.xlu0 %1850
    %v1852 = vlaneseq
    %v1853 = vshrl.u32 %v1852, 7
    %v1854 = vsub.s32 5, %v1853
    %v1855 = vrot.slane %v1619, %v1854
    %1857 = vbcast.lane.b32.xlu0 %v1855, 256
    %v1858 = vpop.permute.xlu0 %1857
    %s1860 = sor.u32 256, 8
    %1861 = vbcast.lane.b32.xlu0 %v1855, %s1860
    %v1862 = vpop.permute.xlu0 %1861
    %v1863 = vlaneseq
    %v1864 = vshrl.u32 %v1863, 7
    %v1865 = vsub.s32 6, %v1864
    %v1866 = vrot.slane %v1619, %v1865
    %1868 = vbcast.lane.b32.xlu0 %v1866, 256
    %v1869 = vpop.permute.xlu0 %1868
    %s1871 = sor.u32 256, 8
    %1872 = vbcast.lane.b32.xlu0 %v1866, %s1871
    %v1873 = vpop.permute.xlu0 %1872
    %v1874 = vlaneseq
    %v1875 = vshrl.u32 %v1874, 7
    %v1876 = vsub.s32 7, %v1875
    %v1877 = vrot.slane %v1619, %v1876
    %1879 = vbcast.lane.b32.xlu0 %v1877, 256
    %v1880 = vpop.permute.xlu0 %1879
    %s1882 = sor.u32 256, 8
    %1883 = vbcast.lane.b32.xlu0 %v1877, %s1882
    %v1884 = vpop.permute.xlu0 %1883
    %v1885 = vlaneseq
    %v1886 = vshrl.u32 %v1885, 7
    %v1887 = vsub.s32 0, %v1886
    %v1888 = vrot.slane %v1620, %v1887
    %1890 = vbcast.lane.b32.xlu0 %v1888, 256
    %v1891 = vpop.permute.xlu0 %1890
    %s1893 = sor.u32 256, 8
    %1894 = vbcast.lane.b32.xlu0 %v1888, %s1893
    %v1895 = vpop.permute.xlu0 %1894
    %v1896 = vlaneseq
    %v1897 = vshrl.u32 %v1896, 7
    %v1898 = vsub.s32 1, %v1897
    %v1899 = vrot.slane %v1620, %v1898
    %1901 = vbcast.lane.b32.xlu0 %v1899, 256
    %v1902 = vpop.permute.xlu0 %1901
    %s1904 = sor.u32 256, 8
    %1905 = vbcast.lane.b32.xlu0 %v1899, %s1904
    %v1906 = vpop.permute.xlu0 %1905
    %v1907 = vlaneseq
    %v1908 = vshrl.u32 %v1907, 7
    %v1909 = vsub.s32 2, %v1908
    %v1910 = vrot.slane %v1620, %v1909
    %1912 = vbcast.lane.b32.xlu0 %v1910, 256
    %v1913 = vpop.permute.xlu0 %1912
    %s1915 = sor.u32 256, 8
    %1916 = vbcast.lane.b32.xlu0 %v1910, %s1915
    %v1917 = vpop.permute.xlu0 %1916
    %v1918 = vlaneseq
    %v1919 = vshrl.u32 %v1918, 7
    %v1920 = vsub.s32 3, %v1919
    %v1921 = vrot.slane %v1620, %v1920
    %1923 = vbcast.lane.b32.xlu0 %v1921, 256
    %v1924 = vpop.permute.xlu0 %1923
    %s1926 = sor.u32 256, 8
    %1927 = vbcast.lane.b32.xlu0 %v1921, %s1926
    %v1928 = vpop.permute.xlu0 %1927
    %v1929 = vlaneseq
    %v1930 = vshrl.u32 %v1929, 7
    %v1931 = vsub.s32 4, %v1930
    %v1932 = vrot.slane %v1620, %v1931
    %1934 = vbcast.lane.b32.xlu0 %v1932, 256
    %v1935 = vpop.permute.xlu0 %1934
    %s1937 = sor.u32 256, 8
    %1938 = vbcast.lane.b32.xlu0 %v1932, %s1937
    %v1939 = vpop.permute.xlu0 %1938
    %v1940 = vlaneseq
    %v1941 = vshrl.u32 %v1940, 7
    %v1942 = vsub.s32 5, %v1941
    %v1943 = vrot.slane %v1620, %v1942
    %1945 = vbcast.lane.b32.xlu0 %v1943, 256
    %v1946 = vpop.permute.xlu0 %1945
    %s1948 = sor.u32 256, 8
    %1949 = vbcast.lane.b32.xlu0 %v1943, %s1948
    %v1950 = vpop.permute.xlu0 %1949
    %v1951 = vlaneseq
    %v1952 = vshrl.u32 %v1951, 7
    %v1953 = vsub.s32 6, %v1952
    %v1954 = vrot.slane %v1620, %v1953
    %1956 = vbcast.lane.b32.xlu0 %v1954, 256
    %v1957 = vpop.permute.xlu0 %1956
    %s1959 = sor.u32 256, 8
    %1960 = vbcast.lane.b32.xlu0 %v1954, %s1959
    %v1961 = vpop.permute.xlu0 %1960
    %v1962 = vlaneseq
    %v1963 = vshrl.u32 %v1962, 7
    %v1964 = vsub.s32 7, %v1963
    %v1965 = vrot.slane %v1620, %v1964
    %1967 = vbcast.lane.b32.xlu0 %v1965, 256
    %v1968 = vpop.permute.xlu0 %1967
    %s1970 = sor.u32 256, 8
    %1971 = vbcast.lane.b32.xlu0 %v1965, %s1970
    %v1972 = vpop.permute.xlu0 %1971
    %v1973 = vadd.f32 %v1553, %v1627
    %v1974 = vadd.f32 %v1554, %v1631
    %v1975 = vadd.f32 %v1555, %v1638
    %v1976 = vadd.f32 %v1556, %v1642
    %v1977 = vadd.f32 %v1557, %v1649
    %v1978 = vadd.f32 %v1558, %v1653
    %v1979 = vadd.f32 %v1559, %v1660
    %v1980 = vadd.f32 %v1560, %v1664
    %v1981 = vadd.f32 %v1561, %v1671
    %v1982 = vadd.f32 %v1562, %v1675
    %v1983 = vadd.f32 %v1563, %v1682
    %v1984 = vadd.f32 %v1564, %v1686
    %v1985 = vadd.f32 %v1565, %v1693
    %v1986 = vadd.f32 %v1566, %v1697
    %v1987 = vadd.f32 %v1567, %v1704
    %v1988 = vadd.f32 %v1568, %v1708
    %v1989 = vadd.f32 %v1569, %v1715
    %v1990 = vadd.f32 %v1570, %v1719
    %v1991 = vadd.f32 %v1571, %v1726
    %v1992 = vadd.f32 %v1572, %v1730
    %v1993 = vadd.f32 %v1573, %v1737
    %v1994 = vadd.f32 %v1574, %v1741
    %v1995 = vadd.f32 %v1575, %v1748
    %v1996 = vadd.f32 %v1576, %v1752
    %v1997 = vadd.f32 %v1577, %v1759
    %v1998 = vadd.f32 %v1578, %v1763
    %v1999 = vadd.f32 %v1579, %v1770
    %v2000 = vadd.f32 %v1580, %v1774
    %v2001 = vadd.f32 %v1581, %v1781
    %v2002 = vadd.f32 %v1582, %v1785
    %v2003 = vadd.f32 %v1583, %v1792
    %v2004 = vadd.f32 %v1584, %v1796
    %v2005 = vadd.f32 %v1585, %v1803
    %v2006 = vadd.f32 %v1586, %v1807
    %v2007 = vadd.f32 %v1587, %v1814
    %v2008 = vadd.f32 %v1588, %v1818
    %v2009 = vadd.f32 %v1589, %v1825
    %v2010 = vadd.f32 %v1590, %v1829
    %v2011 = vadd.f32 %v1591, %v1836
    %v2012 = vadd.f32 %v1592, %v1840
    %v2013 = vadd.f32 %v1593, %v1847
    %v2014 = vadd.f32 %v1594, %v1851
    %v2015 = vadd.f32 %v1595, %v1858
    %v2016 = vadd.f32 %v1596, %v1862
    %v2017 = vadd.f32 %v1597, %v1869
    %v2018 = vadd.f32 %v1598, %v1873
    %v2019 = vadd.f32 %v1599, %v1880
    %v2020 = vadd.f32 %v1600, %v1884
    %v2021 = vadd.f32 %v1601, %v1891
    %v2022 = vadd.f32 %v1602, %v1895
    %v2023 = vadd.f32 %v1603, %v1902
    %v2024 = vadd.f32 %v1604, %v1906
    %v2025 = vadd.f32 %v1605, %v1913
    %v2026 = vadd.f32 %v1606, %v1917
    %v2027 = vadd.f32 %v1607, %v1924
    %v2028 = vadd.f32 %v1608, %v1928
    %v2029 = vadd.f32 %v1609, %v1935
    %v2030 = vadd.f32 %v1610, %v1939
    %v2031 = vadd.f32 %v1611, %v1946
    %v2032 = vadd.f32 %v1612, %v1950
    %v2033 = vadd.f32 %v1613, %v1957
    %v2034 = vadd.f32 %v1614, %v1961
    %v2035 = vadd.f32 %v1615, %v1968
    %v2036 = vadd.f32 %v1616, %v1972
    %v2037 = vmax.f32 %v1973, %v1974
    %v2038 = vrot.slane %v2037, 4
    %v2039 = vmax.f32 %v2037, %v2038
    %v2040 = vrot.slane %v2039, 2
    %v2041 = vmax.f32 %v2039, %v2040
    %v2042 = vrot.slane %v2041, 1
    %v2043 = vmax.f32 %v2041, %v2042
    %v2044 = vmax.f32 %v1975, %v1976
    %v2045 = vrot.slane %v2044, 4
    %v2046 = vmax.f32 %v2044, %v2045
    %v2047 = vrot.slane %v2046, 2
    %v2048 = vmax.f32 %v2046, %v2047
    %v2049 = vrot.slane %v2048, 1
    %v2050 = vmax.f32 %v2048, %v2049
    %v2051 = vmax.f32 %v1977, %v1978
    %v2052 = vrot.slane %v2051, 4
    %v2053 = vmax.f32 %v2051, %v2052
    %v2054 = vrot.slane %v2053, 2
    %v2055 = vmax.f32 %v2053, %v2054
    %v2056 = vrot.slane %v2055, 1
    %v2057 = vmax.f32 %v2055, %v2056
    %v2058 = vmax.f32 %v1979, %v1980
    %v2059 = vrot.slane %v2058, 4
    %v2060 = vmax.f32 %v2058, %v2059
    %v2061 = vrot.slane %v2060, 2
    %v2062 = vmax.f32 %v2060, %v2061
    %v2063 = vrot.slane %v2062, 1
    %v2064 = vmax.f32 %v2062, %v2063
    %v2065 = vmax.f32 %v1981, %v1982
    %v2066 = vrot.slane %v2065, 4
    %v2067 = vmax.f32 %v2065, %v2066
    %v2068 = vrot.slane %v2067, 2
    %v2069 = vmax.f32 %v2067, %v2068
    %v2070 = vrot.slane %v2069, 1
    %v2071 = vmax.f32 %v2069, %v2070
    %v2072 = vmax.f32 %v1983, %v1984
    %v2073 = vrot.slane %v2072, 4
    %v2074 = vmax.f32 %v2072, %v2073
    %v2075 = vrot.slane %v2074, 2
    %v2076 = vmax.f32 %v2074, %v2075
    %v2077 = vrot.slane %v2076, 1
    %v2078 = vmax.f32 %v2076, %v2077
    %v2079 = vmax.f32 %v1985, %v1986
    %v2080 = vrot.slane %v2079, 4
    %v2081 = vmax.f32 %v2079, %v2080
    %v2082 = vrot.slane %v2081, 2
    %v2083 = vmax.f32 %v2081, %v2082
    %v2084 = vrot.slane %v2083, 1
    %v2085 = vmax.f32 %v2083, %v2084
    %v2086 = vmax.f32 %v1987, %v1988
    %v2087 = vrot.slane %v2086, 4
    %v2088 = vmax.f32 %v2086, %v2087
    %v2089 = vrot.slane %v2088, 2
    %v2090 = vmax.f32 %v2088, %v2089
    %v2091 = vrot.slane %v2090, 1
    %v2092 = vmax.f32 %v2090, %v2091
    %v2093 = vmax.f32 %v1989, %v1990
    %v2094 = vrot.slane %v2093, 4
    %v2095 = vmax.f32 %v2093, %v2094
    %v2096 = vrot.slane %v2095, 2
    %v2097 = vmax.f32 %v2095, %v2096
    %v2098 = vrot.slane %v2097, 1
    %v2099 = vmax.f32 %v2097, %v2098
    %v2100 = vmax.f32 %v1991, %v1992
    %v2101 = vrot.slane %v2100, 4
    %v2102 = vmax.f32 %v2100, %v2101
    %v2103 = vrot.slane %v2102, 2
    %v2104 = vmax.f32 %v2102, %v2103
    %v2105 = vrot.slane %v2104, 1
    %v2106 = vmax.f32 %v2104, %v2105
    %v2107 = vmax.f32 %v1993, %v1994
    %v2108 = vrot.slane %v2107, 4
    %v2109 = vmax.f32 %v2107, %v2108
    %v2110 = vrot.slane %v2109, 2
    %v2111 = vmax.f32 %v2109, %v2110
    %v2112 = vrot.slane %v2111, 1
    %v2113 = vmax.f32 %v2111, %v2112
    %v2114 = vmax.f32 %v1995, %v1996
    %v2115 = vrot.slane %v2114, 4
    %v2116 = vmax.f32 %v2114, %v2115
    %v2117 = vrot.slane %v2116, 2
    %v2118 = vmax.f32 %v2116, %v2117
    %v2119 = vrot.slane %v2118, 1
    %v2120 = vmax.f32 %v2118, %v2119
    %v2121 = vmax.f32 %v1997, %v1998
    %v2122 = vrot.slane %v2121, 4
    %v2123 = vmax.f32 %v2121, %v2122
    %v2124 = vrot.slane %v2123, 2
    %v2125 = vmax.f32 %v2123, %v2124
    %v2126 = vrot.slane %v2125, 1
    %v2127 = vmax.f32 %v2125, %v2126
    %v2128 = vmax.f32 %v1999, %v2000
    %v2129 = vrot.slane %v2128, 4
    %v2130 = vmax.f32 %v2128, %v2129
    %v2131 = vrot.slane %v2130, 2
    %v2132 = vmax.f32 %v2130, %v2131
    %v2133 = vrot.slane %v2132, 1
    %v2134 = vmax.f32 %v2132, %v2133
    %v2135 = vmax.f32 %v2001, %v2002
    %v2136 = vrot.slane %v2135, 4
    %v2137 = vmax.f32 %v2135, %v2136
    %v2138 = vrot.slane %v2137, 2
    %v2139 = vmax.f32 %v2137, %v2138
    %v2140 = vrot.slane %v2139, 1
    %v2141 = vmax.f32 %v2139, %v2140
    %v2142 = vmax.f32 %v2003, %v2004
    %v2143 = vrot.slane %v2142, 4
    %v2144 = vmax.f32 %v2142, %v2143
    %v2145 = vrot.slane %v2144, 2
    %v2146 = vmax.f32 %v2144, %v2145
    %v2147 = vrot.slane %v2146, 1
    %v2148 = vmax.f32 %v2146, %v2147
    %v2149 = vmax.f32 %v2005, %v2006
    %v2150 = vrot.slane %v2149, 4
    %v2151 = vmax.f32 %v2149, %v2150
    %v2152 = vrot.slane %v2151, 2
    %v2153 = vmax.f32 %v2151, %v2152
    %v2154 = vrot.slane %v2153, 1
    %v2155 = vmax.f32 %v2153, %v2154
    %v2156 = vmax.f32 %v2007, %v2008
    %v2157 = vrot.slane %v2156, 4
    %v2158 = vmax.f32 %v2156, %v2157
    %v2159 = vrot.slane %v2158, 2
    %v2160 = vmax.f32 %v2158, %v2159
    %v2161 = vrot.slane %v2160, 1
    %v2162 = vmax.f32 %v2160, %v2161
    %v2163 = vmax.f32 %v2009, %v2010
    %v2164 = vrot.slane %v2163, 4
    %v2165 = vmax.f32 %v2163, %v2164
    %v2166 = vrot.slane %v2165, 2
    %v2167 = vmax.f32 %v2165, %v2166
    %v2168 = vrot.slane %v2167, 1
    %v2169 = vmax.f32 %v2167, %v2168
    %v2170 = vmax.f32 %v2011, %v2012
    %v2171 = vrot.slane %v2170, 4
    %v2172 = vmax.f32 %v2170, %v2171
    %v2173 = vrot.slane %v2172, 2
    %v2174 = vmax.f32 %v2172, %v2173
    %v2175 = vrot.slane %v2174, 1
    %v2176 = vmax.f32 %v2174, %v2175
    %v2177 = vmax.f32 %v2013, %v2014
    %v2178 = vrot.slane %v2177, 4
    %v2179 = vmax.f32 %v2177, %v2178
    %v2180 = vrot.slane %v2179, 2
    %v2181 = vmax.f32 %v2179, %v2180
    %v2182 = vrot.slane %v2181, 1
    %v2183 = vmax.f32 %v2181, %v2182
    %v2184 = vmax.f32 %v2015, %v2016
    %v2185 = vrot.slane %v2184, 4
    %v2186 = vmax.f32 %v2184, %v2185
    %v2187 = vrot.slane %v2186, 2
    %v2188 = vmax.f32 %v2186, %v2187
    %v2189 = vrot.slane %v2188, 1
    %v2190 = vmax.f32 %v2188, %v2189
    %v2191 = vmax.f32 %v2017, %v2018
    %v2192 = vrot.slane %v2191, 4
    %v2193 = vmax.f32 %v2191, %v2192
    %v2194 = vrot.slane %v2193, 2
    %v2195 = vmax.f32 %v2193, %v2194
    %v2196 = vrot.slane %v2195, 1
    %v2197 = vmax.f32 %v2195, %v2196
    %v2198 = vmax.f32 %v2019, %v2020
    %v2199 = vrot.slane %v2198, 4
    %v2200 = vmax.f32 %v2198, %v2199
    %v2201 = vrot.slane %v2200, 2
    %v2202 = vmax.f32 %v2200, %v2201
    %v2203 = vrot.slane %v2202, 1
    %v2204 = vmax.f32 %v2202, %v2203
    %v2205 = vmax.f32 %v2021, %v2022
    %v2206 = vrot.slane %v2205, 4
    %v2207 = vmax.f32 %v2205, %v2206
    %v2208 = vrot.slane %v2207, 2
    %v2209 = vmax.f32 %v2207, %v2208
    %v2210 = vrot.slane %v2209, 1
    %v2211 = vmax.f32 %v2209, %v2210
    %v2212 = vmax.f32 %v2023, %v2024
    %v2213 = vrot.slane %v2212, 4
    %v2214 = vmax.f32 %v2212, %v2213
    %v2215 = vrot.slane %v2214, 2
    %v2216 = vmax.f32 %v2214, %v2215
    %v2217 = vrot.slane %v2216, 1
    %v2218 = vmax.f32 %v2216, %v2217
    %v2219 = vmax.f32 %v2025, %v2026
    %v2220 = vrot.slane %v2219, 4
    %v2221 = vmax.f32 %v2219, %v2220
    %v2222 = vrot.slane %v2221, 2
    %v2223 = vmax.f32 %v2221, %v2222
    %v2224 = vrot.slane %v2223, 1
    %v2225 = vmax.f32 %v2223, %v2224
    %v2226 = vmax.f32 %v2027, %v2028
    %v2227 = vrot.slane %v2226, 4
    %v2228 = vmax.f32 %v2226, %v2227
    %v2229 = vrot.slane %v2228, 2
    %v2230 = vmax.f32 %v2228, %v2229
    %v2231 = vrot.slane %v2230, 1
    %v2232 = vmax.f32 %v2230, %v2231
    %v2233 = vmax.f32 %v2029, %v2030
    %v2234 = vrot.slane %v2233, 4
    %v2235 = vmax.f32 %v2233, %v2234
    %v2236 = vrot.slane %v2235, 2
    %v2237 = vmax.f32 %v2235, %v2236
    %v2238 = vrot.slane %v2237, 1
    %v2239 = vmax.f32 %v2237, %v2238
    %v2240 = vmax.f32 %v2031, %v2032
    %v2241 = vrot.slane %v2240, 4
    %v2242 = vmax.f32 %v2240, %v2241
    %v2243 = vrot.slane %v2242, 2
    %v2244 = vmax.f32 %v2242, %v2243
    %v2245 = vrot.slane %v2244, 1
    %v2246 = vmax.f32 %v2244, %v2245
    %v2247 = vmax.f32 %v2033, %v2034
    %v2248 = vrot.slane %v2247, 4
    %v2249 = vmax.f32 %v2247, %v2248
    %v2250 = vrot.slane %v2249, 2
    %v2251 = vmax.f32 %v2249, %v2250
    %v2252 = vrot.slane %v2251, 1
    %v2253 = vmax.f32 %v2251, %v2252
    %v2254 = vmax.f32 %v2035, %v2036
    %v2255 = vrot.slane %v2254, 4
    %v2256 = vmax.f32 %v2254, %v2255
    %v2257 = vrot.slane %v2256, 2
    %v2258 = vmax.f32 %v2256, %v2257
    %v2259 = vrot.slane %v2258, 1
    %v2260 = vmax.f32 %v2258, %v2259
    %v2261 = vmax.f32 %v2043, -3e+38
    %v2262 = vmax.f32 %v2050, -3e+38
    %v2263 = vmax.f32 %v2057, -3e+38
    %v2264 = vmax.f32 %v2064, -3e+38
    %v2265 = vmax.f32 %v2071, -3e+38
    %v2266 = vmax.f32 %v2078, -3e+38
    %v2267 = vmax.f32 %v2085, -3e+38
    %v2268 = vmax.f32 %v2092, -3e+38
    %v2269 = vmax.f32 %v2099, -3e+38
    %v2270 = vmax.f32 %v2106, -3e+38
    %v2271 = vmax.f32 %v2113, -3e+38
    %v2272 = vmax.f32 %v2120, -3e+38
    %v2273 = vmax.f32 %v2127, -3e+38
    %v2274 = vmax.f32 %v2134, -3e+38
    %v2275 = vmax.f32 %v2141, -3e+38
    %v2276 = vmax.f32 %v2148, -3e+38
    %v2277 = vmax.f32 %v2155, -3e+38
    %v2278 = vmax.f32 %v2162, -3e+38
    %v2279 = vmax.f32 %v2169, -3e+38
    %v2280 = vmax.f32 %v2176, -3e+38
    %v2281 = vmax.f32 %v2183, -3e+38
    %v2282 = vmax.f32 %v2190, -3e+38
    %v2283 = vmax.f32 %v2197, -3e+38
    %v2284 = vmax.f32 %v2204, -3e+38
    %v2285 = vmax.f32 %v2211, -3e+38
    %v2286 = vmax.f32 %v2218, -3e+38
    %v2287 = vmax.f32 %v2225, -3e+38
    %v2288 = vmax.f32 %v2232, -3e+38
    %v2289 = vmax.f32 %v2239, -3e+38
    %v2290 = vmax.f32 %v2246, -3e+38
    %v2291 = vmax.f32 %v2253, -3e+38
    %v2292 = vmax.f32 %v2260, -3e+38
    %v2293 = vld [vmem:[%s0 + $0x8] sm:$0xf]
    %v2294 = vld [vmem:[%s0 + $0xc] sm:$0xf]
    %v2295 = vld [vmem:[%s0 + $0x18] sm:$0xf]
    %v2296 = vld [vmem:[%s0 + $0x1c] sm:$0xf]
    %v2297 = vld [vmem:[%s0 + $0x28] sm:$0xf]
    %v2298 = vld [vmem:[%s0 + $0x2c] sm:$0xf]
    %v2299 = vld [vmem:[%s0 + $0x38] sm:$0xf]
    %v2300 = vld [vmem:[%s0 + $0x3c] sm:$0xf]
    %v2301 = vld [vmem:[%s0 + $0x48] sm:$0xf]
    %v2302 = vld [vmem:[%s0 + $0x4c] sm:$0xf]
    %v2303 = vld [vmem:[%s0 + $0x58] sm:$0xf]
    %v2304 = vld [vmem:[%s0 + $0x5c] sm:$0xf]
    %v2305 = vld [vmem:[%s0 + $0x68] sm:$0xf]
    %v2306 = vld [vmem:[%s0 + $0x6c] sm:$0xf]
    %v2307 = vld [vmem:[%s0 + $0x78] sm:$0xf]
    %v2308 = vld [vmem:[%s0 + $0x7c] sm:$0xf]
    %v2309 = vld [vmem:[%s0 + $0x88] sm:$0xf]
    %v2310 = vld [vmem:[%s0 + $0x8c] sm:$0xf]
    %v2311 = vld [vmem:[%s0 + $0x98] sm:$0xf]
    %v2312 = vld [vmem:[%s0 + $0x9c] sm:$0xf]
    %v2313 = vld [vmem:[%s0 + $0xa8] sm:$0xf]
    %v2314 = vld [vmem:[%s0 + $0xac] sm:$0xf]
    %v2315 = vld [vmem:[%s0 + $0xb8] sm:$0xf]
    %v2316 = vld [vmem:[%s0 + $0xbc] sm:$0xf]
    %v2317 = vld [vmem:[%s0 + $0xc8] sm:$0xf]
    %v2318 = vld [vmem:[%s0 + $0xcc] sm:$0xf]
    %v2319 = vld [vmem:[%s0 + $0xd8] sm:$0xf]
    %v2320 = vld [vmem:[%s0 + $0xdc] sm:$0xf]
    %v2321 = vld [vmem:[%s0 + $0xe8] sm:$0xf]
    %v2322 = vld [vmem:[%s0 + $0xec] sm:$0xf]
    %v2323 = vld [vmem:[%s0 + $0xf8] sm:$0xf]
    %v2324 = vld [vmem:[%s0 + $0xfc] sm:$0xf]
    %v2325 = vld [vmem:[%s0 + $0x108] sm:$0xf]
    %v2326 = vld [vmem:[%s0 + $0x10c] sm:$0xf]
    %v2327 = vld [vmem:[%s0 + $0x118] sm:$0xf]
    %v2328 = vld [vmem:[%s0 + $0x11c] sm:$0xf]
    %v2329 = vld [vmem:[%s0 + $0x128] sm:$0xf]
    %v2330 = vld [vmem:[%s0 + $0x12c] sm:$0xf]
    %v2331 = vld [vmem:[%s0 + $0x138] sm:$0xf]
    %v2332 = vld [vmem:[%s0 + $0x13c] sm:$0xf]
    %v2333 = vld [vmem:[%s0 + $0x148] sm:$0xf]
    %v2334 = vld [vmem:[%s0 + $0x14c] sm:$0xf]
    %v2335 = vld [vmem:[%s0 + $0x158] sm:$0xf]
    %v2336 = vld [vmem:[%s0 + $0x15c] sm:$0xf]
    %v2337 = vld [vmem:[%s0 + $0x168] sm:$0xf]
    %v2338 = vld [vmem:[%s0 + $0x16c] sm:$0xf]
    %v2339 = vld [vmem:[%s0 + $0x178] sm:$0xf]
    %v2340 = vld [vmem:[%s0 + $0x17c] sm:$0xf]
    %v2341 = vld [vmem:[%s0 + $0x188] sm:$0xf]
    %v2342 = vld [vmem:[%s0 + $0x18c] sm:$0xf]
    %v2343 = vld [vmem:[%s0 + $0x198] sm:$0xf]
    %v2344 = vld [vmem:[%s0 + $0x19c] sm:$0xf]
    %v2345 = vld [vmem:[%s0 + $0x1a8] sm:$0xf]
    %v2346 = vld [vmem:[%s0 + $0x1ac] sm:$0xf]
    %v2347 = vld [vmem:[%s0 + $0x1b8] sm:$0xf]
    %v2348 = vld [vmem:[%s0 + $0x1bc] sm:$0xf]
    %v2349 = vld [vmem:[%s0 + $0x1c8] sm:$0xf]
    %v2350 = vld [vmem:[%s0 + $0x1cc] sm:$0xf]
    %v2351 = vld [vmem:[%s0 + $0x1d8] sm:$0xf]
    %v2352 = vld [vmem:[%s0 + $0x1dc] sm:$0xf]
    %v2353 = vld [vmem:[%s0 + $0x1e8] sm:$0xf]
    %v2354 = vld [vmem:[%s0 + $0x1ec] sm:$0xf]
    %v2355 = vld [vmem:[%s0 + $0x1f8] sm:$0xf]
    %v2356 = vld [vmem:[%s0 + $0x1fc] sm:$0xf]
    %v2421 = vunpack.c.l.b16 %v2293
    %v2422 = vunpack.c.l.b16 %v2294
    %v2423 = vunpack.c.l.b16 %v2295
    %v2424 = vunpack.c.l.b16 %v2296
    %v2425 = vunpack.c.l.b16 %v2297
    %v2426 = vunpack.c.l.b16 %v2298
    %v2427 = vunpack.c.l.b16 %v2299
    %v2428 = vunpack.c.l.b16 %v2300
    %v2429 = vunpack.c.l.b16 %v2301
    %v2430 = vunpack.c.l.b16 %v2302
    %v2431 = vunpack.c.l.b16 %v2303
    %v2432 = vunpack.c.l.b16 %v2304
    %v2433 = vunpack.c.l.b16 %v2305
    %v2434 = vunpack.c.l.b16 %v2306
    %v2435 = vunpack.c.l.b16 %v2307
    %v2436 = vunpack.c.l.b16 %v2308
    %v2437 = vunpack.c.l.b16 %v2309
    %v2438 = vunpack.c.l.b16 %v2310
    %v2439 = vunpack.c.l.b16 %v2311
    %v2440 = vunpack.c.l.b16 %v2312
    %v2441 = vunpack.c.l.b16 %v2313
    %v2442 = vunpack.c.l.b16 %v2314
    %v2443 = vunpack.c.l.b16 %v2315
    %v2444 = vunpack.c.l.b16 %v2316
    %v2445 = vunpack.c.l.b16 %v2317
    %v2446 = vunpack.c.l.b16 %v2318
    %v2447 = vunpack.c.l.b16 %v2319
    %v2448 = vunpack.c.l.b16 %v2320
    %v2449 = vunpack.c.l.b16 %v2321
    %v2450 = vunpack.c.l.b16 %v2322
    %v2451 = vunpack.c.l.b16 %v2323
    %v2452 = vunpack.c.l.b16 %v2324
    %v2453 = vunpack.c.l.b16 %v2325
    %v2454 = vunpack.c.l.b16 %v2326
    %v2455 = vunpack.c.l.b16 %v2327
    %v2456 = vunpack.c.l.b16 %v2328
    %v2457 = vunpack.c.l.b16 %v2329
    %v2458 = vunpack.c.l.b16 %v2330
    %v2459 = vunpack.c.l.b16 %v2331
    %v2460 = vunpack.c.l.b16 %v2332
    %v2461 = vunpack.c.l.b16 %v2333
    %v2462 = vunpack.c.l.b16 %v2334
    %v2463 = vunpack.c.l.b16 %v2335
    %v2464 = vunpack.c.l.b16 %v2336
    %v2465 = vunpack.c.l.b16 %v2337
    %v2466 = vunpack.c.l.b16 %v2338
    %v2467 = vunpack.c.l.b16 %v2339
    %v2468 = vunpack.c.l.b16 %v2340
    %v2469 = vunpack.c.l.b16 %v2341
    %v2470 = vunpack.c.l.b16 %v2342
    %v2471 = vunpack.c.l.b16 %v2343
    %v2472 = vunpack.c.l.b16 %v2344
    %v2473 = vunpack.c.l.b16 %v2345
    %v2474 = vunpack.c.l.b16 %v2346
    %v2475 = vunpack.c.l.b16 %v2347
    %v2476 = vunpack.c.l.b16 %v2348
    %v2477 = vunpack.c.l.b16 %v2349
    %v2478 = vunpack.c.l.b16 %v2350
    %v2479 = vunpack.c.l.b16 %v2351
    %v2480 = vunpack.c.l.b16 %v2352
    %v2481 = vunpack.c.l.b16 %v2353
    %v2482 = vunpack.c.l.b16 %v2354
    %v2483 = vunpack.c.l.b16 %v2355
    %v2484 = vunpack.c.l.b16 %v2356
    %v2485 = vpack.c.b16 %v2422, %v2421
    %v2486 = vpack.c.b16 %v2424, %v2423
    %v2487 = vpack.c.b16 %v2426, %v2425
    %v2488 = vpack.c.b16 %v2428, %v2427
    %v2489 = vpack.c.b16 %v2430, %v2429
    %v2490 = vpack.c.b16 %v2432, %v2431
    %v2491 = vpack.c.b16 %v2434, %v2433
    %v2492 = vpack.c.b16 %v2436, %v2435
    %v2493 = vpack.c.b16 %v2438, %v2437
    %v2494 = vpack.c.b16 %v2440, %v2439
    %v2495 = vpack.c.b16 %v2442, %v2441
    %v2496 = vpack.c.b16 %v2444, %v2443
    %v2497 = vpack.c.b16 %v2446, %v2445
    %v2498 = vpack.c.b16 %v2448, %v2447
    %v2499 = vpack.c.b16 %v2450, %v2449
    %v2500 = vpack.c.b16 %v2452, %v2451
    %v2501 = vpack.c.b16 %v2454, %v2453
    %v2502 = vpack.c.b16 %v2456, %v2455
    %v2503 = vpack.c.b16 %v2458, %v2457
    %v2504 = vpack.c.b16 %v2460, %v2459
    %v2505 = vpack.c.b16 %v2462, %v2461
    %v2506 = vpack.c.b16 %v2464, %v2463
    %v2507 = vpack.c.b16 %v2466, %v2465
    %v2508 = vpack.c.b16 %v2468, %v2467
    %v2509 = vpack.c.b16 %v2470, %v2469
    %v2510 = vpack.c.b16 %v2472, %v2471
    %v2511 = vpack.c.b16 %v2474, %v2473
    %v2512 = vpack.c.b16 %v2476, %v2475
    %v2513 = vpack.c.b16 %v2478, %v2477
    %v2514 = vpack.c.b16 %v2480, %v2479
    %v2515 = vpack.c.b16 %v2482, %v2481
    %v2516 = vpack.c.b16 %v2484, %v2483
    %v2518 = vsel %vm255, %v2485, 0
    %v2521 = vsel %vm255, %v2486, 0
    %v2524 = vsel %vm255, %v2487, 0
    %v2527 = vsel %vm255, %v2488, 0
    %v2530 = vsel %vm255, %v2489, 0
    %v2533 = vsel %vm255, %v2490, 0
    %v2536 = vsel %vm255, %v2491, 0
    %v2539 = vsel %vm255, %v2492, 0
    %v2542 = vsel %vm255, %v2493, 0
    %v2545 = vsel %vm255, %v2494, 0
    %v2548 = vsel %vm255, %v2495, 0
    %v2551 = vsel %vm255, %v2496, 0
    %v2554 = vsel %vm255, %v2497, 0
    %v2557 = vsel %vm255, %v2498, 0
    %v2560 = vsel %vm255, %v2499, 0
    %v2563 = vsel %vm255, %v2500, 0
    %v2566 = vsel %vm255, %v2501, 0
    %v2569 = vsel %vm255, %v2502, 0
    %v2572 = vsel %vm255, %v2503, 0
    %v2575 = vsel %vm255, %v2504, 0
    %v2578 = vsel %vm255, %v2505, 0
    %v2581 = vsel %vm255, %v2506, 0
    %v2584 = vsel %vm255, %v2507, 0
    %v2587 = vsel %vm255, %v2508, 0
    %v2590 = vsel %vm255, %v2509, 0
    %v2593 = vsel %vm255, %v2510, 0
    %v2596 = vsel %vm255, %v2511, 0
    %v2599 = vsel %vm255, %v2512, 0
    %v2602 = vsel %vm255, %v2513, 0
    %v2605 = vsel %vm255, %v2514, 0
    %v2608 = vsel %vm255, %v2515, 0
    %v2611 = vsel %vm255, %v2516, 0
    %2613 = vmatprep.subr.bf16.mxu0 0
    %2614 = vmatpush1.bf16.msra.mxu0 0
    %2615 = vmatprep.subr.bf16.mxu0 0
    %2616 = vmatpush1.bf16.msra.mxu0 0
    %2617 = vmatprep.subr.bf16.mxu0 0
    %2618 = vmatpush1.bf16.msra.mxu0 0
    %2619 = vmatprep.subr.bf16.mxu0 0
    %2620 = vmatpush1.bf16.msra.mxu0 0
    %2621 = vmatprep.subr.bf16.mxu0 0
    %2622 = vmatpush1.bf16.msra.mxu0 0
    %2623 = vmatprep.subr.bf16.mxu0 0
    %2624 = vmatpush1.bf16.msra.mxu0 0
    %2625 = vmatprep.subr.bf16.mxu0 0
    %2626 = vmatpush1.bf16.msra.mxu0 0
    %2627 = vmatprep.subr.bf16.mxu0 0
    %2628 = vmatpush1.bf16.msra.mxu0 %v354
    %2629 = vmatprep.subr.bf16.mxu0 0
    %2630 = vmatpush2.bf16.msra.mxu0 0
    %2631 = vmatprep.subr.bf16.mxu0 0
    %2632 = vmatpush2.bf16.msra.mxu0 0
    %2633 = vmatprep.subr.bf16.mxu0 0
    %2634 = vmatpush2.bf16.msra.mxu0 0
    %2635 = vmatprep.subr.bf16.mxu0 0
    %2636 = vmatpush2.bf16.msra.mxu0 0
    %2637 = vmatprep.subr.bf16.mxu0 0
    %2638 = vmatpush2.bf16.msra.mxu0 0
    %2639 = vmatprep.subr.bf16.mxu0 0
    %2640 = vmatpush2.bf16.msra.mxu0 0
    %2641 = vmatprep.subr.bf16.mxu0 0
    %2642 = vmatpush2.bf16.msra.mxu0 0
    %2643 = vmatprep.subr.bf16.mxu0 0
    %2644 = vmatpush2.bf16.msra.mxu0 0
    %2645 = vmatprep.mubr.bf16.mxu0 0
    %2646 = vmatmul.mubr.bf16.gmra.mxu0 %v2518
    %v2647 = vpop.f32.mrf.mxu0
    %v2648 = vadd.f32 %v94, %v2647
    %v2649 = vpop.f32.mrf.mxu0
    %v2650 = vpop.f32.mrf.mxu0
    %v2651 = vadd.f32 %v94, %v2650
    %v2652 = vpop.f32.mrf.mxu0
    %2653 = vmatprep.mubr.bf16.mxu0 0
    %2654 = vmatmul.mubr.bf16.gmra.mxu0 %v2521
    %v2655 = vpop.f32.mrf.mxu0
    %v2656 = vadd.f32 %v94, %v2655
    %v2657 = vpop.f32.mrf.mxu0
    %v2658 = vpop.f32.mrf.mxu0
    %v2659 = vadd.f32 %v94, %v2658
    %v2660 = vpop.f32.mrf.mxu0
    %2661 = vmatprep.mubr.bf16.mxu0 0
    %2662 = vmatmul.mubr.bf16.gmra.mxu0 %v2524
    %v2663 = vpop.f32.mrf.mxu0
    %v2664 = vadd.f32 %v94, %v2663
    %v2665 = vpop.f32.mrf.mxu0
    %v2666 = vpop.f32.mrf.mxu0
    %v2667 = vadd.f32 %v94, %v2666
    %v2668 = vpop.f32.mrf.mxu0
    %2669 = vmatprep.mubr.bf16.mxu0 0
    %2670 = vmatmul.mubr.bf16.gmra.mxu0 %v2527
    %v2671 = vpop.f32.mrf.mxu0
    %v2672 = vadd.f32 %v94, %v2671
    %v2673 = vpop.f32.mrf.mxu0
    %v2674 = vpop.f32.mrf.mxu0
    %v2675 = vadd.f32 %v94, %v2674
    %v2676 = vpop.f32.mrf.mxu0
    %2677 = vmatprep.mubr.bf16.mxu0 0
    %2678 = vmatmul.mubr.bf16.gmra.mxu0 %v2530
    %v2679 = vpop.f32.mrf.mxu0
    %v2680 = vadd.f32 %v94, %v2679
    %v2681 = vpop.f32.mrf.mxu0
    %v2682 = vpop.f32.mrf.mxu0
    %v2683 = vadd.f32 %v94, %v2682
    %v2684 = vpop.f32.mrf.mxu0
    %2685 = vmatprep.mubr.bf16.mxu0 0
    %2686 = vmatmul.mubr.bf16.gmra.mxu0 %v2533
    %v2687 = vpop.f32.mrf.mxu0
    %v2688 = vadd.f32 %v94, %v2687
    %v2689 = vpop.f32.mrf.mxu0
    %v2690 = vpop.f32.mrf.mxu0
    %v2691 = vadd.f32 %v94, %v2690
    %v2692 = vpop.f32.mrf.mxu0
    %2693 = vmatprep.mubr.bf16.mxu0 0
    %2694 = vmatmul.mubr.bf16.gmra.mxu0 %v2536
    %v2695 = vpop.f32.mrf.mxu0
    %v2696 = vadd.f32 %v94, %v2695
    %v2697 = vpop.f32.mrf.mxu0
    %v2698 = vpop.f32.mrf.mxu0
    %v2699 = vadd.f32 %v94, %v2698
    %v2700 = vpop.f32.mrf.mxu0
    %2701 = vmatprep.mubr.bf16.mxu0 0
    %2702 = vmatmul.mubr.bf16.gmra.mxu0 %v2539
    %v2703 = vpop.f32.mrf.mxu0
    %v2704 = vadd.f32 %v94, %v2703
    %v2705 = vpop.f32.mrf.mxu0
    %v2706 = vpop.f32.mrf.mxu0
    %v2707 = vadd.f32 %v94, %v2706
    %v2708 = vpop.f32.mrf.mxu0
    %2709 = vmatprep.mubr.bf16.mxu0 0
    %2710 = vmatmul.mubr.bf16.gmra.mxu0 %v2542
    %v2711 = vpop.f32.mrf.mxu0
    %v2712 = vadd.f32 %v94, %v2711
    %v2713 = vpop.f32.mrf.mxu0
    %v2714 = vpop.f32.mrf.mxu0
    %v2715 = vadd.f32 %v94, %v2714
    %v2716 = vpop.f32.mrf.mxu0
    %2717 = vmatprep.mubr.bf16.mxu0 0
    %2718 = vmatmul.mubr.bf16.gmra.mxu0 %v2545
    %v2719 = vpop.f32.mrf.mxu0
    %v2720 = vadd.f32 %v94, %v2719
    %v2721 = vpop.f32.mrf.mxu0
    %v2722 = vpop.f32.mrf.mxu0
    %v2723 = vadd.f32 %v94, %v2722
    %v2724 = vpop.f32.mrf.mxu0
    %2725 = vmatprep.mubr.bf16.mxu0 0
    %2726 = vmatmul.mubr.bf16.gmra.mxu0 %v2548
    %v2727 = vpop.f32.mrf.mxu0
    %v2728 = vadd.f32 %v94, %v2727
    %v2729 = vpop.f32.mrf.mxu0
    %v2730 = vpop.f32.mrf.mxu0
    %v2731 = vadd.f32 %v94, %v2730
    %v2732 = vpop.f32.mrf.mxu0
    %2733 = vmatprep.mubr.bf16.mxu0 0
    %2734 = vmatmul.mubr.bf16.gmra.mxu0 %v2551
    %v2735 = vpop.f32.mrf.mxu0
    %v2736 = vadd.f32 %v94, %v2735
    %v2737 = vpop.f32.mrf.mxu0
    %v2738 = vpop.f32.mrf.mxu0
    %v2739 = vadd.f32 %v94, %v2738
    %v2740 = vpop.f32.mrf.mxu0
    %2741 = vmatprep.mubr.bf16.mxu0 0
    %2742 = vmatmul.mubr.bf16.gmra.mxu0 %v2554
    %v2743 = vpop.f32.mrf.mxu0
    %v2744 = vadd.f32 %v94, %v2743
    %v2745 = vpop.f32.mrf.mxu0
    %v2746 = vpop.f32.mrf.mxu0
    %v2747 = vadd.f32 %v94, %v2746
    %v2748 = vpop.f32.mrf.mxu0
    %2749 = vmatprep.mubr.bf16.mxu0 0
    %2750 = vmatmul.mubr.bf16.gmra.mxu0 %v2557
    %v2751 = vpop.f32.mrf.mxu0
    %v2752 = vadd.f32 %v94, %v2751
    %v2753 = vpop.f32.mrf.mxu0
    %v2754 = vpop.f32.mrf.mxu0
    %v2755 = vadd.f32 %v94, %v2754
    %v2756 = vpop.f32.mrf.mxu0
    %2757 = vmatprep.mubr.bf16.mxu0 0
    %2758 = vmatmul.mubr.bf16.gmra.mxu0 %v2560
    %v2759 = vpop.f32.mrf.mxu0
    %v2760 = vadd.f32 %v94, %v2759
    %v2761 = vpop.f32.mrf.mxu0
    %v2762 = vpop.f32.mrf.mxu0
    %v2763 = vadd.f32 %v94, %v2762
    %v2764 = vpop.f32.mrf.mxu0
    %2765 = vmatprep.mubr.bf16.mxu0 0
    %2766 = vmatmul.mubr.bf16.gmra.mxu0 %v2563
    %v2767 = vpop.f32.mrf.mxu0
    %v2768 = vadd.f32 %v94, %v2767
    %v2769 = vpop.f32.mrf.mxu0
    %v2770 = vpop.f32.mrf.mxu0
    %v2771 = vadd.f32 %v94, %v2770
    %v2772 = vpop.f32.mrf.mxu0
    %2773 = vmatprep.mubr.bf16.mxu0 0
    %2774 = vmatmul.mubr.bf16.gmra.mxu0 %v2566
    %v2775 = vpop.f32.mrf.mxu0
    %v2776 = vadd.f32 %v94, %v2775
    %v2777 = vpop.f32.mrf.mxu0
    %v2778 = vpop.f32.mrf.mxu0
    %v2779 = vadd.f32 %v94, %v2778
    %v2780 = vpop.f32.mrf.mxu0
    %2781 = vmatprep.mubr.bf16.mxu0 0
    %2782 = vmatmul.mubr.bf16.gmra.mxu0 %v2569
    %v2783 = vpop.f32.mrf.mxu0
    %v2784 = vadd.f32 %v94, %v2783
    %v2785 = vpop.f32.mrf.mxu0
    %v2786 = vpop.f32.mrf.mxu0
    %v2787 = vadd.f32 %v94, %v2786
    %v2788 = vpop.f32.mrf.mxu0
    %2789 = vmatprep.mubr.bf16.mxu0 0
    %2790 = vmatmul.mubr.bf16.gmra.mxu0 %v2572
    %v2791 = vpop.f32.mrf.mxu0
    %v2792 = vadd.f32 %v94, %v2791
    %v2793 = vpop.f32.mrf.mxu0
    %v2794 = vpop.f32.mrf.mxu0
    %v2795 = vadd.f32 %v94, %v2794
    %v2796 = vpop.f32.mrf.mxu0
    %2797 = vmatprep.mubr.bf16.mxu0 0
    %2798 = vmatmul.mubr.bf16.gmra.mxu0 %v2575
    %v2799 = vpop.f32.mrf.mxu0
    %v2800 = vadd.f32 %v94, %v2799
    %v2801 = vpop.f32.mrf.mxu0
    %v2802 = vpop.f32.mrf.mxu0
    %v2803 = vadd.f32 %v94, %v2802
    %v2804 = vpop.f32.mrf.mxu0
    %2805 = vmatprep.mubr.bf16.mxu0 0
    %2806 = vmatmul.mubr.bf16.gmra.mxu0 %v2578
    %v2807 = vpop.f32.mrf.mxu0
    %v2808 = vadd.f32 %v94, %v2807
    %v2809 = vpop.f32.mrf.mxu0
    %v2810 = vpop.f32.mrf.mxu0
    %v2811 = vadd.f32 %v94, %v2810
    %v2812 = vpop.f32.mrf.mxu0
    %2813 = vmatprep.mubr.bf16.mxu0 0
    %2814 = vmatmul.mubr.bf16.gmra.mxu0 %v2581
    %v2815 = vpop.f32.mrf.mxu0
    %v2816 = vadd.f32 %v94, %v2815
    %v2817 = vpop.f32.mrf.mxu0
    %v2818 = vpop.f32.mrf.mxu0
    %v2819 = vadd.f32 %v94, %v2818
    %v2820 = vpop.f32.mrf.mxu0
    %2821 = vmatprep.mubr.bf16.mxu0 0
    %2822 = vmatmul.mubr.bf16.gmra.mxu0 %v2584
    %v2823 = vpop.f32.mrf.mxu0
    %v2824 = vadd.f32 %v94, %v2823
    %v2825 = vpop.f32.mrf.mxu0
    %v2826 = vpop.f32.mrf.mxu0
    %v2827 = vadd.f32 %v94, %v2826
    %v2828 = vpop.f32.mrf.mxu0
    %2829 = vmatprep.mubr.bf16.mxu0 0
    %2830 = vmatmul.mubr.bf16.gmra.mxu0 %v2587
    %v2831 = vpop.f32.mrf.mxu0
    %v2832 = vadd.f32 %v94, %v2831
    %v2833 = vpop.f32.mrf.mxu0
    %v2834 = vpop.f32.mrf.mxu0
    %v2835 = vadd.f32 %v94, %v2834
    %v2836 = vpop.f32.mrf.mxu0
    %2837 = vmatprep.mubr.bf16.mxu0 0
    %2838 = vmatmul.mubr.bf16.gmra.mxu0 %v2590
    %v2839 = vpop.f32.mrf.mxu0
    %v2840 = vadd.f32 %v94, %v2839
    %v2841 = vpop.f32.mrf.mxu0
    %v2842 = vpop.f32.mrf.mxu0
    %v2843 = vadd.f32 %v94, %v2842
    %v2844 = vpop.f32.mrf.mxu0
    %2845 = vmatprep.mubr.bf16.mxu0 0
    %2846 = vmatmul.mubr.bf16.gmra.mxu0 %v2593
    %v2847 = vpop.f32.mrf.mxu0
    %v2848 = vadd.f32 %v94, %v2847
    %v2849 = vpop.f32.mrf.mxu0
    %v2850 = vpop.f32.mrf.mxu0
    %v2851 = vadd.f32 %v94, %v2850
    %v2852 = vpop.f32.mrf.mxu0
    %2853 = vmatprep.mubr.bf16.mxu0 0
    %2854 = vmatmul.mubr.bf16.gmra.mxu0 %v2596
    %v2855 = vpop.f32.mrf.mxu0
    %v2856 = vadd.f32 %v94, %v2855
    %v2857 = vpop.f32.mrf.mxu0
    %v2858 = vpop.f32.mrf.mxu0
    %v2859 = vadd.f32 %v94, %v2858
    %v2860 = vpop.f32.mrf.mxu0
    %2861 = vmatprep.mubr.bf16.mxu0 0
    %2862 = vmatmul.mubr.bf16.gmra.mxu0 %v2599
    %v2863 = vpop.f32.mrf.mxu0
    %v2864 = vadd.f32 %v94, %v2863
    %v2865 = vpop.f32.mrf.mxu0
    %v2866 = vpop.f32.mrf.mxu0
    %v2867 = vadd.f32 %v94, %v2866
    %v2868 = vpop.f32.mrf.mxu0
    %2869 = vmatprep.mubr.bf16.mxu0 0
    %2870 = vmatmul.mubr.bf16.gmra.mxu0 %v2602
    %v2871 = vpop.f32.mrf.mxu0
    %v2872 = vadd.f32 %v94, %v2871
    %v2873 = vpop.f32.mrf.mxu0
    %v2874 = vpop.f32.mrf.mxu0
    %v2875 = vadd.f32 %v94, %v2874
    %v2876 = vpop.f32.mrf.mxu0
    %2877 = vmatprep.mubr.bf16.mxu0 0
    %2878 = vmatmul.mubr.bf16.gmra.mxu0 %v2605
    %v2879 = vpop.f32.mrf.mxu0
    %v2880 = vadd.f32 %v94, %v2879
    %v2881 = vpop.f32.mrf.mxu0
    %v2882 = vpop.f32.mrf.mxu0
    %v2883 = vadd.f32 %v94, %v2882
    %v2884 = vpop.f32.mrf.mxu0
    %2885 = vmatprep.mubr.bf16.mxu0 0
    %2886 = vmatmul.mubr.bf16.gmra.mxu0 %v2608
    %v2887 = vpop.f32.mrf.mxu0
    %v2888 = vadd.f32 %v94, %v2887
    %v2889 = vpop.f32.mrf.mxu0
    %v2890 = vpop.f32.mrf.mxu0
    %v2891 = vadd.f32 %v94, %v2890
    %v2892 = vpop.f32.mrf.mxu0
    %2893 = vmatprep.mubr.bf16.mxu0 0
    %2894 = vmatmul.mubr.bf16.gmra.mxu0 %v2611
    %v2895 = vpop.f32.mrf.mxu0
    %v2896 = vadd.f32 %v94, %v2895
    %v2897 = vpop.f32.mrf.mxu0
    %v2898 = vpop.f32.mrf.mxu0
    %v2899 = vadd.f32 %v94, %v2898
    %v2900 = vpop.f32.mrf.mxu0
    %2901 = vdwg.mxu0
    %v2902 = vmax.f32 %v2648, 0.0
    %v2903 = vmax.f32 %v2651, 0.0
    %v2904 = vmax.f32 %v2656, 0.0
    %v2905 = vmax.f32 %v2659, 0.0
    %v2906 = vmax.f32 %v2664, 0.0
    %v2907 = vmax.f32 %v2667, 0.0
    %v2908 = vmax.f32 %v2672, 0.0
    %v2909 = vmax.f32 %v2675, 0.0
    %v2910 = vmax.f32 %v2680, 0.0
    %v2911 = vmax.f32 %v2683, 0.0
    %v2912 = vmax.f32 %v2688, 0.0
    %v2913 = vmax.f32 %v2691, 0.0
    %v2914 = vmax.f32 %v2696, 0.0
    %v2915 = vmax.f32 %v2699, 0.0
    %v2916 = vmax.f32 %v2704, 0.0
    %v2917 = vmax.f32 %v2707, 0.0
    %v2918 = vmax.f32 %v2712, 0.0
    %v2919 = vmax.f32 %v2715, 0.0
    %v2920 = vmax.f32 %v2720, 0.0
    %v2921 = vmax.f32 %v2723, 0.0
    %v2922 = vmax.f32 %v2728, 0.0
    %v2923 = vmax.f32 %v2731, 0.0
    %v2924 = vmax.f32 %v2736, 0.0
    %v2925 = vmax.f32 %v2739, 0.0
    %v2926 = vmax.f32 %v2744, 0.0
    %v2927 = vmax.f32 %v2747, 0.0
    %v2928 = vmax.f32 %v2752, 0.0
    %v2929 = vmax.f32 %v2755, 0.0
    %v2930 = vmax.f32 %v2760, 0.0
    %v2931 = vmax.f32 %v2763, 0.0
    %v2932 = vmax.f32 %v2768, 0.0
    %v2933 = vmax.f32 %v2771, 0.0
    %v2934 = vmax.f32 %v2776, 0.0
    %v2935 = vmax.f32 %v2779, 0.0
    %v2936 = vmax.f32 %v2784, 0.0
    %v2937 = vmax.f32 %v2787, 0.0
    %v2938 = vmax.f32 %v2792, 0.0
    %v2939 = vmax.f32 %v2795, 0.0
    %v2940 = vmax.f32 %v2800, 0.0
    %v2941 = vmax.f32 %v2803, 0.0
    %v2942 = vmax.f32 %v2808, 0.0
    %v2943 = vmax.f32 %v2811, 0.0
    %v2944 = vmax.f32 %v2816, 0.0
    %v2945 = vmax.f32 %v2819, 0.0
    %v2946 = vmax.f32 %v2824, 0.0
    %v2947 = vmax.f32 %v2827, 0.0
    %v2948 = vmax.f32 %v2832, 0.0
    %v2949 = vmax.f32 %v2835, 0.0
    %v2950 = vmax.f32 %v2840, 0.0
    %v2951 = vmax.f32 %v2843, 0.0
    %v2952 = vmax.f32 %v2848, 0.0
    %v2953 = vmax.f32 %v2851, 0.0
    %v2954 = vmax.f32 %v2856, 0.0
    %v2955 = vmax.f32 %v2859, 0.0
    %v2956 = vmax.f32 %v2864, 0.0
    %v2957 = vmax.f32 %v2867, 0.0
    %v2958 = vmax.f32 %v2872, 0.0
    %v2959 = vmax.f32 %v2875, 0.0
    %v2960 = vmax.f32 %v2880, 0.0
    %v2961 = vmax.f32 %v2883, 0.0
    %v2962 = vmax.f32 %v2888, 0.0
    %v2963 = vmax.f32 %v2891, 0.0
    %v2964 = vmax.f32 %v2896, 0.0
    %v2965 = vmax.f32 %v2899, 0.0
    %v2966 = vpack.c.bf16 %v2903, %v2902
    %v2967 = vpack.c.bf16 %v2905, %v2904
    %v2968 = vpack.c.bf16 %v2907, %v2906
    %v2969 = vpack.c.bf16 %v2909, %v2908
    %v2970 = vpack.c.bf16 %v2911, %v2910
    %v2971 = vpack.c.bf16 %v2913, %v2912
    %v2972 = vpack.c.bf16 %v2915, %v2914
    %v2973 = vpack.c.bf16 %v2917, %v2916
    %v2974 = vpack.c.bf16 %v2919, %v2918
    %v2975 = vpack.c.bf16 %v2921, %v2920
    %v2976 = vpack.c.bf16 %v2923, %v2922
    %v2977 = vpack.c.bf16 %v2925, %v2924
    %v2978 = vpack.c.bf16 %v2927, %v2926
    %v2979 = vpack.c.bf16 %v2929, %v2928
    %v2980 = vpack.c.bf16 %v2931, %v2930
    %v2981 = vpack.c.bf16 %v2933, %v2932
    %v2982 = vpack.c.bf16 %v2935, %v2934
    %v2983 = vpack.c.bf16 %v2937, %v2936
    %v2984 = vpack.c.bf16 %v2939, %v2938
    %v2985 = vpack.c.bf16 %v2941, %v2940
    %v2986 = vpack.c.bf16 %v2943, %v2942
    %v2987 = vpack.c.bf16 %v2945, %v2944
    %v2988 = vpack.c.bf16 %v2947, %v2946
    %v2989 = vpack.c.bf16 %v2949, %v2948
    %v2990 = vpack.c.bf16 %v2951, %v2950
    %v2991 = vpack.c.bf16 %v2953, %v2952
    %v2992 = vpack.c.bf16 %v2955, %v2954
    %v2993 = vpack.c.bf16 %v2957, %v2956
    %v2994 = vpack.c.bf16 %v2959, %v2958
    %v2995 = vpack.c.bf16 %v2961, %v2960
    %v2996 = vpack.c.bf16 %v2963, %v2962
    %v2997 = vpack.c.bf16 %v2965, %v2964
    %2998 = vmatprep.subr.bf16.mxu0 0
    %2999 = vmatpush1.bf16.msra.mxu0 %v801
    %3000 = vmatprep.subr.bf16.mxu0 0
    %3001 = vmatpush1.bf16.msra.mxu0 %v800
    %3002 = vmatprep.subr.bf16.mxu0 0
    %3003 = vmatpush1.bf16.msra.mxu0 %v799
    %3004 = vmatprep.subr.bf16.mxu0 0
    %3005 = vmatpush1.bf16.msra.mxu0 %v798
    %3006 = vmatprep.subr.bf16.mxu0 0
    %3007 = vmatpush1.bf16.msra.mxu0 %v797
    %3008 = vmatprep.subr.bf16.mxu0 0
    %3009 = vmatpush1.bf16.msra.mxu0 %v796
    %3010 = vmatprep.subr.bf16.mxu0 0
    %3011 = vmatpush1.bf16.msra.mxu0 %v795
    %3012 = vmatprep.subr.bf16.mxu0 0
    %3013 = vmatpush1.bf16.msra.mxu0 %v794
    %3014 = vmatprep.subr.bf16.mxu0 0
    %3015 = vmatpush2.bf16.msra.mxu0 0
    %3016 = vmatprep.subr.bf16.mxu0 0
    %3017 = vmatpush2.bf16.msra.mxu0 0
    %3018 = vmatprep.subr.bf16.mxu0 0
    %3019 = vmatpush2.bf16.msra.mxu0 0
    %3020 = vmatprep.subr.bf16.mxu0 0
    %3021 = vmatpush2.bf16.msra.mxu0 0
    %3022 = vmatprep.subr.bf16.mxu0 0
    %3023 = vmatpush2.bf16.msra.mxu0 0
    %3024 = vmatprep.subr.bf16.mxu0 0
    %3025 = vmatpush2.bf16.msra.mxu0 0
    %3026 = vmatprep.subr.bf16.mxu0 0
    %3027 = vmatpush2.bf16.msra.mxu0 0
    %3028 = vmatprep.subr.bf16.mxu0 0
    %3029 = vmatpush2.bf16.msra.mxu0 0
    %3030 = vmatprep.mubr.bf16.mxu0 0
    %3031 = vmatmul.mubr.bf16.gmra.mxu0 %v2966
    %v3032 = vpop.f32.mrf.mxu0
    %v3033 = vadd.f32 %v761, %v3032
    %v3034 = vpop.f32.mrf.mxu0
    %v3035 = vpop.f32.mrf.mxu0
    %v3036 = vadd.f32 %v761, %v3035
    %v3037 = vpop.f32.mrf.mxu0
    %3038 = vmatprep.mubr.bf16.mxu0 0
    %3039 = vmatmul.mubr.bf16.gmra.mxu0 %v2967
    %v3040 = vpop.f32.mrf.mxu0
    %v3041 = vadd.f32 %v761, %v3040
    %v3042 = vpop.f32.mrf.mxu0
    %v3043 = vpop.f32.mrf.mxu0
    %v3044 = vadd.f32 %v761, %v3043
    %v3045 = vpop.f32.mrf.mxu0
    %3046 = vmatprep.mubr.bf16.mxu0 0
    %3047 = vmatmul.mubr.bf16.gmra.mxu0 %v2968
    %v3048 = vpop.f32.mrf.mxu0
    %v3049 = vadd.f32 %v761, %v3048
    %v3050 = vpop.f32.mrf.mxu0
    %v3051 = vpop.f32.mrf.mxu0
    %v3052 = vadd.f32 %v761, %v3051
    %v3053 = vpop.f32.mrf.mxu0
    %3054 = vmatprep.mubr.bf16.mxu0 0
    %3055 = vmatmul.mubr.bf16.gmra.mxu0 %v2969
    %v3056 = vpop.f32.mrf.mxu0
    %v3057 = vadd.f32 %v761, %v3056
    %v3058 = vpop.f32.mrf.mxu0
    %v3059 = vpop.f32.mrf.mxu0
    %v3060 = vadd.f32 %v761, %v3059
    %v3061 = vpop.f32.mrf.mxu0
    %3062 = vmatprep.mubr.bf16.mxu0 0
    %3063 = vmatmul.mubr.bf16.gmra.mxu0 %v2970
    %v3064 = vpop.f32.mrf.mxu0
    %v3065 = vadd.f32 %v761, %v3064
    %v3066 = vpop.f32.mrf.mxu0
    %v3067 = vpop.f32.mrf.mxu0
    %v3068 = vadd.f32 %v761, %v3067
    %v3069 = vpop.f32.mrf.mxu0
    %3070 = vmatprep.mubr.bf16.mxu0 0
    %3071 = vmatmul.mubr.bf16.gmra.mxu0 %v2971
    %v3072 = vpop.f32.mrf.mxu0
    %v3073 = vadd.f32 %v761, %v3072
    %v3074 = vpop.f32.mrf.mxu0
    %v3075 = vpop.f32.mrf.mxu0
    %v3076 = vadd.f32 %v761, %v3075
    %v3077 = vpop.f32.mrf.mxu0
    %3078 = vmatprep.mubr.bf16.mxu0 0
    %3079 = vmatmul.mubr.bf16.gmra.mxu0 %v2972
    %v3080 = vpop.f32.mrf.mxu0
    %v3081 = vadd.f32 %v761, %v3080
    %v3082 = vpop.f32.mrf.mxu0
    %v3083 = vpop.f32.mrf.mxu0
    %v3084 = vadd.f32 %v761, %v3083
    %v3085 = vpop.f32.mrf.mxu0
    %3086 = vmatprep.mubr.bf16.mxu0 0
    %3087 = vmatmul.mubr.bf16.gmra.mxu0 %v2973
    %v3088 = vpop.f32.mrf.mxu0
    %v3089 = vadd.f32 %v761, %v3088
    %v3090 = vpop.f32.mrf.mxu0
    %v3091 = vpop.f32.mrf.mxu0
    %v3092 = vadd.f32 %v761, %v3091
    %v3093 = vpop.f32.mrf.mxu0
    %3094 = vmatprep.mubr.bf16.mxu0 0
    %3095 = vmatmul.mubr.bf16.gmra.mxu0 %v2974
    %v3096 = vpop.f32.mrf.mxu0
    %v3097 = vadd.f32 %v761, %v3096
    %v3098 = vpop.f32.mrf.mxu0
    %v3099 = vpop.f32.mrf.mxu0
    %v3100 = vadd.f32 %v761, %v3099
    %v3101 = vpop.f32.mrf.mxu0
    %3102 = vmatprep.mubr.bf16.mxu0 0
    %3103 = vmatmul.mubr.bf16.gmra.mxu0 %v2975
    %v3104 = vpop.f32.mrf.mxu0
    %v3105 = vadd.f32 %v761, %v3104
    %v3106 = vpop.f32.mrf.mxu0
    %v3107 = vpop.f32.mrf.mxu0
    %v3108 = vadd.f32 %v761, %v3107
    %v3109 = vpop.f32.mrf.mxu0
    %3110 = vmatprep.mubr.bf16.mxu0 0
    %3111 = vmatmul.mubr.bf16.gmra.mxu0 %v2976
    %v3112 = vpop.f32.mrf.mxu0
    %v3113 = vadd.f32 %v761, %v3112
    %v3114 = vpop.f32.mrf.mxu0
    %v3115 = vpop.f32.mrf.mxu0
    %v3116 = vadd.f32 %v761, %v3115
    %v3117 = vpop.f32.mrf.mxu0
    %3118 = vmatprep.mubr.bf16.mxu0 0
    %3119 = vmatmul.mubr.bf16.gmra.mxu0 %v2977
    %v3120 = vpop.f32.mrf.mxu0
    %v3121 = vadd.f32 %v761, %v3120
    %v3122 = vpop.f32.mrf.mxu0
    %v3123 = vpop.f32.mrf.mxu0
    %v3124 = vadd.f32 %v761, %v3123
    %v3125 = vpop.f32.mrf.mxu0
    %3126 = vmatprep.mubr.bf16.mxu0 0
    %3127 = vmatmul.mubr.bf16.gmra.mxu0 %v2978
    %v3128 = vpop.f32.mrf.mxu0
    %v3129 = vadd.f32 %v761, %v3128
    %v3130 = vpop.f32.mrf.mxu0
    %v3131 = vpop.f32.mrf.mxu0
    %v3132 = vadd.f32 %v761, %v3131
    %v3133 = vpop.f32.mrf.mxu0
    %3134 = vmatprep.mubr.bf16.mxu0 0
    %3135 = vmatmul.mubr.bf16.gmra.mxu0 %v2979
    %v3136 = vpop.f32.mrf.mxu0
    %v3137 = vadd.f32 %v761, %v3136
    %v3138 = vpop.f32.mrf.mxu0
    %v3139 = vpop.f32.mrf.mxu0
    %v3140 = vadd.f32 %v761, %v3139
    %v3141 = vpop.f32.mrf.mxu0
    %3142 = vmatprep.mubr.bf16.mxu0 0
    %3143 = vmatmul.mubr.bf16.gmra.mxu0 %v2980
    %v3144 = vpop.f32.mrf.mxu0
    %v3145 = vadd.f32 %v761, %v3144
    %v3146 = vpop.f32.mrf.mxu0
    %v3147 = vpop.f32.mrf.mxu0
    %v3148 = vadd.f32 %v761, %v3147
    %v3149 = vpop.f32.mrf.mxu0
    %3150 = vmatprep.mubr.bf16.mxu0 0
    %3151 = vmatmul.mubr.bf16.gmra.mxu0 %v2981
    %v3152 = vpop.f32.mrf.mxu0
    %v3153 = vadd.f32 %v761, %v3152
    %v3154 = vpop.f32.mrf.mxu0
    %v3155 = vpop.f32.mrf.mxu0
    %v3156 = vadd.f32 %v761, %v3155
    %v3157 = vpop.f32.mrf.mxu0
    %3158 = vmatprep.mubr.bf16.mxu0 0
    %3159 = vmatmul.mubr.bf16.gmra.mxu0 %v2982
    %v3160 = vpop.f32.mrf.mxu0
    %v3161 = vadd.f32 %v761, %v3160
    %v3162 = vpop.f32.mrf.mxu0
    %v3163 = vpop.f32.mrf.mxu0
    %v3164 = vadd.f32 %v761, %v3163
    %v3165 = vpop.f32.mrf.mxu0
    %3166 = vmatprep.mubr.bf16.mxu0 0
    %3167 = vmatmul.mubr.bf16.gmra.mxu0 %v2983
    %v3168 = vpop.f32.mrf.mxu0
    %v3169 = vadd.f32 %v761, %v3168
    %v3170 = vpop.f32.mrf.mxu0
    %v3171 = vpop.f32.mrf.mxu0
    %v3172 = vadd.f32 %v761, %v3171
    %v3173 = vpop.f32.mrf.mxu0
    %3174 = vmatprep.mubr.bf16.mxu0 0
    %3175 = vmatmul.mubr.bf16.gmra.mxu0 %v2984
    %v3176 = vpop.f32.mrf.mxu0
    %v3177 = vadd.f32 %v761, %v3176
    %v3178 = vpop.f32.mrf.mxu0
    %v3179 = vpop.f32.mrf.mxu0
    %v3180 = vadd.f32 %v761, %v3179
    %v3181 = vpop.f32.mrf.mxu0
    %3182 = vmatprep.mubr.bf16.mxu0 0
    %3183 = vmatmul.mubr.bf16.gmra.mxu0 %v2985
    %v3184 = vpop.f32.mrf.mxu0
    %v3185 = vadd.f32 %v761, %v3184
    %v3186 = vpop.f32.mrf.mxu0
    %v3187 = vpop.f32.mrf.mxu0
    %v3188 = vadd.f32 %v761, %v3187
    %v3189 = vpop.f32.mrf.mxu0
    %3190 = vmatprep.mubr.bf16.mxu0 0
    %3191 = vmatmul.mubr.bf16.gmra.mxu0 %v2986
    %v3192 = vpop.f32.mrf.mxu0
    %v3193 = vadd.f32 %v761, %v3192
    %v3194 = vpop.f32.mrf.mxu0
    %v3195 = vpop.f32.mrf.mxu0
    %v3196 = vadd.f32 %v761, %v3195
    %v3197 = vpop.f32.mrf.mxu0
    %3198 = vmatprep.mubr.bf16.mxu0 0
    %3199 = vmatmul.mubr.bf16.gmra.mxu0 %v2987
    %v3200 = vpop.f32.mrf.mxu0
    %v3201 = vadd.f32 %v761, %v3200
    %v3202 = vpop.f32.mrf.mxu0
    %v3203 = vpop.f32.mrf.mxu0
    %v3204 = vadd.f32 %v761, %v3203
    %v3205 = vpop.f32.mrf.mxu0
    %3206 = vmatprep.mubr.bf16.mxu0 0
    %3207 = vmatmul.mubr.bf16.gmra.mxu0 %v2988
    %v3208 = vpop.f32.mrf.mxu0
    %v3209 = vadd.f32 %v761, %v3208
    %v3210 = vpop.f32.mrf.mxu0
    %v3211 = vpop.f32.mrf.mxu0
    %v3212 = vadd.f32 %v761, %v3211
    %v3213 = vpop.f32.mrf.mxu0
    %3214 = vmatprep.mubr.bf16.mxu0 0
    %3215 = vmatmul.mubr.bf16.gmra.mxu0 %v2989
    %v3216 = vpop.f32.mrf.mxu0
    %v3217 = vadd.f32 %v761, %v3216
    %v3218 = vpop.f32.mrf.mxu0
    %v3219 = vpop.f32.mrf.mxu0
    %v3220 = vadd.f32 %v761, %v3219
    %v3221 = vpop.f32.mrf.mxu0
    %3222 = vmatprep.mubr.bf16.mxu0 0
    %3223 = vmatmul.mubr.bf16.gmra.mxu0 %v2990
    %v3224 = vpop.f32.mrf.mxu0
    %v3225 = vadd.f32 %v761, %v3224
    %v3226 = vpop.f32.mrf.mxu0
    %v3227 = vpop.f32.mrf.mxu0
    %v3228 = vadd.f32 %v761, %v3227
    %v3229 = vpop.f32.mrf.mxu0
    %3230 = vmatprep.mubr.bf16.mxu0 0
    %3231 = vmatmul.mubr.bf16.gmra.mxu0 %v2991
    %v3232 = vpop.f32.mrf.mxu0
    %v3233 = vadd.f32 %v761, %v3232
    %v3234 = vpop.f32.mrf.mxu0
    %v3235 = vpop.f32.mrf.mxu0
    %v3236 = vadd.f32 %v761, %v3235
    %v3237 = vpop.f32.mrf.mxu0
    %3238 = vmatprep.mubr.bf16.mxu0 0
    %3239 = vmatmul.mubr.bf16.gmra.mxu0 %v2992
    %v3240 = vpop.f32.mrf.mxu0
    %v3241 = vadd.f32 %v761, %v3240
    %v3242 = vpop.f32.mrf.mxu0
    %v3243 = vpop.f32.mrf.mxu0
    %v3244 = vadd.f32 %v761, %v3243
    %v3245 = vpop.f32.mrf.mxu0
    %3246 = vmatprep.mubr.bf16.mxu0 0
    %3247 = vmatmul.mubr.bf16.gmra.mxu0 %v2993
    %v3248 = vpop.f32.mrf.mxu0
    %v3249 = vadd.f32 %v761, %v3248
    %v3250 = vpop.f32.mrf.mxu0
    %v3251 = vpop.f32.mrf.mxu0
    %v3252 = vadd.f32 %v761, %v3251
    %v3253 = vpop.f32.mrf.mxu0
    %3254 = vmatprep.mubr.bf16.mxu0 0
    %3255 = vmatmul.mubr.bf16.gmra.mxu0 %v2994
    %v3256 = vpop.f32.mrf.mxu0
    %v3257 = vadd.f32 %v761, %v3256
    %v3258 = vpop.f32.mrf.mxu0
    %v3259 = vpop.f32.mrf.mxu0
    %v3260 = vadd.f32 %v761, %v3259
    %v3261 = vpop.f32.mrf.mxu0
    %3262 = vmatprep.mubr.bf16.mxu0 0
    %3263 = vmatmul.mubr.bf16.gmra.mxu0 %v2995
    %v3264 = vpop.f32.mrf.mxu0
    %v3265 = vadd.f32 %v761, %v3264
    %v3266 = vpop.f32.mrf.mxu0
    %v3267 = vpop.f32.mrf.mxu0
    %v3268 = vadd.f32 %v761, %v3267
    %v3269 = vpop.f32.mrf.mxu0
    %3270 = vmatprep.mubr.bf16.mxu0 0
    %3271 = vmatmul.mubr.bf16.gmra.mxu0 %v2996
    %v3272 = vpop.f32.mrf.mxu0
    %v3273 = vadd.f32 %v761, %v3272
    %v3274 = vpop.f32.mrf.mxu0
    %v3275 = vpop.f32.mrf.mxu0
    %v3276 = vadd.f32 %v761, %v3275
    %v3277 = vpop.f32.mrf.mxu0
    %3278 = vmatprep.mubr.bf16.mxu0 0
    %3279 = vmatmul.mubr.bf16.gmra.mxu0 %v2997
    %v3280 = vpop.f32.mrf.mxu0
    %v3281 = vadd.f32 %v761, %v3280
    %v3282 = vpop.f32.mrf.mxu0
    %v3283 = vpop.f32.mrf.mxu0
    %v3284 = vadd.f32 %v761, %v3283
    %v3285 = vpop.f32.mrf.mxu0
    %3286 = vdwg.mxu0
    %v3287 = vmax.f32 %v3033, 0.0
    %v3288 = vmax.f32 %v3036, 0.0
    %v3289 = vmax.f32 %v3041, 0.0
    %v3290 = vmax.f32 %v3044, 0.0
    %v3291 = vmax.f32 %v3049, 0.0
    %v3292 = vmax.f32 %v3052, 0.0
    %v3293 = vmax.f32 %v3057, 0.0
    %v3294 = vmax.f32 %v3060, 0.0
    %v3295 = vmax.f32 %v3065, 0.0
    %v3296 = vmax.f32 %v3068, 0.0
    %v3297 = vmax.f32 %v3073, 0.0
    %v3298 = vmax.f32 %v3076, 0.0
    %v3299 = vmax.f32 %v3081, 0.0
    %v3300 = vmax.f32 %v3084, 0.0
    %v3301 = vmax.f32 %v3089, 0.0
    %v3302 = vmax.f32 %v3092, 0.0
    %v3303 = vmax.f32 %v3097, 0.0
    %v3304 = vmax.f32 %v3100, 0.0
    %v3305 = vmax.f32 %v3105, 0.0
    %v3306 = vmax.f32 %v3108, 0.0
    %v3307 = vmax.f32 %v3113, 0.0
    %v3308 = vmax.f32 %v3116, 0.0
    %v3309 = vmax.f32 %v3121, 0.0
    %v3310 = vmax.f32 %v3124, 0.0
    %v3311 = vmax.f32 %v3129, 0.0
    %v3312 = vmax.f32 %v3132, 0.0
    %v3313 = vmax.f32 %v3137, 0.0
    %v3314 = vmax.f32 %v3140, 0.0
    %v3315 = vmax.f32 %v3145, 0.0
    %v3316 = vmax.f32 %v3148, 0.0
    %v3317 = vmax.f32 %v3153, 0.0
    %v3318 = vmax.f32 %v3156, 0.0
    %v3319 = vmax.f32 %v3161, 0.0
    %v3320 = vmax.f32 %v3164, 0.0
    %v3321 = vmax.f32 %v3169, 0.0
    %v3322 = vmax.f32 %v3172, 0.0
    %v3323 = vmax.f32 %v3177, 0.0
    %v3324 = vmax.f32 %v3180, 0.0
    %v3325 = vmax.f32 %v3185, 0.0
    %v3326 = vmax.f32 %v3188, 0.0
    %v3327 = vmax.f32 %v3193, 0.0
    %v3328 = vmax.f32 %v3196, 0.0
    %v3329 = vmax.f32 %v3201, 0.0
    %v3330 = vmax.f32 %v3204, 0.0
    %v3331 = vmax.f32 %v3209, 0.0
    %v3332 = vmax.f32 %v3212, 0.0
    %v3333 = vmax.f32 %v3217, 0.0
    %v3334 = vmax.f32 %v3220, 0.0
    %v3335 = vmax.f32 %v3225, 0.0
    %v3336 = vmax.f32 %v3228, 0.0
    %v3337 = vmax.f32 %v3233, 0.0
    %v3338 = vmax.f32 %v3236, 0.0
    %v3339 = vmax.f32 %v3241, 0.0
    %v3340 = vmax.f32 %v3244, 0.0
    %v3341 = vmax.f32 %v3249, 0.0
    %v3342 = vmax.f32 %v3252, 0.0
    %v3343 = vmax.f32 %v3257, 0.0
    %v3344 = vmax.f32 %v3260, 0.0
    %v3345 = vmax.f32 %v3265, 0.0
    %v3346 = vmax.f32 %v3268, 0.0
    %v3347 = vmax.f32 %v3273, 0.0
    %v3348 = vmax.f32 %v3276, 0.0
    %v3349 = vmax.f32 %v3281, 0.0
    %v3350 = vmax.f32 %v3284, 0.0
    %v3351 = vpack.c.bf16 %v3288, %v3287
    %v3352 = vpack.c.bf16 %v3290, %v3289
    %v3353 = vpack.c.bf16 %v3292, %v3291
    %v3354 = vpack.c.bf16 %v3294, %v3293
    %v3355 = vpack.c.bf16 %v3296, %v3295
    %v3356 = vpack.c.bf16 %v3298, %v3297
    %v3357 = vpack.c.bf16 %v3300, %v3299
    %v3358 = vpack.c.bf16 %v3302, %v3301
    %v3359 = vpack.c.bf16 %v3304, %v3303
    %v3360 = vpack.c.bf16 %v3306, %v3305
    %v3361 = vpack.c.bf16 %v3308, %v3307
    %v3362 = vpack.c.bf16 %v3310, %v3309
    %v3363 = vpack.c.bf16 %v3312, %v3311
    %v3364 = vpack.c.bf16 %v3314, %v3313
    %v3365 = vpack.c.bf16 %v3316, %v3315
    %v3366 = vpack.c.bf16 %v3318, %v3317
    %v3367 = vpack.c.bf16 %v3320, %v3319
    %v3368 = vpack.c.bf16 %v3322, %v3321
    %v3369 = vpack.c.bf16 %v3324, %v3323
    %v3370 = vpack.c.bf16 %v3326, %v3325
    %v3371 = vpack.c.bf16 %v3328, %v3327
    %v3372 = vpack.c.bf16 %v3330, %v3329
    %v3373 = vpack.c.bf16 %v3332, %v3331
    %v3374 = vpack.c.bf16 %v3334, %v3333
    %v3375 = vpack.c.bf16 %v3336, %v3335
    %v3376 = vpack.c.bf16 %v3338, %v3337
    %v3377 = vpack.c.bf16 %v3340, %v3339
    %v3378 = vpack.c.bf16 %v3342, %v3341
    %v3379 = vpack.c.bf16 %v3344, %v3343
    %v3380 = vpack.c.bf16 %v3346, %v3345
    %v3381 = vpack.c.bf16 %v3348, %v3347
    %v3382 = vpack.c.bf16 %v3350, %v3349
    %3383 = vmatprep.subr.bf16.mxu0 0
    %3384 = vmatpush1.bf16.msra.mxu0 %v1255
    %3385 = vmatprep.subr.bf16.mxu0 0
    %3386 = vmatpush1.bf16.msra.mxu0 %v1254
    %3387 = vmatprep.subr.bf16.mxu0 0
    %3388 = vmatpush1.bf16.msra.mxu0 %v1253
    %3389 = vmatprep.subr.bf16.mxu0 0
    %3390 = vmatpush1.bf16.msra.mxu0 %v1252
    %3391 = vmatprep.subr.bf16.mxu0 0
    %3392 = vmatpush1.bf16.msra.mxu0 %v1251
    %3393 = vmatprep.subr.bf16.mxu0 0
    %3394 = vmatpush1.bf16.msra.mxu0 %v1250
    %3395 = vmatprep.subr.bf16.mxu0 0
    %3396 = vmatpush1.bf16.msra.mxu0 %v1249
    %3397 = vmatprep.subr.bf16.mxu0 0
    %3398 = vmatpush1.bf16.msra.mxu0 %v1248
    %3399 = vmatprep.subr.bf16.mxu0 0
    %3400 = vmatpush2.bf16.msra.mxu0 0
    %3401 = vmatprep.subr.bf16.mxu0 0
    %3402 = vmatpush2.bf16.msra.mxu0 0
    %3403 = vmatprep.subr.bf16.mxu0 0
    %3404 = vmatpush2.bf16.msra.mxu0 0
    %3405 = vmatprep.subr.bf16.mxu0 0
    %3406 = vmatpush2.bf16.msra.mxu0 0
    %3407 = vmatprep.subr.bf16.mxu0 0
    %3408 = vmatpush2.bf16.msra.mxu0 0
    %3409 = vmatprep.subr.bf16.mxu0 0
    %3410 = vmatpush2.bf16.msra.mxu0 0
    %3411 = vmatprep.subr.bf16.mxu0 0
    %3412 = vmatpush2.bf16.msra.mxu0 0
    %3413 = vmatprep.subr.bf16.mxu0 0
    %3414 = vmatpush2.bf16.msra.mxu0 0
    %3415 = vmatprep.mubr.bf16.mxu0 0
    %3416 = vmatmul.mubr.bf16.gmra.mxu0 %v3351
    %v3417 = vpop.f32.mrf.mxu0
    %v3418 = vadd.f32 %v1215, %v3417
    %v3419 = vpop.f32.mrf.mxu0
    %v3420 = vpop.f32.mrf.mxu0
    %v3421 = vadd.f32 %v1215, %v3420
    %v3422 = vpop.f32.mrf.mxu0
    %3423 = vmatprep.mubr.bf16.mxu0 0
    %3424 = vmatmul.mubr.bf16.gmra.mxu0 %v3352
    %v3425 = vpop.f32.mrf.mxu0
    %v3426 = vadd.f32 %v1215, %v3425
    %v3427 = vpop.f32.mrf.mxu0
    %v3428 = vpop.f32.mrf.mxu0
    %v3429 = vadd.f32 %v1215, %v3428
    %v3430 = vpop.f32.mrf.mxu0
    %3431 = vmatprep.mubr.bf16.mxu0 0
    %3432 = vmatmul.mubr.bf16.gmra.mxu0 %v3353
    %v3433 = vpop.f32.mrf.mxu0
    %v3434 = vadd.f32 %v1215, %v3433
    %v3435 = vpop.f32.mrf.mxu0
    %v3436 = vpop.f32.mrf.mxu0
    %v3437 = vadd.f32 %v1215, %v3436
    %v3438 = vpop.f32.mrf.mxu0
    %3439 = vmatprep.mubr.bf16.mxu0 0
    %3440 = vmatmul.mubr.bf16.gmra.mxu0 %v3354
    %v3441 = vpop.f32.mrf.mxu0
    %v3442 = vadd.f32 %v1215, %v3441
    %v3443 = vpop.f32.mrf.mxu0
    %v3444 = vpop.f32.mrf.mxu0
    %v3445 = vadd.f32 %v1215, %v3444
    %v3446 = vpop.f32.mrf.mxu0
    %3447 = vmatprep.mubr.bf16.mxu0 0
    %3448 = vmatmul.mubr.bf16.gmra.mxu0 %v3355
    %v3449 = vpop.f32.mrf.mxu0
    %v3450 = vadd.f32 %v1215, %v3449
    %v3451 = vpop.f32.mrf.mxu0
    %v3452 = vpop.f32.mrf.mxu0
    %v3453 = vadd.f32 %v1215, %v3452
    %v3454 = vpop.f32.mrf.mxu0
    %3455 = vmatprep.mubr.bf16.mxu0 0
    %3456 = vmatmul.mubr.bf16.gmra.mxu0 %v3356
    %v3457 = vpop.f32.mrf.mxu0
    %v3458 = vadd.f32 %v1215, %v3457
    %v3459 = vpop.f32.mrf.mxu0
    %v3460 = vpop.f32.mrf.mxu0
    %v3461 = vadd.f32 %v1215, %v3460
    %v3462 = vpop.f32.mrf.mxu0
    %3463 = vmatprep.mubr.bf16.mxu0 0
    %3464 = vmatmul.mubr.bf16.gmra.mxu0 %v3357
    %v3465 = vpop.f32.mrf.mxu0
    %v3466 = vadd.f32 %v1215, %v3465
    %v3467 = vpop.f32.mrf.mxu0
    %v3468 = vpop.f32.mrf.mxu0
    %v3469 = vadd.f32 %v1215, %v3468
    %v3470 = vpop.f32.mrf.mxu0
    %3471 = vmatprep.mubr.bf16.mxu0 0
    %3472 = vmatmul.mubr.bf16.gmra.mxu0 %v3358
    %v3473 = vpop.f32.mrf.mxu0
    %v3474 = vadd.f32 %v1215, %v3473
    %v3475 = vpop.f32.mrf.mxu0
    %v3476 = vpop.f32.mrf.mxu0
    %v3477 = vadd.f32 %v1215, %v3476
    %v3478 = vpop.f32.mrf.mxu0
    %3479 = vmatprep.mubr.bf16.mxu0 0
    %3480 = vmatmul.mubr.bf16.gmra.mxu0 %v3359
    %v3481 = vpop.f32.mrf.mxu0
    %v3482 = vadd.f32 %v1215, %v3481
    %v3483 = vpop.f32.mrf.mxu0
    %v3484 = vpop.f32.mrf.mxu0
    %v3485 = vadd.f32 %v1215, %v3484
    %v3486 = vpop.f32.mrf.mxu0
    %3487 = vmatprep.mubr.bf16.mxu0 0
    %3488 = vmatmul.mubr.bf16.gmra.mxu0 %v3360
    %v3489 = vpop.f32.mrf.mxu0
    %v3490 = vadd.f32 %v1215, %v3489
    %v3491 = vpop.f32.mrf.mxu0
    %v3492 = vpop.f32.mrf.mxu0
    %v3493 = vadd.f32 %v1215, %v3492
    %v3494 = vpop.f32.mrf.mxu0
    %3495 = vmatprep.mubr.bf16.mxu0 0
    %3496 = vmatmul.mubr.bf16.gmra.mxu0 %v3361
    %v3497 = vpop.f32.mrf.mxu0
    %v3498 = vadd.f32 %v1215, %v3497
    %v3499 = vpop.f32.mrf.mxu0
    %v3500 = vpop.f32.mrf.mxu0
    %v3501 = vadd.f32 %v1215, %v3500
    %v3502 = vpop.f32.mrf.mxu0
    %3503 = vmatprep.mubr.bf16.mxu0 0
    %3504 = vmatmul.mubr.bf16.gmra.mxu0 %v3362
    %v3505 = vpop.f32.mrf.mxu0
    %v3506 = vadd.f32 %v1215, %v3505
    %v3507 = vpop.f32.mrf.mxu0
    %v3508 = vpop.f32.mrf.mxu0
    %v3509 = vadd.f32 %v1215, %v3508
    %v3510 = vpop.f32.mrf.mxu0
    %3511 = vmatprep.mubr.bf16.mxu0 0
    %3512 = vmatmul.mubr.bf16.gmra.mxu0 %v3363
    %v3513 = vpop.f32.mrf.mxu0
    %v3514 = vadd.f32 %v1215, %v3513
    %v3515 = vpop.f32.mrf.mxu0
    %v3516 = vpop.f32.mrf.mxu0
    %v3517 = vadd.f32 %v1215, %v3516
    %v3518 = vpop.f32.mrf.mxu0
    %3519 = vmatprep.mubr.bf16.mxu0 0
    %3520 = vmatmul.mubr.bf16.gmra.mxu0 %v3364
    %v3521 = vpop.f32.mrf.mxu0
    %v3522 = vadd.f32 %v1215, %v3521
    %v3523 = vpop.f32.mrf.mxu0
    %v3524 = vpop.f32.mrf.mxu0
    %v3525 = vadd.f32 %v1215, %v3524
    %v3526 = vpop.f32.mrf.mxu0
    %3527 = vmatprep.mubr.bf16.mxu0 0
    %3528 = vmatmul.mubr.bf16.gmra.mxu0 %v3365
    %v3529 = vpop.f32.mrf.mxu0
    %v3530 = vadd.f32 %v1215, %v3529
    %v3531 = vpop.f32.mrf.mxu0
    %v3532 = vpop.f32.mrf.mxu0
    %v3533 = vadd.f32 %v1215, %v3532
    %v3534 = vpop.f32.mrf.mxu0
    %3535 = vmatprep.mubr.bf16.mxu0 0
    %3536 = vmatmul.mubr.bf16.gmra.mxu0 %v3366
    %v3537 = vpop.f32.mrf.mxu0
    %v3538 = vadd.f32 %v1215, %v3537
    %v3539 = vpop.f32.mrf.mxu0
    %v3540 = vpop.f32.mrf.mxu0
    %v3541 = vadd.f32 %v1215, %v3540
    %v3542 = vpop.f32.mrf.mxu0
    %3543 = vmatprep.mubr.bf16.mxu0 0
    %3544 = vmatmul.mubr.bf16.gmra.mxu0 %v3367
    %v3545 = vpop.f32.mrf.mxu0
    %v3546 = vadd.f32 %v1215, %v3545
    %v3547 = vpop.f32.mrf.mxu0
    %v3548 = vpop.f32.mrf.mxu0
    %v3549 = vadd.f32 %v1215, %v3548
    %v3550 = vpop.f32.mrf.mxu0
    %3551 = vmatprep.mubr.bf16.mxu0 0
    %3552 = vmatmul.mubr.bf16.gmra.mxu0 %v3368
    %v3553 = vpop.f32.mrf.mxu0
    %v3554 = vadd.f32 %v1215, %v3553
    %v3555 = vpop.f32.mrf.mxu0
    %v3556 = vpop.f32.mrf.mxu0
    %v3557 = vadd.f32 %v1215, %v3556
    %v3558 = vpop.f32.mrf.mxu0
    %3559 = vmatprep.mubr.bf16.mxu0 0
    %3560 = vmatmul.mubr.bf16.gmra.mxu0 %v3369
    %v3561 = vpop.f32.mrf.mxu0
    %v3562 = vadd.f32 %v1215, %v3561
    %v3563 = vpop.f32.mrf.mxu0
    %v3564 = vpop.f32.mrf.mxu0
    %v3565 = vadd.f32 %v1215, %v3564
    %v3566 = vpop.f32.mrf.mxu0
    %3567 = vmatprep.mubr.bf16.mxu0 0
    %3568 = vmatmul.mubr.bf16.gmra.mxu0 %v3370
    %v3569 = vpop.f32.mrf.mxu0
    %v3570 = vadd.f32 %v1215, %v3569
    %v3571 = vpop.f32.mrf.mxu0
    %v3572 = vpop.f32.mrf.mxu0
    %v3573 = vadd.f32 %v1215, %v3572
    %v3574 = vpop.f32.mrf.mxu0
    %3575 = vmatprep.mubr.bf16.mxu0 0
    %3576 = vmatmul.mubr.bf16.gmra.mxu0 %v3371
    %v3577 = vpop.f32.mrf.mxu0
    %v3578 = vadd.f32 %v1215, %v3577
    %v3579 = vpop.f32.mrf.mxu0
    %v3580 = vpop.f32.mrf.mxu0
    %v3581 = vadd.f32 %v1215, %v3580
    %v3582 = vpop.f32.mrf.mxu0
    %3583 = vmatprep.mubr.bf16.mxu0 0
    %3584 = vmatmul.mubr.bf16.gmra.mxu0 %v3372
    %v3585 = vpop.f32.mrf.mxu0
    %v3586 = vadd.f32 %v1215, %v3585
    %v3587 = vpop.f32.mrf.mxu0
    %v3588 = vpop.f32.mrf.mxu0
    %v3589 = vadd.f32 %v1215, %v3588
    %v3590 = vpop.f32.mrf.mxu0
    %3591 = vmatprep.mubr.bf16.mxu0 0
    %3592 = vmatmul.mubr.bf16.gmra.mxu0 %v3373
    %v3593 = vpop.f32.mrf.mxu0
    %v3594 = vadd.f32 %v1215, %v3593
    %v3595 = vpop.f32.mrf.mxu0
    %v3596 = vpop.f32.mrf.mxu0
    %v3597 = vadd.f32 %v1215, %v3596
    %v3598 = vpop.f32.mrf.mxu0
    %3599 = vmatprep.mubr.bf16.mxu0 0
    %3600 = vmatmul.mubr.bf16.gmra.mxu0 %v3374
    %v3601 = vpop.f32.mrf.mxu0
    %v3602 = vadd.f32 %v1215, %v3601
    %v3603 = vpop.f32.mrf.mxu0
    %v3604 = vpop.f32.mrf.mxu0
    %v3605 = vadd.f32 %v1215, %v3604
    %v3606 = vpop.f32.mrf.mxu0
    %3607 = vmatprep.mubr.bf16.mxu0 0
    %3608 = vmatmul.mubr.bf16.gmra.mxu0 %v3375
    %v3609 = vpop.f32.mrf.mxu0
    %v3610 = vadd.f32 %v1215, %v3609
    %v3611 = vpop.f32.mrf.mxu0
    %v3612 = vpop.f32.mrf.mxu0
    %v3613 = vadd.f32 %v1215, %v3612
    %v3614 = vpop.f32.mrf.mxu0
    %3615 = vmatprep.mubr.bf16.mxu0 0
    %3616 = vmatmul.mubr.bf16.gmra.mxu0 %v3376
    %v3617 = vpop.f32.mrf.mxu0
    %v3618 = vadd.f32 %v1215, %v3617
    %v3619 = vpop.f32.mrf.mxu0
    %v3620 = vpop.f32.mrf.mxu0
    %v3621 = vadd.f32 %v1215, %v3620
    %v3622 = vpop.f32.mrf.mxu0
    %3623 = vmatprep.mubr.bf16.mxu0 0
    %3624 = vmatmul.mubr.bf16.gmra.mxu0 %v3377
    %v3625 = vpop.f32.mrf.mxu0
    %v3626 = vadd.f32 %v1215, %v3625
    %v3627 = vpop.f32.mrf.mxu0
    %v3628 = vpop.f32.mrf.mxu0
    %v3629 = vadd.f32 %v1215, %v3628
    %v3630 = vpop.f32.mrf.mxu0
    %3631 = vmatprep.mubr.bf16.mxu0 0
    %3632 = vmatmul.mubr.bf16.gmra.mxu0 %v3378
    %v3633 = vpop.f32.mrf.mxu0
    %v3634 = vadd.f32 %v1215, %v3633
    %v3635 = vpop.f32.mrf.mxu0
    %v3636 = vpop.f32.mrf.mxu0
    %v3637 = vadd.f32 %v1215, %v3636
    %v3638 = vpop.f32.mrf.mxu0
    %3639 = vmatprep.mubr.bf16.mxu0 0
    %3640 = vmatmul.mubr.bf16.gmra.mxu0 %v3379
    %v3641 = vpop.f32.mrf.mxu0
    %v3642 = vadd.f32 %v1215, %v3641
    %v3643 = vpop.f32.mrf.mxu0
    %v3644 = vpop.f32.mrf.mxu0
    %v3645 = vadd.f32 %v1215, %v3644
    %v3646 = vpop.f32.mrf.mxu0
    %3647 = vmatprep.mubr.bf16.mxu0 0
    %3648 = vmatmul.mubr.bf16.gmra.mxu0 %v3380
    %v3649 = vpop.f32.mrf.mxu0
    %v3650 = vadd.f32 %v1215, %v3649
    %v3651 = vpop.f32.mrf.mxu0
    %v3652 = vpop.f32.mrf.mxu0
    %v3653 = vadd.f32 %v1215, %v3652
    %v3654 = vpop.f32.mrf.mxu0
    %3655 = vmatprep.mubr.bf16.mxu0 0
    %3656 = vmatmul.mubr.bf16.gmra.mxu0 %v3381
    %v3657 = vpop.f32.mrf.mxu0
    %v3658 = vadd.f32 %v1215, %v3657
    %v3659 = vpop.f32.mrf.mxu0
    %v3660 = vpop.f32.mrf.mxu0
    %v3661 = vadd.f32 %v1215, %v3660
    %v3662 = vpop.f32.mrf.mxu0
    %3663 = vmatprep.mubr.bf16.mxu0 0
    %3664 = vmatmul.mubr.bf16.gmra.mxu0 %v3382
    %v3665 = vpop.f32.mrf.mxu0
    %v3666 = vadd.f32 %v1215, %v3665
    %v3667 = vpop.f32.mrf.mxu0
    %v3668 = vpop.f32.mrf.mxu0
    %v3669 = vadd.f32 %v1215, %v3668
    %v3670 = vpop.f32.mrf.mxu0
    %3671 = vdwg.mxu0
    %v3672 = vmax.f32 %v3418, 0.0
    %v3673 = vmax.f32 %v3421, 0.0
    %v3674 = vmax.f32 %v3426, 0.0
    %v3675 = vmax.f32 %v3429, 0.0
    %v3676 = vmax.f32 %v3434, 0.0
    %v3677 = vmax.f32 %v3437, 0.0
    %v3678 = vmax.f32 %v3442, 0.0
    %v3679 = vmax.f32 %v3445, 0.0
    %v3680 = vmax.f32 %v3450, 0.0
    %v3681 = vmax.f32 %v3453, 0.0
    %v3682 = vmax.f32 %v3458, 0.0
    %v3683 = vmax.f32 %v3461, 0.0
    %v3684 = vmax.f32 %v3466, 0.0
    %v3685 = vmax.f32 %v3469, 0.0
    %v3686 = vmax.f32 %v3474, 0.0
    %v3687 = vmax.f32 %v3477, 0.0
    %v3688 = vmax.f32 %v3482, 0.0
    %v3689 = vmax.f32 %v3485, 0.0
    %v3690 = vmax.f32 %v3490, 0.0
    %v3691 = vmax.f32 %v3493, 0.0
    %v3692 = vmax.f32 %v3498, 0.0
    %v3693 = vmax.f32 %v3501, 0.0
    %v3694 = vmax.f32 %v3506, 0.0
    %v3695 = vmax.f32 %v3509, 0.0
    %v3696 = vmax.f32 %v3514, 0.0
    %v3697 = vmax.f32 %v3517, 0.0
    %v3698 = vmax.f32 %v3522, 0.0
    %v3699 = vmax.f32 %v3525, 0.0
    %v3700 = vmax.f32 %v3530, 0.0
    %v3701 = vmax.f32 %v3533, 0.0
    %v3702 = vmax.f32 %v3538, 0.0
    %v3703 = vmax.f32 %v3541, 0.0
    %v3704 = vmax.f32 %v3546, 0.0
    %v3705 = vmax.f32 %v3549, 0.0
    %v3706 = vmax.f32 %v3554, 0.0
    %v3707 = vmax.f32 %v3557, 0.0
    %v3708 = vmax.f32 %v3562, 0.0
    %v3709 = vmax.f32 %v3565, 0.0
    %v3710 = vmax.f32 %v3570, 0.0
    %v3711 = vmax.f32 %v3573, 0.0
    %v3712 = vmax.f32 %v3578, 0.0
    %v3713 = vmax.f32 %v3581, 0.0
    %v3714 = vmax.f32 %v3586, 0.0
    %v3715 = vmax.f32 %v3589, 0.0
    %v3716 = vmax.f32 %v3594, 0.0
    %v3717 = vmax.f32 %v3597, 0.0
    %v3718 = vmax.f32 %v3602, 0.0
    %v3719 = vmax.f32 %v3605, 0.0
    %v3720 = vmax.f32 %v3610, 0.0
    %v3721 = vmax.f32 %v3613, 0.0
    %v3722 = vmax.f32 %v3618, 0.0
    %v3723 = vmax.f32 %v3621, 0.0
    %v3724 = vmax.f32 %v3626, 0.0
    %v3725 = vmax.f32 %v3629, 0.0
    %v3726 = vmax.f32 %v3634, 0.0
    %v3727 = vmax.f32 %v3637, 0.0
    %v3728 = vmax.f32 %v3642, 0.0
    %v3729 = vmax.f32 %v3645, 0.0
    %v3730 = vmax.f32 %v3650, 0.0
    %v3731 = vmax.f32 %v3653, 0.0
    %v3732 = vmax.f32 %v3658, 0.0
    %v3733 = vmax.f32 %v3661, 0.0
    %v3734 = vmax.f32 %v3666, 0.0
    %v3735 = vmax.f32 %v3669, 0.0
    %s3737 = sor.u32 256, 16
    %3738 = vbcast.lane.b32.xlu0 %v1624, %s3737
    %v3739 = vpop.permute.xlu0 %3738
    %s3741 = sor.u32 256, 24
    %3742 = vbcast.lane.b32.xlu0 %v1624, %s3741
    %v3743 = vpop.permute.xlu0 %3742
    %s3745 = sor.u32 256, 16
    %3746 = vbcast.lane.b32.xlu0 %v1635, %s3745
    %v3747 = vpop.permute.xlu0 %3746
    %s3749 = sor.u32 256, 24
    %3750 = vbcast.lane.b32.xlu0 %v1635, %s3749
    %v3751 = vpop.permute.xlu0 %3750
    %s3753 = sor.u32 256, 16
    %3754 = vbcast.lane.b32.xlu0 %v1646, %s3753
    %v3755 = vpop.permute.xlu0 %3754
    %s3757 = sor.u32 256, 24
    %3758 = vbcast.lane.b32.xlu0 %v1646, %s3757
    %v3759 = vpop.permute.xlu0 %3758
    %s3761 = sor.u32 256, 16
    %3762 = vbcast.lane.b32.xlu0 %v1657, %s3761
    %v3763 = vpop.permute.xlu0 %3762
    %s3765 = sor.u32 256, 24
    %3766 = vbcast.lane.b32.xlu0 %v1657, %s3765
    %v3767 = vpop.permute.xlu0 %3766
    %s3769 = sor.u32 256, 16
    %3770 = vbcast.lane.b32.xlu0 %v1668, %s3769
    %v3771 = vpop.permute.xlu0 %3770
    %s3773 = sor.u32 256, 24
    %3774 = vbcast.lane.b32.xlu0 %v1668, %s3773
    %v3775 = vpop.permute.xlu0 %3774
    %s3777 = sor.u32 256, 16
    %3778 = vbcast.lane.b32.xlu0 %v1679, %s3777
    %v3779 = vpop.permute.xlu0 %3778
    %s3781 = sor.u32 256, 24
    %3782 = vbcast.lane.b32.xlu0 %v1679, %s3781
    %v3783 = vpop.permute.xlu0 %3782
    %s3785 = sor.u32 256, 16
    %3786 = vbcast.lane.b32.xlu0 %v1690, %s3785
    %v3787 = vpop.permute.xlu0 %3786
    %s3789 = sor.u32 256, 24
    %3790 = vbcast.lane.b32.xlu0 %v1690, %s3789
    %v3791 = vpop.permute.xlu0 %3790
    %s3793 = sor.u32 256, 16
    %3794 = vbcast.lane.b32.xlu0 %v1701, %s3793
    %v3795 = vpop.permute.xlu0 %3794
    %s3797 = sor.u32 256, 24
    %3798 = vbcast.lane.b32.xlu0 %v1701, %s3797
    %v3799 = vpop.permute.xlu0 %3798
    %s3801 = sor.u32 256, 16
    %3802 = vbcast.lane.b32.xlu0 %v1712, %s3801
    %v3803 = vpop.permute.xlu0 %3802
    %s3805 = sor.u32 256, 24
    %3806 = vbcast.lane.b32.xlu0 %v1712, %s3805
    %v3807 = vpop.permute.xlu0 %3806
    %s3809 = sor.u32 256, 16
    %3810 = vbcast.lane.b32.xlu0 %v1723, %s3809
    %v3811 = vpop.permute.xlu0 %3810
    %s3813 = sor.u32 256, 24
    %3814 = vbcast.lane.b32.xlu0 %v1723, %s3813
    %v3815 = vpop.permute.xlu0 %3814
    %s3817 = sor.u32 256, 16
    %3818 = vbcast.lane.b32.xlu0 %v1734, %s3817
    %v3819 = vpop.permute.xlu0 %3818
    %s3821 = sor.u32 256, 24
    %3822 = vbcast.lane.b32.xlu0 %v1734, %s3821
    %v3823 = vpop.permute.xlu0 %3822
    %s3825 = sor.u32 256, 16
    %3826 = vbcast.lane.b32.xlu0 %v1745, %s3825
    %v3827 = vpop.permute.xlu0 %3826
    %s3829 = sor.u32 256, 24
    %3830 = vbcast.lane.b32.xlu0 %v1745, %s3829
    %v3831 = vpop.permute.xlu0 %3830
    %s3833 = sor.u32 256, 16
    %3834 = vbcast.lane.b32.xlu0 %v1756, %s3833
    %v3835 = vpop.permute.xlu0 %3834
    %s3837 = sor.u32 256, 24
    %3838 = vbcast.lane.b32.xlu0 %v1756, %s3837
    %v3839 = vpop.permute.xlu0 %3838
    %s3841 = sor.u32 256, 16
    %3842 = vbcast.lane.b32.xlu0 %v1767, %s3841
    %v3843 = vpop.permute.xlu0 %3842
    %s3845 = sor.u32 256, 24
    %3846 = vbcast.lane.b32.xlu0 %v1767, %s3845
    %v3847 = vpop.permute.xlu0 %3846
    %s3849 = sor.u32 256, 16
    %3850 = vbcast.lane.b32.xlu0 %v1778, %s3849
    %v3851 = vpop.permute.xlu0 %3850
    %s3853 = sor.u32 256, 24
    %3854 = vbcast.lane.b32.xlu0 %v1778, %s3853
    %v3855 = vpop.permute.xlu0 %3854
    %s3857 = sor.u32 256, 16
    %3858 = vbcast.lane.b32.xlu0 %v1789, %s3857
    %v3859 = vpop.permute.xlu0 %3858
    %s3861 = sor.u32 256, 24
    %3862 = vbcast.lane.b32.xlu0 %v1789, %s3861
    %v3863 = vpop.permute.xlu0 %3862
    %s3865 = sor.u32 256, 16
    %3866 = vbcast.lane.b32.xlu0 %v1800, %s3865
    %v3867 = vpop.permute.xlu0 %3866
    %s3869 = sor.u32 256, 24
    %3870 = vbcast.lane.b32.xlu0 %v1800, %s3869
    %v3871 = vpop.permute.xlu0 %3870
    %s3873 = sor.u32 256, 16
    %3874 = vbcast.lane.b32.xlu0 %v1811, %s3873
    %v3875 = vpop.permute.xlu0 %3874
    %s3877 = sor.u32 256, 24
    %3878 = vbcast.lane.b32.xlu0 %v1811, %s3877
    %v3879 = vpop.permute.xlu0 %3878
    %s3881 = sor.u32 256, 16
    %3882 = vbcast.lane.b32.xlu0 %v1822, %s3881
    %v3883 = vpop.permute.xlu0 %3882
    %s3885 = sor.u32 256, 24
    %3886 = vbcast.lane.b32.xlu0 %v1822, %s3885
    %v3887 = vpop.permute.xlu0 %3886
    %s3889 = sor.u32 256, 16
    %3890 = vbcast.lane.b32.xlu0 %v1833, %s3889
    %v3891 = vpop.permute.xlu0 %3890
    %s3893 = sor.u32 256, 24
    %3894 = vbcast.lane.b32.xlu0 %v1833, %s3893
    %v3895 = vpop.permute.xlu0 %3894
    %s3897 = sor.u32 256, 16
    %3898 = vbcast.lane.b32.xlu0 %v1844, %s3897
    %v3899 = vpop.permute.xlu0 %3898
    %s3901 = sor.u32 256, 24
    %3902 = vbcast.lane.b32.xlu0 %v1844, %s3901
    %v3903 = vpop.permute.xlu0 %3902
    %s3905 = sor.u32 256, 16
    %3906 = vbcast.lane.b32.xlu0 %v1855, %s3905
    %v3907 = vpop.permute.xlu0 %3906
    %s3909 = sor.u32 256, 24
    %3910 = vbcast.lane.b32.xlu0 %v1855, %s3909
    %v3911 = vpop.permute.xlu0 %3910
    %s3913 = sor.u32 256, 16
    %3914 = vbcast.lane.b32.xlu0 %v1866, %s3913
    %v3915 = vpop.permute.xlu0 %3914
    %s3917 = sor.u32 256, 24
    %3918 = vbcast.lane.b32.xlu0 %v1866, %s3917
    %v3919 = vpop.permute.xlu0 %3918
    %s3921 = sor.u32 256, 16
    %3922 = vbcast.lane.b32.xlu0 %v1877, %s3921
    %v3923 = vpop.permute.xlu0 %3922
    %s3925 = sor.u32 256, 24
    %3926 = vbcast.lane.b32.xlu0 %v1877, %s3925
    %v3927 = vpop.permute.xlu0 %3926
    %s3929 = sor.u32 256, 16
    %3930 = vbcast.lane.b32.xlu0 %v1888, %s3929
    %v3931 = vpop.permute.xlu0 %3930
    %s3933 = sor.u32 256, 24
    %3934 = vbcast.lane.b32.xlu0 %v1888, %s3933
    %v3935 = vpop.permute.xlu0 %3934
    %s3937 = sor.u32 256, 16
    %3938 = vbcast.lane.b32.xlu0 %v1899, %s3937
    %v3939 = vpop.permute.xlu0 %3938
    %s3941 = sor.u32 256, 24
    %3942 = vbcast.lane.b32.xlu0 %v1899, %s3941
    %v3943 = vpop.permute.xlu0 %3942
    %s3945 = sor.u32 256, 16
    %3946 = vbcast.lane.b32.xlu0 %v1910, %s3945
    %v3947 = vpop.permute.xlu0 %3946
    %s3949 = sor.u32 256, 24
    %3950 = vbcast.lane.b32.xlu0 %v1910, %s3949
    %v3951 = vpop.permute.xlu0 %3950
    %s3953 = sor.u32 256, 16
    %3954 = vbcast.lane.b32.xlu0 %v1921, %s3953
    %v3955 = vpop.permute.xlu0 %3954
    %s3957 = sor.u32 256, 24
    %3958 = vbcast.lane.b32.xlu0 %v1921, %s3957
    %v3959 = vpop.permute.xlu0 %3958
    %s3961 = sor.u32 256, 16
    %3962 = vbcast.lane.b32.xlu0 %v1932, %s3961
    %v3963 = vpop.permute.xlu0 %3962
    %s3965 = sor.u32 256, 24
    %3966 = vbcast.lane.b32.xlu0 %v1932, %s3965
    %v3967 = vpop.permute.xlu0 %3966
    %s3969 = sor.u32 256, 16
    %3970 = vbcast.lane.b32.xlu0 %v1943, %s3969
    %v3971 = vpop.permute.xlu0 %3970
    %s3973 = sor.u32 256, 24
    %3974 = vbcast.lane.b32.xlu0 %v1943, %s3973
    %v3975 = vpop.permute.xlu0 %3974
    %s3977 = sor.u32 256, 16
    %3978 = vbcast.lane.b32.xlu0 %v1954, %s3977
    %v3979 = vpop.permute.xlu0 %3978
    %s3981 = sor.u32 256, 24
    %3982 = vbcast.lane.b32.xlu0 %v1954, %s3981
    %v3983 = vpop.permute.xlu0 %3982
    %s3985 = sor.u32 256, 16
    %3986 = vbcast.lane.b32.xlu0 %v1965, %s3985
    %v3987 = vpop.permute.xlu0 %3986
    %s3989 = sor.u32 256, 24
    %3990 = vbcast.lane.b32.xlu0 %v1965, %s3989
    %v3991 = vpop.permute.xlu0 %3990
    %v3992 = vadd.f32 %v3672, %v3739
    %v3993 = vadd.f32 %v3673, %v3743
    %v3994 = vadd.f32 %v3674, %v3747
    %v3995 = vadd.f32 %v3675, %v3751
    %v3996 = vadd.f32 %v3676, %v3755
    %v3997 = vadd.f32 %v3677, %v3759
    %v3998 = vadd.f32 %v3678, %v3763
    %v3999 = vadd.f32 %v3679, %v3767
    %v4000 = vadd.f32 %v3680, %v3771
    %v4001 = vadd.f32 %v3681, %v3775
    %v4002 = vadd.f32 %v3682, %v3779
    %v4003 = vadd.f32 %v3683, %v3783
    %v4004 = vadd.f32 %v3684, %v3787
    %v4005 = vadd.f32 %v3685, %v3791
    %v4006 = vadd.f32 %v3686, %v3795
    %v4007 = vadd.f32 %v3687, %v3799
    %v4008 = vadd.f32 %v3688, %v3803
    %v4009 = vadd.f32 %v3689, %v3807
    %v4010 = vadd.f32 %v3690, %v3811
    %v4011 = vadd.f32 %v3691, %v3815
    %v4012 = vadd.f32 %v3692, %v3819
    %v4013 = vadd.f32 %v3693, %v3823
    %v4014 = vadd.f32 %v3694, %v3827
    %v4015 = vadd.f32 %v3695, %v3831
    %v4016 = vadd.f32 %v3696, %v3835
    %v4017 = vadd.f32 %v3697, %v3839
    %v4018 = vadd.f32 %v3698, %v3843
    %v4019 = vadd.f32 %v3699, %v3847
    %v4020 = vadd.f32 %v3700, %v3851
    %v4021 = vadd.f32 %v3701, %v3855
    %v4022 = vadd.f32 %v3702, %v3859
    %v4023 = vadd.f32 %v3703, %v3863
    %v4024 = vadd.f32 %v3704, %v3867
    %v4025 = vadd.f32 %v3705, %v3871
    %v4026 = vadd.f32 %v3706, %v3875
    %v4027 = vadd.f32 %v3707, %v3879
    %v4028 = vadd.f32 %v3708, %v3883
    %v4029 = vadd.f32 %v3709, %v3887
    %v4030 = vadd.f32 %v3710, %v3891
    %v4031 = vadd.f32 %v3711, %v3895
    %v4032 = vadd.f32 %v3712, %v3899
    %v4033 = vadd.f32 %v3713, %v3903
    %v4034 = vadd.f32 %v3714, %v3907
    %v4035 = vadd.f32 %v3715, %v3911
    %v4036 = vadd.f32 %v3716, %v3915
    %v4037 = vadd.f32 %v3717, %v3919
    %v4038 = vadd.f32 %v3718, %v3923
    %v4039 = vadd.f32 %v3719, %v3927
    %v4040 = vadd.f32 %v3720, %v3931
    %v4041 = vadd.f32 %v3721, %v3935
    %v4042 = vadd.f32 %v3722, %v3939
    %v4043 = vadd.f32 %v3723, %v3943
    %v4044 = vadd.f32 %v3724, %v3947
    %v4045 = vadd.f32 %v3725, %v3951
    %v4046 = vadd.f32 %v3726, %v3955
    %v4047 = vadd.f32 %v3727, %v3959
    %v4048 = vadd.f32 %v3728, %v3963
    %v4049 = vadd.f32 %v3729, %v3967
    %v4050 = vadd.f32 %v3730, %v3971
    %v4051 = vadd.f32 %v3731, %v3975
    %v4052 = vadd.f32 %v3732, %v3979
    %v4053 = vadd.f32 %v3733, %v3983
    %v4054 = vadd.f32 %v3734, %v3987
    %v4055 = vadd.f32 %v3735, %v3991
    %v4056 = vmax.f32 %v3992, %v3993
    %v4057 = vrot.slane %v4056, 4
    %v4058 = vmax.f32 %v4056, %v4057
    %v4059 = vrot.slane %v4058, 2
    %v4060 = vmax.f32 %v4058, %v4059
    %v4061 = vrot.slane %v4060, 1
    %v4062 = vmax.f32 %v4060, %v4061
    %v4063 = vmax.f32 %v3994, %v3995
    %v4064 = vrot.slane %v4063, 4
    %v4065 = vmax.f32 %v4063, %v4064
    %v4066 = vrot.slane %v4065, 2
    %v4067 = vmax.f32 %v4065, %v4066
    %v4068 = vrot.slane %v4067, 1
    %v4069 = vmax.f32 %v4067, %v4068
    %v4070 = vmax.f32 %v3996, %v3997
    %v4071 = vrot.slane %v4070, 4
    %v4072 = vmax.f32 %v4070, %v4071
    %v4073 = vrot.slane %v4072, 2
    %v4074 = vmax.f32 %v4072, %v4073
    %v4075 = vrot.slane %v4074, 1
    %v4076 = vmax.f32 %v4074, %v4075
    %v4077 = vmax.f32 %v3998, %v3999
    %v4078 = vrot.slane %v4077, 4
    %v4079 = vmax.f32 %v4077, %v4078
    %v4080 = vrot.slane %v4079, 2
    %v4081 = vmax.f32 %v4079, %v4080
    %v4082 = vrot.slane %v4081, 1
    %v4083 = vmax.f32 %v4081, %v4082
    %v4084 = vmax.f32 %v4000, %v4001
    %v4085 = vrot.slane %v4084, 4
    %v4086 = vmax.f32 %v4084, %v4085
    %v4087 = vrot.slane %v4086, 2
    %v4088 = vmax.f32 %v4086, %v4087
    %v4089 = vrot.slane %v4088, 1
    %v4090 = vmax.f32 %v4088, %v4089
    %v4091 = vmax.f32 %v4002, %v4003
    %v4092 = vrot.slane %v4091, 4
    %v4093 = vmax.f32 %v4091, %v4092
    %v4094 = vrot.slane %v4093, 2
    %v4095 = vmax.f32 %v4093, %v4094
    %v4096 = vrot.slane %v4095, 1
    %v4097 = vmax.f32 %v4095, %v4096
    %v4098 = vmax.f32 %v4004, %v4005
    %v4099 = vrot.slane %v4098, 4
    %v4100 = vmax.f32 %v4098, %v4099
    %v4101 = vrot.slane %v4100, 2
    %v4102 = vmax.f32 %v4100, %v4101
    %v4103 = vrot.slane %v4102, 1
    %v4104 = vmax.f32 %v4102, %v4103
    %v4105 = vmax.f32 %v4006, %v4007
    %v4106 = vrot.slane %v4105, 4
    %v4107 = vmax.f32 %v4105, %v4106
    %v4108 = vrot.slane %v4107, 2
    %v4109 = vmax.f32 %v4107, %v4108
    %v4110 = vrot.slane %v4109, 1
    %v4111 = vmax.f32 %v4109, %v4110
    %v4112 = vmax.f32 %v4008, %v4009
    %v4113 = vrot.slane %v4112, 4
    %v4114 = vmax.f32 %v4112, %v4113
    %v4115 = vrot.slane %v4114, 2
    %v4116 = vmax.f32 %v4114, %v4115
    %v4117 = vrot.slane %v4116, 1
    %v4118 = vmax.f32 %v4116, %v4117
    %v4119 = vmax.f32 %v4010, %v4011
    %v4120 = vrot.slane %v4119, 4
    %v4121 = vmax.f32 %v4119, %v4120
    %v4122 = vrot.slane %v4121, 2
    %v4123 = vmax.f32 %v4121, %v4122
    %v4124 = vrot.slane %v4123, 1
    %v4125 = vmax.f32 %v4123, %v4124
    %v4126 = vmax.f32 %v4012, %v4013
    %v4127 = vrot.slane %v4126, 4
    %v4128 = vmax.f32 %v4126, %v4127
    %v4129 = vrot.slane %v4128, 2
    %v4130 = vmax.f32 %v4128, %v4129
    %v4131 = vrot.slane %v4130, 1
    %v4132 = vmax.f32 %v4130, %v4131
    %v4133 = vmax.f32 %v4014, %v4015
    %v4134 = vrot.slane %v4133, 4
    %v4135 = vmax.f32 %v4133, %v4134
    %v4136 = vrot.slane %v4135, 2
    %v4137 = vmax.f32 %v4135, %v4136
    %v4138 = vrot.slane %v4137, 1
    %v4139 = vmax.f32 %v4137, %v4138
    %v4140 = vmax.f32 %v4016, %v4017
    %v4141 = vrot.slane %v4140, 4
    %v4142 = vmax.f32 %v4140, %v4141
    %v4143 = vrot.slane %v4142, 2
    %v4144 = vmax.f32 %v4142, %v4143
    %v4145 = vrot.slane %v4144, 1
    %v4146 = vmax.f32 %v4144, %v4145
    %v4147 = vmax.f32 %v4018, %v4019
    %v4148 = vrot.slane %v4147, 4
    %v4149 = vmax.f32 %v4147, %v4148
    %v4150 = vrot.slane %v4149, 2
    %v4151 = vmax.f32 %v4149, %v4150
    %v4152 = vrot.slane %v4151, 1
    %v4153 = vmax.f32 %v4151, %v4152
    %v4154 = vmax.f32 %v4020, %v4021
    %v4155 = vrot.slane %v4154, 4
    %v4156 = vmax.f32 %v4154, %v4155
    %v4157 = vrot.slane %v4156, 2
    %v4158 = vmax.f32 %v4156, %v4157
    %v4159 = vrot.slane %v4158, 1
    %v4160 = vmax.f32 %v4158, %v4159
    %v4161 = vmax.f32 %v4022, %v4023
    %v4162 = vrot.slane %v4161, 4
    %v4163 = vmax.f32 %v4161, %v4162
    %v4164 = vrot.slane %v4163, 2
    %v4165 = vmax.f32 %v4163, %v4164
    %v4166 = vrot.slane %v4165, 1
    %v4167 = vmax.f32 %v4165, %v4166
    %v4168 = vmax.f32 %v4024, %v4025
    %v4169 = vrot.slane %v4168, 4
    %v4170 = vmax.f32 %v4168, %v4169
    %v4171 = vrot.slane %v4170, 2
    %v4172 = vmax.f32 %v4170, %v4171
    %v4173 = vrot.slane %v4172, 1
    %v4174 = vmax.f32 %v4172, %v4173
    %v4175 = vmax.f32 %v4026, %v4027
    %v4176 = vrot.slane %v4175, 4
    %v4177 = vmax.f32 %v4175, %v4176
    %v4178 = vrot.slane %v4177, 2
    %v4179 = vmax.f32 %v4177, %v4178
    %v4180 = vrot.slane %v4179, 1
    %v4181 = vmax.f32 %v4179, %v4180
    %v4182 = vmax.f32 %v4028, %v4029
    %v4183 = vrot.slane %v4182, 4
    %v4184 = vmax.f32 %v4182, %v4183
    %v4185 = vrot.slane %v4184, 2
    %v4186 = vmax.f32 %v4184, %v4185
    %v4187 = vrot.slane %v4186, 1
    %v4188 = vmax.f32 %v4186, %v4187
    %v4189 = vmax.f32 %v4030, %v4031
    %v4190 = vrot.slane %v4189, 4
    %v4191 = vmax.f32 %v4189, %v4190
    %v4192 = vrot.slane %v4191, 2
    %v4193 = vmax.f32 %v4191, %v4192
    %v4194 = vrot.slane %v4193, 1
    %v4195 = vmax.f32 %v4193, %v4194
    %v4196 = vmax.f32 %v4032, %v4033
    %v4197 = vrot.slane %v4196, 4
    %v4198 = vmax.f32 %v4196, %v4197
    %v4199 = vrot.slane %v4198, 2
    %v4200 = vmax.f32 %v4198, %v4199
    %v4201 = vrot.slane %v4200, 1
    %v4202 = vmax.f32 %v4200, %v4201
    %v4203 = vmax.f32 %v4034, %v4035
    %v4204 = vrot.slane %v4203, 4
    %v4205 = vmax.f32 %v4203, %v4204
    %v4206 = vrot.slane %v4205, 2
    %v4207 = vmax.f32 %v4205, %v4206
    %v4208 = vrot.slane %v4207, 1
    %v4209 = vmax.f32 %v4207, %v4208
    %v4210 = vmax.f32 %v4036, %v4037
    %v4211 = vrot.slane %v4210, 4
    %v4212 = vmax.f32 %v4210, %v4211
    %v4213 = vrot.slane %v4212, 2
    %v4214 = vmax.f32 %v4212, %v4213
    %v4215 = vrot.slane %v4214, 1
    %v4216 = vmax.f32 %v4214, %v4215
    %v4217 = vmax.f32 %v4038, %v4039
    %v4218 = vrot.slane %v4217, 4
    %v4219 = vmax.f32 %v4217, %v4218
    %v4220 = vrot.slane %v4219, 2
    %v4221 = vmax.f32 %v4219, %v4220
    %v4222 = vrot.slane %v4221, 1
    %v4223 = vmax.f32 %v4221, %v4222
    %v4224 = vmax.f32 %v4040, %v4041
    %v4225 = vrot.slane %v4224, 4
    %v4226 = vmax.f32 %v4224, %v4225
    %v4227 = vrot.slane %v4226, 2
    %v4228 = vmax.f32 %v4226, %v4227
    %v4229 = vrot.slane %v4228, 1
    %v4230 = vmax.f32 %v4228, %v4229
    %v4231 = vmax.f32 %v4042, %v4043
    %v4232 = vrot.slane %v4231, 4
    %v4233 = vmax.f32 %v4231, %v4232
    %v4234 = vrot.slane %v4233, 2
    %v4235 = vmax.f32 %v4233, %v4234
    %v4236 = vrot.slane %v4235, 1
    %v4237 = vmax.f32 %v4235, %v4236
    %v4238 = vmax.f32 %v4044, %v4045
    %v4239 = vrot.slane %v4238, 4
    %v4240 = vmax.f32 %v4238, %v4239
    %v4241 = vrot.slane %v4240, 2
    %v4242 = vmax.f32 %v4240, %v4241
    %v4243 = vrot.slane %v4242, 1
    %v4244 = vmax.f32 %v4242, %v4243
    %v4245 = vmax.f32 %v4046, %v4047
    %v4246 = vrot.slane %v4245, 4
    %v4247 = vmax.f32 %v4245, %v4246
    %v4248 = vrot.slane %v4247, 2
    %v4249 = vmax.f32 %v4247, %v4248
    %v4250 = vrot.slane %v4249, 1
    %v4251 = vmax.f32 %v4249, %v4250
    %v4252 = vmax.f32 %v4048, %v4049
    %v4253 = vrot.slane %v4252, 4
    %v4254 = vmax.f32 %v4252, %v4253
    %v4255 = vrot.slane %v4254, 2
    %v4256 = vmax.f32 %v4254, %v4255
    %v4257 = vrot.slane %v4256, 1
    %v4258 = vmax.f32 %v4256, %v4257
    %v4259 = vmax.f32 %v4050, %v4051
    %v4260 = vrot.slane %v4259, 4
    %v4261 = vmax.f32 %v4259, %v4260
    %v4262 = vrot.slane %v4261, 2
    %v4263 = vmax.f32 %v4261, %v4262
    %v4264 = vrot.slane %v4263, 1
    %v4265 = vmax.f32 %v4263, %v4264
    %v4266 = vmax.f32 %v4052, %v4053
    %v4267 = vrot.slane %v4266, 4
    %v4268 = vmax.f32 %v4266, %v4267
    %v4269 = vrot.slane %v4268, 2
    %v4270 = vmax.f32 %v4268, %v4269
    %v4271 = vrot.slane %v4270, 1
    %v4272 = vmax.f32 %v4270, %v4271
    %v4273 = vmax.f32 %v4054, %v4055
    %v4274 = vrot.slane %v4273, 4
    %v4275 = vmax.f32 %v4273, %v4274
    %v4276 = vrot.slane %v4275, 2
    %v4277 = vmax.f32 %v4275, %v4276
    %v4278 = vrot.slane %v4277, 1
    %v4279 = vmax.f32 %v4277, %v4278
    %v4280 = vmax.f32 %v2261, %v4062
    %v4281 = vmax.f32 %v2262, %v4069
    %v4282 = vmax.f32 %v2263, %v4076
    %v4283 = vmax.f32 %v2264, %v4083
    %v4284 = vmax.f32 %v2265, %v4090
    %v4285 = vmax.f32 %v2266, %v4097
    %v4286 = vmax.f32 %v2267, %v4104
    %v4287 = vmax.f32 %v2268, %v4111
    %v4288 = vmax.f32 %v2269, %v4118
    %v4289 = vmax.f32 %v2270, %v4125
    %v4290 = vmax.f32 %v2271, %v4132
    %v4291 = vmax.f32 %v2272, %v4139
    %v4292 = vmax.f32 %v2273, %v4146
    %v4293 = vmax.f32 %v2274, %v4153
    %v4294 = vmax.f32 %v2275, %v4160
    %v4295 = vmax.f32 %v2276, %v4167
    %v4296 = vmax.f32 %v2277, %v4174
    %v4297 = vmax.f32 %v2278, %v4181
    %v4298 = vmax.f32 %v2279, %v4188
    %v4299 = vmax.f32 %v2280, %v4195
    %v4300 = vmax.f32 %v2281, %v4202
    %v4301 = vmax.f32 %v2282, %v4209
    %v4302 = vmax.f32 %v2283, %v4216
    %v4303 = vmax.f32 %v2284, %v4223
    %v4304 = vmax.f32 %v2285, %v4230
    %v4305 = vmax.f32 %v2286, %v4237
    %v4306 = vmax.f32 %v2287, %v4244
    %v4307 = vmax.f32 %v2288, %v4251
    %v4308 = vmax.f32 %v2289, %v4258
    %v4309 = vmax.f32 %v2290, %v4265
    %v4310 = vmax.f32 %v2291, %v4272
    %v4311 = vmax.f32 %v2292, %v4279
    %vm4344 = vcmask 1041409
    %v4345 = vsel %vm4344, %v4281, %v4280
    %vm4346 = vcmask 1042434
    %v4347 = vsel %vm4346, %v4282, %v4345
    %vm4348 = vcmask 1043459
    %v4349 = vsel %vm4348, %v4283, %v4347
    %vm4350 = vcmask 1044484
    %v4351 = vsel %vm4350, %v4284, %v4349
    %vm4352 = vcmask 1045509
    %v4353 = vsel %vm4352, %v4285, %v4351
    %vm4354 = vcmask 1046534
    %v4355 = vsel %vm4354, %v4286, %v4353
    %vm4356 = vcmask 1047559
    %v4357 = vsel %vm4356, %v4287, %v4355
    %v4358 = vsel %vm4344, %v4289, %v4288
    %v4359 = vsel %vm4346, %v4290, %v4358
    %v4360 = vsel %vm4348, %v4291, %v4359
    %v4361 = vsel %vm4350, %v4292, %v4360
    %v4362 = vsel %vm4352, %v4293, %v4361
    %v4363 = vsel %vm4354, %v4294, %v4362
    %v4364 = vsel %vm4356, %v4295, %v4363
    %v4365 = vsel %vm4344, %v4297, %v4296
    %v4366 = vsel %vm4346, %v4298, %v4365
    %v4367 = vsel %vm4348, %v4299, %v4366
    %v4368 = vsel %vm4350, %v4300, %v4367
    %v4369 = vsel %vm4352, %v4301, %v4368
    %v4370 = vsel %vm4354, %v4302, %v4369
    %v4371 = vsel %vm4356, %v4303, %v4370
    %v4372 = vsel %vm4344, %v4305, %v4304
    %v4373 = vsel %vm4346, %v4306, %v4372
    %v4374 = vsel %vm4348, %v4307, %v4373
    %v4375 = vsel %vm4350, %v4308, %v4374
    %v4376 = vsel %vm4352, %v4309, %v4375
    %v4377 = vsel %vm4354, %v4310, %v4376
    %v4378 = vsel %vm4356, %v4311, %v4377
    %4383 = vst [vmem:[#allocation2] sm:$0xff] %v4357
    %4384 = vst [vmem:[#allocation2 + $0x8] sm:$0xff] %v4364
    %4385 = vst [vmem:[#allocation2 + $0x10] sm:$0xff] %v4371
    %4386 = vst [vmem:[#allocation2 + $0x18] sm:$0xff] %v4378
    // Predicated region
    $region26: #{tpu_custom_call.1} parent=1 // pred_check
      _
    $region27: #{tpu_custom_call.1} parent=1 // pred_check_branch
      %4388 = sbr.rel (0) target = $region29
    $region28: #{tpu_custom_call.1} parent=1 // pred_region
      %s4390 = ssub.s32 512, 512
      %4391 = vsyncadd [#allocation3], %s4390
      %s4392 = sshll.u32 [#allocation2], 4
      %s4393 = int_to_ptr.vmem [resolvable:$true] %s4392
      %4398 = dma.vmem_to_hbm [thread:$0]  %s4393, 512, %s6, [#allocation3], 128, 128, 8
    $region29: #{tpu_custom_call.1} parent=1 // pred_fallthru
      _
    // Predicated region
    $region30: #{tpu_custom_call.1} parent=1 // pred_check
      _
    $region31: #{tpu_custom_call.1} parent=1 // pred_check_branch
      %4400 = sbr.rel (0) target = $region33
    $region32: #{tpu_custom_call.1} parent=1 // pred_region
      %4401 = dma.done [#allocation3], 512
    $region33: #{tpu_custom_call.1} parent=1 // pred_fallthru
      _
    %4402 = vsyncpa [#allocation3], 1

</llo_original>
